<compile_context>
chip_gen: v6e
topology: v6e:2x2x1
jax: 0.10.0
libtpu: 0.0.40
codegen_flags: <defaults>
</compile_context>

<pallas_src>
import functools
import math

import jax
import jax.numpy as jnp
from jax.experimental import pallas as pl
from jax.experimental.pallas import tpu as pltpu


# ----------------------------------------------------------------------------- kernel
def relukan_fused_kernel(x_ref, *refs, num_layers, eps):
    """refs = 6 param refs per layer (gamma, beta, lo, hi, w, b) ... + o_ref."""
    o_ref = refs[-1]
    params = refs[:-1]
    h = x_ref[...].astype(jnp.float32)                       # (bt, D0)

    for l in range(num_layers):                              # unrolled at trace time
        gamma_ref, beta_ref, lo_ref, hi_ref, w_ref, b_ref = params[6 * l: 6 * l + 6]
        d = h.shape[-1]
        g_total = lo_ref.shape[-1] // d                      # G = g + k

        # ---- LayerNorm over the feature axis (f32), single-pass statistics ----
        # NOTE: only correct because intermediate layer outputs are NOT padded;
        # padding an intermediate o_pad would require masked sums / D_true stats.
        mean = jnp.mean(h, axis=-1, keepdims=True)
        mean_sq = jnp.mean(h * h, axis=-1, keepdims=True)
        var = jnp.maximum(mean_sq - mean * mean, 0.0)
        xn = (h - mean) * jax.lax.rsqrt(var + eps)
        xn = xn * gamma_ref[...] + beta_ref[...]             # (bt, D)

        # ---- Phase-major broadcast: x_rep[:, j*D + i] = xn[:, i] ----
        # (pure VPU/XLU replication; no dense expansion-matrix matmul)
        x_rep = jnp.concatenate([xn] * g_total, axis=-1)     # (bt, G*D)

        # ---- ReLU-KAN basis: (relu(x-lo) * relu(hi-x))^2 ; r^2 folded into w ----
        x1 = jnp.maximum(x_rep - lo_ref[...], 0.0)
        x2 = jnp.maximum(hi_ref[...] - x_rep, 0.0)
        feat = x1 * x2
        feat = feat * feat                                   # (bt, G*D), f32

        # ---- "equal size conv" == dense matmul over the flat G*D axis ----
        # bf16 operands, f32 accumulation on the MXU.
        h = jnp.dot(feat.astype(w_ref.dtype), w_ref[...],
                    preferred_element_type=jnp.float32) + b_ref[...]

    o_ref[...] = h.astype(o_ref.dtype)


# ----------------------------------------------------------------------------- wrapper
def _pick_batch_tile(B):
    """Largest 16-aligned divisor of B (<=1024), preferring >=4 grid steps
    (2 per v7x TensorCore) when B allows, else >=2 steps (DMA pipelining on
    single-TC v5e/v6e), else a single full-batch step for tiny batches."""
    if B < 16 or B % 16 != 0:
        return B
    def largest_div(limit):
        c = (min(limit, B) // 16) * 16
        while c >= 16:
            if B % c == 0:
                return c
            c -= 16
        return None
    if B >= 512:
        c = largest_div(min(1024, B // 4))      # >=4 steps, tile still >=128 rows
        if c is not None and c >= 128:
            return c
    c = largest_div(min(1024, B // 2))          # >=2 steps
    if c is not None:
        return c
    return B


def _vmem_limit_bytes():
    """Generation-aware VMEM budget: ~3/4 of physical VMEM (v5e/v6e: 128 MiB ->
    ~96 MiB, v7x: 64 MiB -> 48 MiB), clamped to [32 MiB, 100 MiB]."""
    cap = None
    try:
        info = pltpu.get_tpu_info()
        cap = getattr(info, "vmem_capacity_bytes", None)
    except Exception:
        cap = None
    if not cap:
        cap = 64 * 1024 * 1024                  # conservative (v7x-sized) fallback
    budget = int(cap) * 3 // 4
    return max(32 * 1024 * 1024, min(budget, 100 * 1024 * 1024))


def relukan_forward(x, layer_params, out_width, *, bt=None):
    """Fused forward over all layers.  x: (B, width[0]) f32."""
    B, D0 = x.shape
    if bt is None:
        bt = _pick_batch_tile(B)
    assert B % bt == 0, "batch must be divisible by the batch tile"
    assert bt == B or bt % 16 == 0, \
        "batch tile must be a multiple of 16 (bf16 packs 2 rows per sublane)"
    num_layers = len(layer_params)
    o_pad = layer_params[-1]["b"].shape[1]                   # lane-dense final width

    param_arrays = []
    for p in layer_params:
        for name in ("gamma", "beta", "lo", "hi", "w", "b"):
            param_arrays.append(p[name])
    args = [x] + param_arrays

    kernel = functools.partial(relukan_fused_kernel,
                               num_layers=num_layers, eps=1e-5)
    vmem_limit = _vmem_limit_bytes()

    def build(single_buffer_params):
        in_specs = [pl.BlockSpec((bt, D0), lambda i: (i, 0))]
        for arr in param_arrays:
            if single_buffer_params:
                # Grid-invariant full-array block: single-buffer it (no re-DMA,
                # half the parameter VMEM footprint).
                spec = pl.BlockSpec(arr.shape, lambda i: (0, 0),
                                    pipeline_mode=pl.Buffered(1))
            else:
                spec = pl.BlockSpec(arr.shape, lambda i: (0, 0))
            in_specs.append(spec)
        return pl.pallas_call(
            kernel,
            out_shape=jax.ShapeDtypeStruct((B, o_pad), jnp.float32),
            grid_spec=pltpu.PrefetchScalarGridSpec(
                num_scalar_prefetch=0,
                grid=(B // bt,),
                in_specs=in_specs,
                out_specs=pl.BlockSpec((bt, o_pad), lambda i: (i, 0)),
            ),
            compiler_params=pltpu.CompilerParams(
                dimension_semantics=("parallel",),
                vmem_limit_bytes=vmem_limit,
            ),
        )

    try:
        out = jax.block_until_ready(build(True)(*args))
    except Exception:
        # pipeline_mode=pl.Buffered(1) is a VMEM-only optimization; if this jax
        # build rejects single-buffered specs, fall back to default buffering.
        # (An unrelated failure will reproduce and surface here.)
        out = jax.block_until_ready(build(False)(*args))
    return out[:, :out_width]


# ----------------------------------------------------------------------------- params
def init_layer_params(key, D, g, k, O, *, o_pad=None):
    """PyTorch-equivalent init, pre-arranged for the phase-major kernel layout."""
    G = g + k
    r = 4.0 * g * g / ((k + 1) * (k + 1))
    if o_pad is None:
        o_pad = O

    phase_low_row = jnp.arange(-k, g, dtype=jnp.float32) / g          # (G,)
    phase_high_row = phase_low_row + (k + 1) / g
    phase_low = jnp.broadcast_to(phase_low_row[None, :], (D, G))      # (D, G)
    phase_high = jnp.broadcast_to(phase_high_row[None, :], (D, G))

    # Conv2d(1, O, (G, D)) weights, PyTorch-style uniform init.
    fan_in = G * D
    bound = 1.0 / math.sqrt(fan_in)
    k1, k2 = jax.random.split(key)
    w_conv = jax.random.uniform(k1, (O, 1, G, D), jnp.float32, -bound, bound)
    b_conv = jax.random.uniform(k2, (O,), jnp.float32, -bound, bound)

    # Phase-major flat layout: p = j*D + i.
    #  * lo/hi: (D, G) -> transpose -> flatten.
    #  * torch reshapes the (B, D, G) features to (B, 1, G, D) as a flat view,
    #    so w_conv[o, 0, gg, dd] pairs with feature flat index gg*D+dd = i*G+j.
    #    View the weight as (O, D, G) (weight for feat(i, j)), swap to
    #    (O, G, D) and flatten -> phase-major pairing.  r^2 is folded in, the
    #    output axis is zero-padded to o_pad, and the operand is stored bf16.
    lo_flat = phase_low.T.reshape(1, G * D)
    hi_flat = phase_high.T.reshape(1, G * D)
    w_dg = w_conv.reshape(O, D, G)
    w_pm = jnp.swapaxes(w_dg, 1, 2).reshape(O, G * D)                 # (O, G*D)
    w_kern = jnp.pad((w_pm * (r * r)).T, ((0, 0), (0, o_pad - O)))    # (G*D, o_pad)
    b_kern = jnp.pad(b_conv, (0, o_pad - O)).reshape(1, o_pad)

    return {
        # kernel-ready tensors
        "gamma": jnp.ones((1, D), jnp.float32),
        "beta": jnp.zeros((1, D), jnp.float32),
        "lo": lo_flat,
        "hi": hi_flat,
        "w": w_kern.astype(jnp.bfloat16),
        "b": b_kern.astype(jnp.float32),
        # raw tensors for the pure-JAX reference
        "phase_low": phase_low,
        "phase_high": phase_high,
        "w_conv": w_conv,
        "b_conv": b_conv,
    }


# ----------------------------------------------------------------------------- reference
def ref_layer(x, p, g, k, emulate_bf16=False):
    """Pure-JAX replica of ReLUKANLayer.forward (norm_type='layer', relu).

    With emulate_bf16=True the conv matmul operands are rounded to bf16 exactly
    the way the kernel does (r^2 folded into the weight) for a tight comparison.
    """
    B, D = x.shape
    G = g + k
    r = 4.0 * g * g / ((k + 1) * (k + 1))
    mean = x.mean(-1, keepdims=True)
    var = ((x - mean) ** 2).mean(-1, keepdims=True)
    xn = (x - mean) * jax.lax.rsqrt(var + 1e-5)               # gamma=1, beta=0
    xe = xn[:, :, None]                                       # (B, D, 1)
    x1 = jax.nn.relu(xe - p["phase_low"][None])
    x2 = jax.nn.relu(p["phase_high"][None] - xe)
    w = p["w_conv"][:, 0]                                     # (O, G, D)
    if emulate_bf16:
        feat = ((x1 * x2) ** 2).astype(jnp.bfloat16).astype(jnp.float32)
        w = (w * (r * r)).astype(jnp.bfloat16).astype(jnp.float32)
    else:
        feat = (x1 * x2 * r) ** 2                             # (B, D, G)
    feat = feat.reshape(B, G, D)      # same row-major reshape as torch .reshape
    out = jnp.einsum("bgd,ogd->bo", feat, w) + p["b_conv"][None, :]
    return out


# ----------------------------------------------------------------------------- main
if __name__ == "__main__":
    key = jax.random.PRNGKey(0)
    width = [16, 32, 16]        # ReLUKAN(width=[16, 32, 16], grid=5, k=3)
    g, k = 5, 3
    B = 256                     # picker -> bt=128, 2 grid steps (toy size)

    keys = jax.random.split(key, len(width))
    layers = []
    for i in range(len(width) - 1):
        O = width[i + 1]
        last = (i == len(width) - 2)
        # Only the LAST layer is lane-padded; intermediate layers must stay
        # unpadded so the next layer's LayerNorm statistics are over D_true.
        o_pad = ((O + 127) // 128) * 128 if last else O
        layers.append(init_layer_params(keys[i], width[i], g, k, O, o_pad=o_pad))
    x = jax.random.normal(keys[-1], (B, width[0]), jnp.float32)

    y = relukan_forward(x, layers, out_width=width[-1])
    y = jax.block_until_ready(y)
    assert y.shape == (B, width[-1])

    # Tight check: reference with the kernel's bf16 matmul rounding emulated.
    # Loose check: exact f32 module semantics (bounds the bf16 drift).
    y_bf16 = x
    y_f32 = x
    for p in layers:
        y_bf16 = ref_layer(y_bf16, p, g, k, emulate_bf16=True)
        y_f32 = ref_layer(y_f32, p, g, k, emulate_bf16=False)
    assert jnp.allclose(y, y_bf16, atol=2e-3, rtol=2e-3), \
        float(jnp.max(jnp.abs(y - y_bf16)))
    scale = float(jnp.max(jnp.abs(y_f32))) + 1e-6
    assert float(jnp.max(jnp.abs(y - y_f32))) < 0.1 * scale, \
        (float(jnp.max(jnp.abs(y - y_f32))), scale)
    print("KERNEL_OK")
</pallas_src>

<mosaic_0001>
module attributes {stable_mosaic.version = 11 : i64} {
  func.func @relukan_fused_kernel(%arg0: i32, %arg1: memref<128x16xf32, #tpu.memory_space<vmem>>, %arg2: memref<1x16xf32, #tpu.memory_space<vmem>>, %arg3: memref<1x16xf32, #tpu.memory_space<vmem>>, %arg4: memref<1x128xf32, #tpu.memory_space<vmem>>, %arg5: memref<1x128xf32, #tpu.memory_space<vmem>>, %arg6: memref<128x32xbf16, #tpu.memory_space<vmem>>, %arg7: memref<1x32xf32, #tpu.memory_space<vmem>>, %arg8: memref<1x32xf32, #tpu.memory_space<vmem>>, %arg9: memref<1x32xf32, #tpu.memory_space<vmem>>, %arg10: memref<1x256xf32, #tpu.memory_space<vmem>>, %arg11: memref<1x256xf32, #tpu.memory_space<vmem>>, %arg12: memref<256x128xbf16, #tpu.memory_space<vmem>>, %arg13: memref<1x128xf32, #tpu.memory_space<vmem>>, %arg14: memref<128x128xf32, #tpu.memory_space<vmem>>) attributes {dimension_semantics = [#tpu.dimension_semantics<parallel>], iteration_bounds = array<i64: 2>, scalar_prefetch = 0 : i64, scratch_operands = 0 : i64, tpu.core_type = #tpu.core_type<tc>, window_params = [{transform_indices = @transform_0, window_bounds = array<i64: 128, 16>}, {pipeline_mode = #tpu.pipeline_mode<synchronous>, transform_indices = @transform_1, window_bounds = array<i64: 1, 16>}, {pipeline_mode = #tpu.pipeline_mode<synchronous>, transform_indices = @transform_2, window_bounds = array<i64: 1, 16>}, {pipeline_mode = #tpu.pipeline_mode<synchronous>, transform_indices = @transform_3, window_bounds = array<i64: 1, 128>}, {pipeline_mode = #tpu.pipeline_mode<synchronous>, transform_indices = @transform_4, window_bounds = array<i64: 1, 128>}, {pipeline_mode = #tpu.pipeline_mode<synchronous>, transform_indices = @transform_5, window_bounds = array<i64: 128, 32>}, {pipeline_mode = #tpu.pipeline_mode<synchronous>, transform_indices = @transform_6, window_bounds = array<i64: 1, 32>}, {pipeline_mode = #tpu.pipeline_mode<synchronous>, transform_indices = @transform_7, window_bounds = array<i64: 1, 32>}, {pipeline_mode = #tpu.pipeline_mode<synchronous>, transform_indices = @transform_8, window_bounds = array<i64: 1, 32>}, {pipeline_mode = #tpu.pipeline_mode<synchronous>, transform_indices = @transform_9, window_bounds = array<i64: 1, 256>}, {pipeline_mode = #tpu.pipeline_mode<synchronous>, transform_indices = @transform_10, window_bounds = array<i64: 1, 256>}, {pipeline_mode = #tpu.pipeline_mode<synchronous>, transform_indices = @transform_11, window_bounds = array<i64: 256, 128>}, {pipeline_mode = #tpu.pipeline_mode<synchronous>, transform_indices = @transform_12, window_bounds = array<i64: 1, 128>}, {transform_indices = @transform_13, window_bounds = array<i64: 128, 128>}]} {
    %c0 = arith.constant 0 : index
    %c0_0 = arith.constant 0 : index
    %0 = vector.load %arg1[%c0, %c0_0] : memref<128x16xf32, #tpu.memory_space<vmem>>, vector<128x16xf32>
    %cst = arith.constant dense<0.000000e+00> : vector<128xf32>
    %1 = vector.multi_reduction <add>, %0, %cst [1] : vector<128x16xf32> to vector<128xf32>
    %2 = vector.shape_cast %1 : vector<128xf32> to vector<128x1xf32>
    %cst_1 = arith.constant 1.600000e+01 : f32
    %3 = vector.broadcast %cst_1 : f32 to vector<128x1xf32>
    %4 = arith.divf %2, %3 : vector<128x1xf32>
    %5 = arith.mulf %0, %0 : vector<128x16xf32>
    %cst_2 = arith.constant dense<0.000000e+00> : vector<128xf32>
    %6 = vector.multi_reduction <add>, %5, %cst_2 [1] : vector<128x16xf32> to vector<128xf32>
    %7 = vector.shape_cast %6 : vector<128xf32> to vector<128x1xf32>
    %cst_3 = arith.constant 1.600000e+01 : f32
    %8 = vector.broadcast %cst_3 : f32 to vector<128x1xf32>
    %9 = arith.divf %7, %8 : vector<128x1xf32>
    %10 = arith.mulf %4, %4 : vector<128x1xf32>
    %11 = arith.subf %9, %10 : vector<128x1xf32>
    %cst_4 = arith.constant 0.000000e+00 : f32
    %12 = vector.broadcast %cst_4 : f32 to vector<128x1xf32>
    %13 = arith.maximumf %11, %12 : vector<128x1xf32>
    %14 = vector.broadcast %4 : vector<128x1xf32> to vector<128x16xf32>
    %15 = arith.subf %0, %14 : vector<128x16xf32>
    %cst_5 = arith.constant 9.99999974E-6 : f32
    %16 = vector.broadcast %cst_5 : f32 to vector<128x1xf32>
    %17 = arith.addf %13, %16 : vector<128x1xf32>
    %18 = math.rsqrt %17 : vector<128x1xf32>
    %19 = vector.broadcast %18 : vector<128x1xf32> to vector<128x16xf32>
    %20 = arith.mulf %15, %19 : vector<128x16xf32>
    %c0_6 = arith.constant 0 : index
    %c0_7 = arith.constant 0 : index
    %21 = vector.load %arg2[%c0_6, %c0_7] : memref<1x16xf32, #tpu.memory_space<vmem>>, vector<1x16xf32>
    %22 = vector.broadcast %21 : vector<1x16xf32> to vector<128x16xf32>
    %23 = arith.mulf %20, %22 : vector<128x16xf32>
    %c0_8 = arith.constant 0 : index
    %c0_9 = arith.constant 0 : index
    %24 = vector.load %arg3[%c0_8, %c0_9] : memref<1x16xf32, #tpu.memory_space<vmem>>, vector<1x16xf32>
    %25 = vector.broadcast %24 : vector<1x16xf32> to vector<128x16xf32>
    %26 = arith.addf %23, %25 : vector<128x16xf32>
    %27 = tpu.concatenate %26, %26, %26, %26, %26, %26, %26, %26 in 1 : vector<128x16xf32>, vector<128x16xf32>, vector<128x16xf32>, vector<128x16xf32>, vector<128x16xf32>, vector<128x16xf32>, vector<128x16xf32>, vector<128x16xf32> -> vector<128x128xf32>
    %c0_10 = arith.constant 0 : index
    %c0_11 = arith.constant 0 : index
    %28 = vector.load %arg4[%c0_10, %c0_11] : memref<1x128xf32, #tpu.memory_space<vmem>>, vector<1x128xf32>
    %29 = vector.broadcast %28 : vector<1x128xf32> to vector<128x128xf32>
    %30 = arith.subf %27, %29 : vector<128x128xf32>
    %cst_12 = arith.constant 0.000000e+00 : f32
    %31 = vector.broadcast %cst_12 : f32 to vector<128x128xf32>
    %32 = arith.maximumf %30, %31 : vector<128x128xf32>
    %c0_13 = arith.constant 0 : index
    %c0_14 = arith.constant 0 : index
    %33 = vector.load %arg5[%c0_13, %c0_14] : memref<1x128xf32, #tpu.memory_space<vmem>>, vector<1x128xf32>
    %34 = vector.broadcast %33 : vector<1x128xf32> to vector<128x128xf32>
    %35 = arith.subf %34, %27 : vector<128x128xf32>
    %cst_15 = arith.constant 0.000000e+00 : f32
    %36 = vector.broadcast %cst_15 : f32 to vector<128x128xf32>
    %37 = arith.maximumf %35, %36 : vector<128x128xf32>
    %38 = arith.mulf %32, %37 : vector<128x128xf32>
    %39 = arith.mulf %38, %38 : vector<128x128xf32>
    %40 = arith.truncf %39 : vector<128x128xf32> to vector<128x128xbf16>
    %c0_16 = arith.constant 0 : index
    %c0_17 = arith.constant 0 : index
    %41 = vector.load %arg6[%c0_16, %c0_17] : memref<128x32xbf16, #tpu.memory_space<vmem>>, vector<128x32xbf16>
    %cst_18 = arith.constant dense<0.000000e+00> : vector<128x32xf32>
    %42 = tpu.matmul %40, %41, %cst_18 {dimension_numbers = #tpu.dot_dimension_numbers<[1], [0], [0], [1], [0, 0, 1, 1], [], []>} : vector<128x128xbf16>, vector<128x32xbf16>, vector<128x32xf32> -> vector<128x32xf32>
    %c0_19 = arith.constant 0 : index
    %c0_20 = arith.constant 0 : index
    %43 = vector.load %arg7[%c0_19, %c0_20] : memref<1x32xf32, #tpu.memory_space<vmem>>, vector<1x32xf32>
    %44 = vector.broadcast %43 : vector<1x32xf32> to vector<128x32xf32>
    %45 = arith.addf %42, %44 : vector<128x32xf32>
    %cst_21 = arith.constant dense<0.000000e+00> : vector<128xf32>
    %46 = vector.multi_reduction <add>, %45, %cst_21 [1] : vector<128x32xf32> to vector<128xf32>
    %47 = vector.shape_cast %46 : vector<128xf32> to vector<128x1xf32>
    %cst_22 = arith.constant 3.200000e+01 : f32
    %48 = vector.broadcast %cst_22 : f32 to vector<128x1xf32>
    %49 = arith.divf %47, %48 : vector<128x1xf32>
    %50 = arith.mulf %45, %45 : vector<128x32xf32>
    %cst_23 = arith.constant dense<0.000000e+00> : vector<128xf32>
    %51 = vector.multi_reduction <add>, %50, %cst_23 [1] : vector<128x32xf32> to vector<128xf32>
    %52 = vector.shape_cast %51 : vector<128xf32> to vector<128x1xf32>
    %cst_24 = arith.constant 3.200000e+01 : f32
    %53 = vector.broadcast %cst_24 : f32 to vector<128x1xf32>
    %54 = arith.divf %52, %53 : vector<128x1xf32>
    %55 = arith.mulf %49, %49 : vector<128x1xf32>
    %56 = arith.subf %54, %55 : vector<128x1xf32>
    %cst_25 = arith.constant 0.000000e+00 : f32
    %57 = vector.broadcast %cst_25 : f32 to vector<128x1xf32>
    %58 = arith.maximumf %56, %57 : vector<128x1xf32>
    %59 = vector.broadcast %49 : vector<128x1xf32> to vector<128x32xf32>
    %60 = arith.subf %45, %59 : vector<128x32xf32>
    %cst_26 = arith.constant 9.99999974E-6 : f32
    %61 = vector.broadcast %cst_26 : f32 to vector<128x1xf32>
    %62 = arith.addf %58, %61 : vector<128x1xf32>
    %63 = math.rsqrt %62 : vector<128x1xf32>
    %64 = vector.broadcast %63 : vector<128x1xf32> to vector<128x32xf32>
    %65 = arith.mulf %60, %64 : vector<128x32xf32>
    %c0_27 = arith.constant 0 : index
    %c0_28 = arith.constant 0 : index
    %66 = vector.load %arg8[%c0_27, %c0_28] : memref<1x32xf32, #tpu.memory_space<vmem>>, vector<1x32xf32>
    %67 = vector.broadcast %66 : vector<1x32xf32> to vector<128x32xf32>
    %68 = arith.mulf %65, %67 : vector<128x32xf32>
    %c0_29 = arith.constant 0 : index
    %c0_30 = arith.constant 0 : index
    %69 = vector.load %arg9[%c0_29, %c0_30] : memref<1x32xf32, #tpu.memory_space<vmem>>, vector<1x32xf32>
    %70 = vector.broadcast %69 : vector<1x32xf32> to vector<128x32xf32>
    %71 = arith.addf %68, %70 : vector<128x32xf32>
    %72 = tpu.concatenate %71, %71, %71, %71, %71, %71, %71, %71 in 1 : vector<128x32xf32>, vector<128x32xf32>, vector<128x32xf32>, vector<128x32xf32>, vector<128x32xf32>, vector<128x32xf32>, vector<128x32xf32>, vector<128x32xf32> -> vector<128x256xf32>
    %c0_31 = arith.constant 0 : index
    %c0_32 = arith.constant 0 : index
    %73 = vector.load %arg10[%c0_31, %c0_32] : memref<1x256xf32, #tpu.memory_space<vmem>>, vector<1x256xf32>
    %74 = vector.broadcast %73 : vector<1x256xf32> to vector<128x256xf32>
    %75 = arith.subf %72, %74 : vector<128x256xf32>
    %cst_33 = arith.constant 0.000000e+00 : f32
    %76 = vector.broadcast %cst_33 : f32 to vector<128x256xf32>
    %77 = arith.maximumf %75, %76 : vector<128x256xf32>
    %c0_34 = arith.constant 0 : index
    %c0_35 = arith.constant 0 : index
    %78 = vector.load %arg11[%c0_34, %c0_35] : memref<1x256xf32, #tpu.memory_space<vmem>>, vector<1x256xf32>
    %79 = vector.broadcast %78 : vector<1x256xf32> to vector<128x256xf32>
    %80 = arith.subf %79, %72 : vector<128x256xf32>
    %cst_36 = arith.constant 0.000000e+00 : f32
    %81 = vector.broadcast %cst_36 : f32 to vector<128x256xf32>
    %82 = arith.maximumf %80, %81 : vector<128x256xf32>
    %83 = arith.mulf %77, %82 : vector<128x256xf32>
    %84 = arith.mulf %83, %83 : vector<128x256xf32>
    %85 = arith.truncf %84 : vector<128x256xf32> to vector<128x256xbf16>
    %c0_37 = arith.constant 0 : index
    %c0_38 = arith.constant 0 : index
    %86 = vector.load %arg12[%c0_37, %c0_38] : memref<256x128xbf16, #tpu.memory_space<vmem>>, vector<256x128xbf16>
    %cst_39 = arith.constant dense<0.000000e+00> : vector<128x128xf32>
    %87 = tpu.matmul %85, %86, %cst_39 {dimension_numbers = #tpu.dot_dimension_numbers<[1], [0], [0], [1], [0, 0, 1, 1], [], []>} : vector<128x256xbf16>, vector<256x128xbf16>, vector<128x128xf32> -> vector<128x128xf32>
    %c0_40 = arith.constant 0 : index
    %c0_41 = arith.constant 0 : index
    %88 = vector.load %arg13[%c0_40, %c0_41] : memref<1x128xf32, #tpu.memory_space<vmem>>, vector<1x128xf32>
    %89 = vector.broadcast %88 : vector<1x128xf32> to vector<128x128xf32>
    %90 = arith.addf %87, %89 : vector<128x128xf32>
    %c0_42 = arith.constant 0 : index
    %c0_43 = arith.constant 0 : index
    %91 = vector.load %arg14[%c0_42, %c0_43] : memref<128x128xf32, #tpu.memory_space<vmem>>, vector<128x128xf32>
    tpu.vector_store %arg14[%c0_42, %c0_43], %90 {strides = array<i32>} : memref<128x128xf32, #tpu.memory_space<vmem>>, vector<128x128xf32>,
    return
  }
  func.func @transform_0(%arg0: i32) -> (i32, i32) {
    %c0_i32 = arith.constant 0 : i32
    %c0_i32_0 = arith.constant 0 : i32
    return %arg0, %c0_i32 : i32, i32
  }
  func.func @transform_1(%arg0: i32) -> (i32, i32) {
    %c0_i32 = arith.constant 0 : i32
    %c0_i32_0 = arith.constant 0 : i32
    %c0_i32_1 = arith.constant 0 : i32
    return %c0_i32, %c0_i32_0 : i32, i32
  }
  func.func @transform_2(%arg0: i32) -> (i32, i32) {
    %c0_i32 = arith.constant 0 : i32
    %c0_i32_0 = arith.constant 0 : i32
    %c0_i32_1 = arith.constant 0 : i32
    return %c0_i32, %c0_i32_0 : i32, i32
  }
  func.func @transform_3(%arg0: i32) -> (i32, i32) {
    %c0_i32 = arith.constant 0 : i32
    %c0_i32_0 = arith.constant 0 : i32
    %c0_i32_1 = arith.constant 0 : i32
    return %c0_i32, %c0_i32_0 : i32, i32
  }
  func.func @transform_4(%arg0: i32) -> (i32, i32) {
    %c0_i32 = arith.constant 0 : i32
    %c0_i32_0 = arith.constant 0 : i32
    %c0_i32_1 = arith.constant 0 : i32
    return %c0_i32, %c0_i32_0 : i32, i32
  }
  func.func @transform_5(%arg0: i32) -> (i32, i32) {
    %c0_i32 = arith.constant 0 : i32
    %c0_i32_0 = arith.constant 0 : i32
    %c0_i32_1 = arith.constant 0 : i32
    return %c0_i32, %c0_i32_0 : i32, i32
  }
  func.func @transform_6(%arg0: i32) -> (i32, i32) {
    %c0_i32 = arith.constant 0 : i32
    %c0_i32_0 = arith.constant 0 : i32
    %c0_i32_1 = arith.constant 0 : i32
    return %c0_i32, %c0_i32_0 : i32, i32
  }
  func.func @transform_7(%arg0: i32) -> (i32, i32) {
    %c0_i32 = arith.constant 0 : i32
    %c0_i32_0 = arith.constant 0 : i32
    %c0_i32_1 = arith.constant 0 : i32
    return %c0_i32, %c0_i32_0 : i32, i32
  }
  func.func @transform_8(%arg0: i32) -> (i32, i32) {
    %c0_i32 = arith.constant 0 : i32
    %c0_i32_0 = arith.constant 0 : i32
    %c0_i32_1 = arith.constant 0 : i32
    return %c0_i32, %c0_i32_0 : i32, i32
  }
  func.func @transform_9(%arg0: i32) -> (i32, i32) {
    %c0_i32 = arith.constant 0 : i32
    %c0_i32_0 = arith.constant 0 : i32
    %c0_i32_1 = arith.constant 0 : i32
    return %c0_i32, %c0_i32_0 : i32, i32
  }
  func.func @transform_10(%arg0: i32) -> (i32, i32) {
    %c0_i32 = arith.constant 0 : i32
    %c0_i32_0 = arith.constant 0 : i32
    %c0_i32_1 = arith.constant 0 : i32
    return %c0_i32, %c0_i32_0 : i32, i32
  }
  func.func @transform_11(%arg0: i32) -> (i32, i32) {
    %c0_i32 = arith.constant 0 : i32
    %c0_i32_0 = arith.constant 0 : i32
    %c0_i32_1 = arith.constant 0 : i32
    return %c0_i32, %c0_i32_0 : i32, i32
  }
  func.func @transform_12(%arg0: i32) -> (i32, i32) {
    %c0_i32 = arith.constant 0 : i32
    %c0_i32_0 = arith.constant 0 : i32
    %c0_i32_1 = arith.constant 0 : i32
    return %c0_i32, %c0_i32_0 : i32, i32
  }
  func.func @transform_13(%arg0: i32) -> (i32, i32) {
    %c0_i32 = arith.constant 0 : i32
    %c0_i32_0 = arith.constant 0 : i32
    return %arg0, %c0_i32 : i32, i32
  }
}

module attributes {stable_mosaic.version = 11 : i64} {
  func.func @relukan_fused_kernel(%arg0: i32, %arg1: memref<128x16xf32, #tpu.memory_space<vmem>>, %arg2: memref<1x16xf32, #tpu.memory_space<vmem>>, %arg3: memref<1x16xf32, #tpu.memory_space<vmem>>, %arg4: memref<1x128xf32, #tpu.memory_space<vmem>>, %arg5: memref<1x128xf32, #tpu.memory_space<vmem>>, %arg6: memref<128x32xbf16, #tpu.memory_space<vmem>>, %arg7: memref<1x32xf32, #tpu.memory_space<vmem>>, %arg8: memref<1x32xf32, #tpu.memory_space<vmem>>, %arg9: memref<1x32xf32, #tpu.memory_space<vmem>>, %arg10: memref<1x256xf32, #tpu.memory_space<vmem>>, %arg11: memref<1x256xf32, #tpu.memory_space<vmem>>, %arg12: memref<256x128xbf16, #tpu.memory_space<vmem>>, %arg13: memref<1x128xf32, #tpu.memory_space<vmem>>, %arg14: memref<128x128xf32, #tpu.memory_space<vmem>>) attributes {dimension_semantics = [#tpu.dimension_semantics<parallel>], iteration_bounds = array<i64: 2>, scalar_prefetch = 0 : i64, scratch_operands = 0 : i64, tpu.core_type = #tpu.core_type<tc>, window_params = [{transform_indices = @transform_0, window_bounds = array<i64: 128, 16>}, {pipeline_mode = #tpu.pipeline_mode<synchronous>, transform_indices = @transform_1, window_bounds = array<i64: 1, 16>}, {pipeline_mode = #tpu.pipeline_mode<synchronous>, transform_indices = @transform_2, window_bounds = array<i64: 1, 16>}, {pipeline_mode = #tpu.pipeline_mode<synchronous>, transform_indices = @transform_3, window_bounds = array<i64: 1, 128>}, {pipeline_mode = #tpu.pipeline_mode<synchronous>, transform_indices = @transform_4, window_bounds = array<i64: 1, 128>}, {pipeline_mode = #tpu.pipeline_mode<synchronous>, transform_indices = @transform_5, window_bounds = array<i64: 128, 32>}, {pipeline_mode = #tpu.pipeline_mode<synchronous>, transform_indices = @transform_6, window_bounds = array<i64: 1, 32>}, {pipeline_mode = #tpu.pipeline_mode<synchronous>, transform_indices = @transform_7, window_bounds = array<i64: 1, 32>}, {pipeline_mode = #tpu.pipeline_mode<synchronous>, transform_indices = @transform_8, window_bounds = array<i64: 1, 32>}, {pipeline_mode = #tpu.pipeline_mode<synchronous>, transform_indices = @transform_9, window_bounds = array<i64: 1, 256>}, {pipeline_mode = #tpu.pipeline_mode<synchronous>, transform_indices = @transform_10, window_bounds = array<i64: 1, 256>}, {pipeline_mode = #tpu.pipeline_mode<synchronous>, transform_indices = @transform_11, window_bounds = array<i64: 256, 128>}, {pipeline_mode = #tpu.pipeline_mode<synchronous>, transform_indices = @transform_12, window_bounds = array<i64: 1, 128>}, {transform_indices = @transform_13, window_bounds = array<i64: 128, 128>}]} {
    %c0 = arith.constant 0 : index
    %c0_0 = arith.constant 0 : index
    %0 = vector.load %arg1[%c0, %c0_0] : memref<128x16xf32, #tpu.memory_space<vmem>>, vector<128x16xf32>
    %cst = arith.constant dense<0.000000e+00> : vector<128xf32>
    %1 = vector.multi_reduction <add>, %0, %cst [1] : vector<128x16xf32> to vector<128xf32>
    %2 = vector.shape_cast %1 : vector<128xf32> to vector<128x1xf32>
    %cst_1 = arith.constant 1.600000e+01 : f32
    %3 = vector.broadcast %cst_1 : f32 to vector<128x1xf32>
    %4 = arith.divf %2, %3 : vector<128x1xf32>
    %5 = arith.mulf %0, %0 : vector<128x16xf32>
    %cst_2 = arith.constant dense<0.000000e+00> : vector<128xf32>
    %6 = vector.multi_reduction <add>, %5, %cst_2 [1] : vector<128x16xf32> to vector<128xf32>
    %7 = vector.shape_cast %6 : vector<128xf32> to vector<128x1xf32>
    %cst_3 = arith.constant 1.600000e+01 : f32
    %8 = vector.broadcast %cst_3 : f32 to vector<128x1xf32>
    %9 = arith.divf %7, %8 : vector<128x1xf32>
    %10 = arith.mulf %4, %4 : vector<128x1xf32>
    %11 = arith.subf %9, %10 : vector<128x1xf32>
    %cst_4 = arith.constant 0.000000e+00 : f32
    %12 = vector.broadcast %cst_4 : f32 to vector<128x1xf32>
    %13 = arith.maximumf %11, %12 : vector<128x1xf32>
    %14 = vector.broadcast %4 : vector<128x1xf32> to vector<128x16xf32>
    %15 = arith.subf %0, %14 : vector<128x16xf32>
    %cst_5 = arith.constant 9.99999974E-6 : f32
    %16 = vector.broadcast %cst_5 : f32 to vector<128x1xf32>
    %17 = arith.addf %13, %16 : vector<128x1xf32>
    %18 = math.rsqrt %17 : vector<128x1xf32>
    %19 = vector.broadcast %18 : vector<128x1xf32> to vector<128x16xf32>
    %20 = arith.mulf %15, %19 : vector<128x16xf32>
    %c0_6 = arith.constant 0 : index
    %c0_7 = arith.constant 0 : index
    %21 = vector.load %arg2[%c0_6, %c0_7] : memref<1x16xf32, #tpu.memory_space<vmem>>, vector<1x16xf32>
    %22 = vector.broadcast %21 : vector<1x16xf32> to vector<128x16xf32>
    %23 = arith.mulf %20, %22 : vector<128x16xf32>
    %c0_8 = arith.constant 0 : index
    %c0_9 = arith.constant 0 : index
    %24 = vector.load %arg3[%c0_8, %c0_9] : memref<1x16xf32, #tpu.memory_space<vmem>>, vector<1x16xf32>
    %25 = vector.broadcast %24 : vector<1x16xf32> to vector<128x16xf32>
    %26 = arith.addf %23, %25 : vector<128x16xf32>
    %27 = tpu.concatenate %26, %26, %26, %26, %26, %26, %26, %26 in 1 : vector<128x16xf32>, vector<128x16xf32>, vector<128x16xf32>, vector<128x16xf32>, vector<128x16xf32>, vector<128x16xf32>, vector<128x16xf32>, vector<128x16xf32> -> vector<128x128xf32>
    %c0_10 = arith.constant 0 : index
    %c0_11 = arith.constant 0 : index
    %28 = vector.load %arg4[%c0_10, %c0_11] : memref<1x128xf32, #tpu.memory_space<vmem>>, vector<1x128xf32>
    %29 = vector.broadcast %28 : vector<1x128xf32> to vector<128x128xf32>
    %30 = arith.subf %27, %29 : vector<128x128xf32>
    %cst_12 = arith.constant 0.000000e+00 : f32
    %31 = vector.broadcast %cst_12 : f32 to vector<128x128xf32>
    %32 = arith.maximumf %30, %31 : vector<128x128xf32>
    %c0_13 = arith.constant 0 : index
    %c0_14 = arith.constant 0 : index
    %33 = vector.load %arg5[%c0_13, %c0_14] : memref<1x128xf32, #tpu.memory_space<vmem>>, vector<1x128xf32>
    %34 = vector.broadcast %33 : vector<1x128xf32> to vector<128x128xf32>
    %35 = arith.subf %34, %27 : vector<128x128xf32>
    %cst_15 = arith.constant 0.000000e+00 : f32
    %36 = vector.broadcast %cst_15 : f32 to vector<128x128xf32>
    %37 = arith.maximumf %35, %36 : vector<128x128xf32>
    %38 = arith.mulf %32, %37 : vector<128x128xf32>
    %39 = arith.mulf %38, %38 : vector<128x128xf32>
    %40 = arith.truncf %39 : vector<128x128xf32> to vector<128x128xbf16>
    %c0_16 = arith.constant 0 : index
    %c0_17 = arith.constant 0 : index
    %41 = vector.load %arg6[%c0_16, %c0_17] : memref<128x32xbf16, #tpu.memory_space<vmem>>, vector<128x32xbf16>
    %cst_18 = arith.constant dense<0.000000e+00> : vector<128x32xf32>
    %42 = tpu.matmul %40, %41, %cst_18 {dimension_numbers = #tpu.dot_dimension_numbers<[1], [0], [0], [1], [0, 0, 1, 1], [], []>} : vector<128x128xbf16>, vector<128x32xbf16>, vector<128x32xf32> -> vector<128x32xf32>
    %c0_19 = arith.constant 0 : index
    %c0_20 = arith.constant 0 : index
    %43 = vector.load %arg7[%c0_19, %c0_20] : memref<1x32xf32, #tpu.memory_space<vmem>>, vector<1x32xf32>
    %44 = vector.broadcast %43 : vector<1x32xf32> to vector<128x32xf32>
    %45 = arith.addf %42, %44 : vector<128x32xf32>
    %cst_21 = arith.constant dense<0.000000e+00> : vector<128xf32>
    %46 = vector.multi_reduction <add>, %45, %cst_21 [1] : vector<128x32xf32> to vector<128xf32>
    %47 = vector.shape_cast %46 : vector<128xf32> to vector<128x1xf32>
    %cst_22 = arith.constant 3.200000e+01 : f32
    %48 = vector.broadcast %cst_22 : f32 to vector<128x1xf32>
    %49 = arith.divf %47, %48 : vector<128x1xf32>
    %50 = arith.mulf %45, %45 : vector<128x32xf32>
    %cst_23 = arith.constant dense<0.000000e+00> : vector<128xf32>
    %51 = vector.multi_reduction <add>, %50, %cst_23 [1] : vector<128x32xf32> to vector<128xf32>
    %52 = vector.shape_cast %51 : vector<128xf32> to vector<128x1xf32>
    %cst_24 = arith.constant 3.200000e+01 : f32
    %53 = vector.broadcast %cst_24 : f32 to vector<128x1xf32>
    %54 = arith.divf %52, %53 : vector<128x1xf32>
    %55 = arith.mulf %49, %49 : vector<128x1xf32>
    %56 = arith.subf %54, %55 : vector<128x1xf32>
    %cst_25 = arith.constant 0.000000e+00 : f32
    %57 = vector.broadcast %cst_25 : f32 to vector<128x1xf32>
    %58 = arith.maximumf %56, %57 : vector<128x1xf32>
    %59 = vector.broadcast %49 : vector<128x1xf32> to vector<128x32xf32>
    %60 = arith.subf %45, %59 : vector<128x32xf32>
    %cst_26 = arith.constant 9.99999974E-6 : f32
    %61 = vector.broadcast %cst_26 : f32 to vector<128x1xf32>
    %62 = arith.addf %58, %61 : vector<128x1xf32>
    %63 = math.rsqrt %62 : vector<128x1xf32>
    %64 = vector.broadcast %63 : vector<128x1xf32> to vector<128x32xf32>
    %65 = arith.mulf %60, %64 : vector<128x32xf32>
    %c0_27 = arith.constant 0 : index
    %c0_28 = arith.constant 0 : index
    %66 = vector.load %arg8[%c0_27, %c0_28] : memref<1x32xf32, #tpu.memory_space<vmem>>, vector<1x32xf32>
    %67 = vector.broadcast %66 : vector<1x32xf32> to vector<128x32xf32>
    %68 = arith.mulf %65, %67 : vector<128x32xf32>
    %c0_29 = arith.constant 0 : index
    %c0_30 = arith.constant 0 : index
    %69 = vector.load %arg9[%c0_29, %c0_30] : memref<1x32xf32, #tpu.memory_space<vmem>>, vector<1x32xf32>
    %70 = vector.broadcast %69 : vector<1x32xf32> to vector<128x32xf32>
    %71 = arith.addf %68, %70 : vector<128x32xf32>
    %72 = tpu.concatenate %71, %71, %71, %71, %71, %71, %71, %71 in 1 : vector<128x32xf32>, vector<128x32xf32>, vector<128x32xf32>, vector<128x32xf32>, vector<128x32xf32>, vector<128x32xf32>, vector<128x32xf32>, vector<128x32xf32> -> vector<128x256xf32>
    %c0_31 = arith.constant 0 : index
    %c0_32 = arith.constant 0 : index
    %73 = vector.load %arg10[%c0_31, %c0_32] : memref<1x256xf32, #tpu.memory_space<vmem>>, vector<1x256xf32>
    %74 = vector.broadcast %73 : vector<1x256xf32> to vector<128x256xf32>
    %75 = arith.subf %72, %74 : vector<128x256xf32>
    %cst_33 = arith.constant 0.000000e+00 : f32
    %76 = vector.broadcast %cst_33 : f32 to vector<128x256xf32>
    %77 = arith.maximumf %75, %76 : vector<128x256xf32>
    %c0_34 = arith.constant 0 : index
    %c0_35 = arith.constant 0 : index
    %78 = vector.load %arg11[%c0_34, %c0_35] : memref<1x256xf32, #tpu.memory_space<vmem>>, vector<1x256xf32>
    %79 = vector.broadcast %78 : vector<1x256xf32> to vector<128x256xf32>
    %80 = arith.subf %79, %72 : vector<128x256xf32>
    %cst_36 = arith.constant 0.000000e+00 : f32
    %81 = vector.broadcast %cst_36 : f32 to vector<128x256xf32>
    %82 = arith.maximumf %80, %81 : vector<128x256xf32>
    %83 = arith.mulf %77, %82 : vector<128x256xf32>
    %84 = arith.mulf %83, %83 : vector<128x256xf32>
    %85 = arith.truncf %84 : vector<128x256xf32> to vector<128x256xbf16>
    %c0_37 = arith.constant 0 : index
    %c0_38 = arith.constant 0 : index
    %86 = vector.load %arg12[%c0_37, %c0_38] : memref<256x128xbf16, #tpu.memory_space<vmem>>, vector<256x128xbf16>
    %cst_39 = arith.constant dense<0.000000e+00> : vector<128x128xf32>
    %87 = tpu.matmul %85, %86, %cst_39 {dimension_numbers = #tpu.dot_dimension_numbers<[1], [0], [0], [1], [0, 0, 1, 1], [], []>} : vector<128x256xbf16>, vector<256x128xbf16>, vector<128x128xf32> -> vector<128x128xf32>
    %c0_40 = arith.constant 0 : index
    %c0_41 = arith.constant 0 : index
    %88 = vector.load %arg13[%c0_40, %c0_41] : memref<1x128xf32, #tpu.memory_space<vmem>>, vector<1x128xf32>
    %89 = vector.broadcast %88 : vector<1x128xf32> to vector<128x128xf32>
    %90 = arith.addf %87, %89 : vector<128x128xf32>
    %c0_42 = arith.constant 0 : index
    %c0_43 = arith.constant 0 : index
    %91 = vector.load %arg14[%c0_42, %c0_43] : memref<128x128xf32, #tpu.memory_space<vmem>>, vector<128x128xf32>
    tpu.vector_store %arg14[%c0_42, %c0_43], %90 {strides = array<i32>} : memref<128x128xf32, #tpu.memory_space<vmem>>, vector<128x128xf32>,
    return
  }
  func.func @transform_0(%arg0: i32) -> (i32, i32) {
    %c0_i32 = arith.constant 0 : i32
    %c0_i32_0 = arith.constant 0 : i32
    return %arg0, %c0_i32 : i32, i32
  }
  func.func @transform_1(%arg0: i32) -> (i32, i32) {
    %c0_i32 = arith.constant 0 : i32
    %c0_i32_0 = arith.constant 0 : i32
    %c0_i32_1 = arith.constant 0 : i32
    return %c0_i32, %c0_i32_0 : i32, i32
  }
  func.func @transform_2(%arg0: i32) -> (i32, i32) {
    %c0_i32 = arith.constant 0 : i32
    %c0_i32_0 = arith.constant 0 : i32
    %c0_i32_1 = arith.constant 0 : i32
    return %c0_i32, %c0_i32_0 : i32, i32
  }
  func.func @transform_3(%arg0: i32) -> (i32, i32) {
    %c0_i32 = arith.constant 0 : i32
    %c0_i32_0 = arith.constant 0 : i32
    %c0_i32_1 = arith.constant 0 : i32
    return %c0_i32, %c0_i32_0 : i32, i32
  }
  func.func @transform_4(%arg0: i32) -> (i32, i32) {
    %c0_i32 = arith.constant 0 : i32
    %c0_i32_0 = arith.constant 0 : i32
    %c0_i32_1 = arith.constant 0 : i32
    return %c0_i32, %c0_i32_0 : i32, i32
  }
  func.func @transform_5(%arg0: i32) -> (i32, i32) {
    %c0_i32 = arith.constant 0 : i32
    %c0_i32_0 = arith.constant 0 : i32
    %c0_i32_1 = arith.constant 0 : i32
    return %c0_i32, %c0_i32_0 : i32, i32
  }
  func.func @transform_6(%arg0: i32) -> (i32, i32) {
    %c0_i32 = arith.constant 0 : i32
    %c0_i32_0 = arith.constant 0 : i32
    %c0_i32_1 = arith.constant 0 : i32
    return %c0_i32, %c0_i32_0 : i32, i32
  }
  func.func @transform_7(%arg0: i32) -> (i32, i32) {
    %c0_i32 = arith.constant 0 : i32
    %c0_i32_0 = arith.constant 0 : i32
    %c0_i32_1 = arith.constant 0 : i32
    return %c0_i32, %c0_i32_0 : i32, i32
  }
  func.func @transform_8(%arg0: i32) -> (i32, i32) {
    %c0_i32 = arith.constant 0 : i32
    %c0_i32_0 = arith.constant 0 : i32
    %c0_i32_1 = arith.constant 0 : i32
    return %c0_i32, %c0_i32_0 : i32, i32
  }
  func.func @transform_9(%arg0: i32) -> (i32, i32) {
    %c0_i32 = arith.constant 0 : i32
    %c0_i32_0 = arith.constant 0 : i32
    %c0_i32_1 = arith.constant 0 : i32
    return %c0_i32, %c0_i32_0 : i32, i32
  }
  func.func @transform_10(%arg0: i32) -> (i32, i32) {
    %c0_i32 = arith.constant 0 : i32
    %c0_i32_0 = arith.constant 0 : i32
    %c0_i32_1 = arith.constant 0 : i32
    return %c0_i32, %c0_i32_0 : i32, i32
  }
  func.func @transform_11(%arg0: i32) -> (i32, i32) {
    %c0_i32 = arith.constant 0 : i32
    %c0_i32_0 = arith.constant 0 : i32
    %c0_i32_1 = arith.constant 0 : i32
    return %c0_i32, %c0_i32_0 : i32, i32
  }
  func.func @transform_12(%arg0: i32) -> (i32, i32) {
    %c0_i32 = arith.constant 0 : i32
    %c0_i32_0 = arith.constant 0 : i32
    %c0_i32_1 = arith.constant 0 : i32
    return %c0_i32, %c0_i32_0 : i32, i32
  }
  func.func @transform_13(%arg0: i32) -> (i32, i32) {
    %c0_i32 = arith.constant 0 : i32
    %c0_i32_0 = arith.constant 0 : i32
    return %arg0, %c0_i32 : i32, i32
  }
}

</mosaic_0001>

<llo_original>
// kernel: tpu_custom_call.1
$region0: #{tpu_custom_call.1}
  #allocation0 [shape = 'u32[]', space=smem, size = 0x4, offset = 0x4, fixed_abs, tag = 'smem constant byte address 0x4 - core index']
  #allocation1 [shape = 'u32[144,128]{1,0:T(1,128)}', space=vmem, size = 0x12000, scoped, tag = 'internal scratch']
  %s0 = inlined_call_operand.vmem [shape: f32[256,16], index: 0, kind: input, shape index: {}]
  %s1 = inlined_call_operand.vmem [shape: f32[1,16], index: 1, kind: input, shape index: {}]
  %s2 = inlined_call_operand.vmem [shape: f32[1,16], index: 2, kind: input, shape index: {}]
  %s3 = inlined_call_operand.vmem [shape: f32[1,128], index: 3, kind: input, shape index: {}]
  %s4 = inlined_call_operand.vmem [shape: f32[1,128], index: 4, kind: input, shape index: {}]
  %s5 = inlined_call_operand.vmem [shape: bf16[128,32], index: 5, kind: input, shape index: {}]
  %s6 = inlined_call_operand.vmem [shape: f32[1,32], index: 6, kind: input, shape index: {}]
  %s7 = inlined_call_operand.vmem [shape: f32[1,32], index: 7, kind: input, shape index: {}]
  %s8 = inlined_call_operand.vmem [shape: f32[1,32], index: 8, kind: input, shape index: {}]
  %s9 = inlined_call_operand.vmem [shape: f32[1,256], index: 9, kind: input, shape index: {}]
  %s10 = inlined_call_operand.vmem [shape: f32[1,256], index: 10, kind: input, shape index: {}]
  %s11 = inlined_call_operand.vmem [shape: bf16[256,128], index: 11, kind: input, shape index: {}]
  %s12 = inlined_call_operand.vmem [shape: f32[1,128], index: 12, kind: input, shape index: {}]
  %s13 = inlined_call_operand.hbm [shape: f32[256,128], index: 13, kind: output, shape index: {}]
  %s14 = sld [smem:[#allocation0]]
  $region85: #{tpu_custom_call.1} parent=0
    _
  %s16 = ssub.s32 1, %s14
  %s17 = scalar_select 0, %s16, %s14
  $region1: #{tpu_custom_call.1} parent=0
    #allocation2 [shape = 'u8[131072]{0}', space=vmem, size = 0x20000, scoped, tag = 'output window, operand 0']
    #allocation3 [shape = 's32[2]{0}', space=sflag, size = 0x8, scoped, tag = 'scoped memory for tpu_custom_call.1']
    %18 = vsyncpa [#allocation3], 0
    %s19 = scalar_lea.sflag [#allocation3], 1
    %20 = vsyncpa %s19, 0
    loop: start=0, step=1, limit=4
    $region2: #{tpu_custom_call.1} parent=1 // loop_pre_header
      _
    $region3: #{tpu_custom_call.1} parent=1 // loop_header
      %s22 = sphi 0, %s26
      %p23 = scmp.ge.s32.totalorder %s22, 4
      %s32 = sphi 0, %s34
      %s35 = sphi 0, %s32
      %s36 = sphi 0, %s35
      %s52 = sphi 0, %s36
      %s56 = sphi 0, %s56
      %s58 = sphi 0, %s56
      %s59 = sphi 0, %s58
      %s73 = sphi 0, %s59
      %s77 = sphi 0, %s77
      %s79 = sphi 0, %s77
      %s80 = sphi 0, %s79
      %s94 = sphi 0, %s80
      %s98 = sphi 0, %s98
      %s100 = sphi 0, %s98
      %s101 = sphi 0, %s100
      %s115 = sphi 0, %s101
      %s119 = sphi 0, %s119
      %s121 = sphi 0, %s119
      %s122 = sphi 0, %s121
      %s136 = sphi 0, %s122
      %s140 = sphi 0, %s140
      %s142 = sphi 0, %s140
      %s143 = sphi 0, %s142
      %s157 = sphi 0, %s143
      %s161 = sphi 0, %s161
      %s163 = sphi 0, %s161
      %s164 = sphi 0, %s163
      %s178 = sphi 0, %s164
      %s182 = sphi 0, %s182
      %s184 = sphi 0, %s182
      %s185 = sphi 0, %s184
      %s199 = sphi 0, %s185
      %s203 = sphi 0, %s203
      %s205 = sphi 0, %s203
      %s206 = sphi 0, %s205
      %s220 = sphi 0, %s206
      %s224 = sphi 0, %s224
      %s226 = sphi 0, %s224
      %s227 = sphi 0, %s226
      %s241 = sphi 0, %s227
      %s245 = sphi 0, %s245
      %s247 = sphi 0, %s245
      %s248 = sphi 0, %s247
      %s262 = sphi 0, %s248
      %s266 = sphi 0, %s266
      %s268 = sphi 0, %s266
      %s269 = sphi 0, %s268
      %s283 = sphi 0, %s269
      %s287 = sphi 0, %s287
      %s289 = sphi 0, %s287
      %s290 = sphi 0, %s289
      %s304 = sphi 0, %s290
      %s310 = sphi 0, %s312
      %s313 = sphi 0, %s310
      %s314 = sphi 0, %s313
      %s330 = sphi 0, %s314
    $region4: #{tpu_custom_call.1} parent=1 // loop_header_branch
      %25 = sbr.rel (%p23) target = $region8
    $region5: #{tpu_custom_call.1} parent=1 // loop_body
      %s27 = ssub.s32 %s22, 1
      %s28 = ssub.s32 %s22, 2
      %s29 = sadd.s32 %s22, 1
      %s30 = ssub.s32 %s22, %s29
      %p31 = scmp.eq.s32.totalorder %s30, 0
      %s33 = sadd.s32 %s32, 1
      %s34 = scalar_select %p31, %s32, %s33
      %p37 = pneg %p31
      %p38 = scmp.eq.s32.totalorder %s22, 1
      %p39 = por %p37, %p38
      %p40 = scmp.ne.s32.totalorder %s32, %s35
      %p41 = scmp.eq.s32.totalorder %s22, 0
      %p42 = por %p40, %p41
      %p43 = scmp.ne.s32.totalorder %s32, %s35
      %p44 = scmp.eq.s32.totalorder %s27, 1
      %p45 = por %p43, %p44
      %p46 = scmp.ne.s32.totalorder %s35, %s36
      %p47 = scmp.eq.s32.totalorder %s27, 0
      %p48 = por %p46, %p47
      %p49 = scmp.ne.s32.totalorder %s35, %s36
      %p50 = scmp.eq.s32.totalorder %s28, 1
      %p51 = por %p49, %p50
      %p53 = scmp.ne.s32.totalorder %s36, %s52
      %p54 = scmp.eq.s32.totalorder %s28, 0
      %p55 = por %p53, %p54
      %s57 = sadd.s32 %s56, 1
      %p60 = scmp.eq.s32.totalorder %s22, 1
      %p61 = scmp.ne.s32.totalorder %s56, %s58
      %p62 = scmp.eq.s32.totalorder %s22, 0
      %p63 = por %p61, %p62
      %p64 = scmp.ne.s32.totalorder %s56, %s58
      %p65 = scmp.eq.s32.totalorder %s27, 1
      %p66 = por %p64, %p65
      %p67 = scmp.ne.s32.totalorder %s58, %s59
      %p68 = scmp.eq.s32.totalorder %s27, 0
      %p69 = por %p67, %p68
      %p70 = scmp.ne.s32.totalorder %s58, %s59
      %p71 = scmp.eq.s32.totalorder %s28, 1
      %p72 = por %p70, %p71
      %p74 = scmp.ne.s32.totalorder %s59, %s73
      %p75 = scmp.eq.s32.totalorder %s28, 0
      %p76 = por %p74, %p75
      %s78 = sadd.s32 %s77, 1
      %p81 = scmp.eq.s32.totalorder %s22, 1
      %p82 = scmp.ne.s32.totalorder %s77, %s79
      %p83 = scmp.eq.s32.totalorder %s22, 0
      %p84 = por %p82, %p83
      %p85 = scmp.ne.s32.totalorder %s77, %s79
      %p86 = scmp.eq.s32.totalorder %s27, 1
      %p87 = por %p85, %p86
      %p88 = scmp.ne.s32.totalorder %s79, %s80
      %p89 = scmp.eq.s32.totalorder %s27, 0
      %p90 = por %p88, %p89
      %p91 = scmp.ne.s32.totalorder %s79, %s80
      %p92 = scmp.eq.s32.totalorder %s28, 1
      %p93 = por %p91, %p92
      %p95 = scmp.ne.s32.totalorder %s80, %s94
      %p96 = scmp.eq.s32.totalorder %s28, 0
      %p97 = por %p95, %p96
      %s99 = sadd.s32 %s98, 1
      %p102 = scmp.eq.s32.totalorder %s22, 1
      %p103 = scmp.ne.s32.totalorder %s98, %s100
      %p104 = scmp.eq.s32.totalorder %s22, 0
      %p105 = por %p103, %p104
      %p106 = scmp.ne.s32.totalorder %s98, %s100
      %p107 = scmp.eq.s32.totalorder %s27, 1
      %p108 = por %p106, %p107
      %p109 = scmp.ne.s32.totalorder %s100, %s101
      %p110 = scmp.eq.s32.totalorder %s27, 0
      %p111 = por %p109, %p110
      %p112 = scmp.ne.s32.totalorder %s100, %s101
      %p113 = scmp.eq.s32.totalorder %s28, 1
      %p114 = por %p112, %p113
      %p116 = scmp.ne.s32.totalorder %s101, %s115
      %p117 = scmp.eq.s32.totalorder %s28, 0
      %p118 = por %p116, %p117
      %s120 = sadd.s32 %s119, 1
      %p123 = scmp.eq.s32.totalorder %s22, 1
      %p124 = scmp.ne.s32.totalorder %s119, %s121
      %p125 = scmp.eq.s32.totalorder %s22, 0
      %p126 = por %p124, %p125
      %p127 = scmp.ne.s32.totalorder %s119, %s121
      %p128 = scmp.eq.s32.totalorder %s27, 1
      %p129 = por %p127, %p128
      %p130 = scmp.ne.s32.totalorder %s121, %s122
      %p131 = scmp.eq.s32.totalorder %s27, 0
      %p132 = por %p130, %p131
      %p133 = scmp.ne.s32.totalorder %s121, %s122
      %p134 = scmp.eq.s32.totalorder %s28, 1
      %p135 = por %p133, %p134
      %p137 = scmp.ne.s32.totalorder %s122, %s136
      %p138 = scmp.eq.s32.totalorder %s28, 0
      %p139 = por %p137, %p138
      %s141 = sadd.s32 %s140, 1
      %p144 = scmp.eq.s32.totalorder %s22, 1
      %p145 = scmp.ne.s32.totalorder %s140, %s142
      %p146 = scmp.eq.s32.totalorder %s22, 0
      %p147 = por %p145, %p146
      %p148 = scmp.ne.s32.totalorder %s140, %s142
      %p149 = scmp.eq.s32.totalorder %s27, 1
      %p150 = por %p148, %p149
      %p151 = scmp.ne.s32.totalorder %s142, %s143
      %p152 = scmp.eq.s32.totalorder %s27, 0
      %p153 = por %p151, %p152
      %p154 = scmp.ne.s32.totalorder %s142, %s143
      %p155 = scmp.eq.s32.totalorder %s28, 1
      %p156 = por %p154, %p155
      %p158 = scmp.ne.s32.totalorder %s143, %s157
      %p159 = scmp.eq.s32.totalorder %s28, 0
      %p160 = por %p158, %p159
      %s162 = sadd.s32 %s161, 1
      %p165 = scmp.eq.s32.totalorder %s22, 1
      %p166 = scmp.ne.s32.totalorder %s161, %s163
      %p167 = scmp.eq.s32.totalorder %s22, 0
      %p168 = por %p166, %p167
      %p169 = scmp.ne.s32.totalorder %s161, %s163
      %p170 = scmp.eq.s32.totalorder %s27, 1
      %p171 = por %p169, %p170
      %p172 = scmp.ne.s32.totalorder %s163, %s164
      %p173 = scmp.eq.s32.totalorder %s27, 0
      %p174 = por %p172, %p173
      %p175 = scmp.ne.s32.totalorder %s163, %s164
      %p176 = scmp.eq.s32.totalorder %s28, 1
      %p177 = por %p175, %p176
      %p179 = scmp.ne.s32.totalorder %s164, %s178
      %p180 = scmp.eq.s32.totalorder %s28, 0
      %p181 = por %p179, %p180
      %s183 = sadd.s32 %s182, 1
      %p186 = scmp.eq.s32.totalorder %s22, 1
      %p187 = scmp.ne.s32.totalorder %s182, %s184
      %p188 = scmp.eq.s32.totalorder %s22, 0
      %p189 = por %p187, %p188
      %p190 = scmp.ne.s32.totalorder %s182, %s184
      %p191 = scmp.eq.s32.totalorder %s27, 1
      %p192 = por %p190, %p191
      %p193 = scmp.ne.s32.totalorder %s184, %s185
      %p194 = scmp.eq.s32.totalorder %s27, 0
      %p195 = por %p193, %p194
      %p196 = scmp.ne.s32.totalorder %s184, %s185
      %p197 = scmp.eq.s32.totalorder %s28, 1
      %p198 = por %p196, %p197
      %p200 = scmp.ne.s32.totalorder %s185, %s199
      %p201 = scmp.eq.s32.totalorder %s28, 0
      %p202 = por %p200, %p201
      %s204 = sadd.s32 %s203, 1
      %p207 = scmp.eq.s32.totalorder %s22, 1
      %p208 = scmp.ne.s32.totalorder %s203, %s205
      %p209 = scmp.eq.s32.totalorder %s22, 0
      %p210 = por %p208, %p209
      %p211 = scmp.ne.s32.totalorder %s203, %s205
      %p212 = scmp.eq.s32.totalorder %s27, 1
      %p213 = por %p211, %p212
      %p214 = scmp.ne.s32.totalorder %s205, %s206
      %p215 = scmp.eq.s32.totalorder %s27, 0
      %p216 = por %p214, %p215
      %p217 = scmp.ne.s32.totalorder %s205, %s206
      %p218 = scmp.eq.s32.totalorder %s28, 1
      %p219 = por %p217, %p218
      %p221 = scmp.ne.s32.totalorder %s206, %s220
      %p222 = scmp.eq.s32.totalorder %s28, 0
      %p223 = por %p221, %p222
      %s225 = sadd.s32 %s224, 1
      %p228 = scmp.eq.s32.totalorder %s22, 1
      %p229 = scmp.ne.s32.totalorder %s224, %s226
      %p230 = scmp.eq.s32.totalorder %s22, 0
      %p231 = por %p229, %p230
      %p232 = scmp.ne.s32.totalorder %s224, %s226
      %p233 = scmp.eq.s32.totalorder %s27, 1
      %p234 = por %p232, %p233
      %p235 = scmp.ne.s32.totalorder %s226, %s227
      %p236 = scmp.eq.s32.totalorder %s27, 0
      %p237 = por %p235, %p236
      %p238 = scmp.ne.s32.totalorder %s226, %s227
      %p239 = scmp.eq.s32.totalorder %s28, 1
      %p240 = por %p238, %p239
      %p242 = scmp.ne.s32.totalorder %s227, %s241
      %p243 = scmp.eq.s32.totalorder %s28, 0
      %p244 = por %p242, %p243
      %s246 = sadd.s32 %s245, 1
      %p249 = scmp.eq.s32.totalorder %s22, 1
      %p250 = scmp.ne.s32.totalorder %s245, %s247
      %p251 = scmp.eq.s32.totalorder %s22, 0
      %p252 = por %p250, %p251
      %p253 = scmp.ne.s32.totalorder %s245, %s247
      %p254 = scmp.eq.s32.totalorder %s27, 1
      %p255 = por %p253, %p254
      %p256 = scmp.ne.s32.totalorder %s247, %s248
      %p257 = scmp.eq.s32.totalorder %s27, 0
      %p258 = por %p256, %p257
      %p259 = scmp.ne.s32.totalorder %s247, %s248
      %p260 = scmp.eq.s32.totalorder %s28, 1
      %p261 = por %p259, %p260
      %p263 = scmp.ne.s32.totalorder %s248, %s262
      %p264 = scmp.eq.s32.totalorder %s28, 0
      %p265 = por %p263, %p264
      %s267 = sadd.s32 %s266, 1
      %p270 = scmp.eq.s32.totalorder %s22, 1
      %p271 = scmp.ne.s32.totalorder %s266, %s268
      %p272 = scmp.eq.s32.totalorder %s22, 0
      %p273 = por %p271, %p272
      %p274 = scmp.ne.s32.totalorder %s266, %s268
      %p275 = scmp.eq.s32.totalorder %s27, 1
      %p276 = por %p274, %p275
      %p277 = scmp.ne.s32.totalorder %s268, %s269
      %p278 = scmp.eq.s32.totalorder %s27, 0
      %p279 = por %p277, %p278
      %p280 = scmp.ne.s32.totalorder %s268, %s269
      %p281 = scmp.eq.s32.totalorder %s28, 1
      %p282 = por %p280, %p281
      %p284 = scmp.ne.s32.totalorder %s269, %s283
      %p285 = scmp.eq.s32.totalorder %s28, 0
      %p286 = por %p284, %p285
      %s288 = sadd.s32 %s287, 1
      %p291 = scmp.eq.s32.totalorder %s22, 1
      %p292 = scmp.ne.s32.totalorder %s287, %s289
      %p293 = scmp.eq.s32.totalorder %s22, 0
      %p294 = por %p292, %p293
      %p295 = scmp.ne.s32.totalorder %s287, %s289
      %p296 = scmp.eq.s32.totalorder %s27, 1
      %p297 = por %p295, %p296
      %p298 = scmp.ne.s32.totalorder %s289, %s290
      %p299 = scmp.eq.s32.totalorder %s27, 0
      %p300 = por %p298, %p299
      %p301 = scmp.ne.s32.totalorder %s289, %s290
      %p302 = scmp.eq.s32.totalorder %s28, 1
      %p303 = por %p301, %p302
      %p305 = scmp.ne.s32.totalorder %s290, %s304
      %p306 = scmp.eq.s32.totalorder %s28, 0
      %p307 = por %p305, %p306
      %s308 = ssub.s32 %s22, %s29
      %p309 = scmp.eq.s32.totalorder %s308, 0
      %s311 = sadd.s32 %s310, 1
      %s312 = scalar_select %p309, %s310, %s311
      %p315 = pneg %p309
      %p316 = scmp.eq.s32.totalorder %s22, 1
      %p317 = por %p315, %p316
      %p318 = scmp.ne.s32.totalorder %s310, %s313
      %p319 = scmp.eq.s32.totalorder %s22, 0
      %p320 = por %p318, %p319
      %p321 = scmp.ne.s32.totalorder %s310, %s313
      %p322 = scmp.eq.s32.totalorder %s27, 1
      %p323 = por %p321, %p322
      %p324 = scmp.ne.s32.totalorder %s313, %s314
      %p325 = scmp.eq.s32.totalorder %s27, 0
      %p326 = por %p324, %p325
      %p327 = scmp.ne.s32.totalorder %s313, %s314
      %p328 = scmp.eq.s32.totalorder %s28, 1
      %p329 = por %p327, %p328
      %p331 = scmp.ne.s32.totalorder %s314, %s330
      %p332 = scmp.eq.s32.totalorder %s28, 0
      %p333 = por %p331, %p332
      %p334 = scmp.le.s32.totalorder 1, %s22
      %p335 = scmp.lt.s32.totalorder %s22, 3
      %p336 = pnand %p334, %p335
      %p337 = pneg %p336
      // Predicated region
      $region9: #{tpu_custom_call.1} parent=5 // pred_check
        _
      $region10: #{tpu_custom_call.1} parent=5 // pred_check_branch
        %339 = sbr.rel (%p336) target = $region12
      $region11: #{tpu_custom_call.1} parent=5 // pred_region
        %s340 = ssub.s32 %s22, 1
        // Predicated region
        $region13: #{tpu_custom_call.1} parent=11 // pred_check
          %p341 = pneg %p69
        $region14: #{tpu_custom_call.1} parent=11 // pred_check_branch
          %343 = sbr.rel (%p341) target = $region16
        $region15: #{tpu_custom_call.1} parent=11 // pred_region
          _
        $region16: #{tpu_custom_call.1} parent=11 // pred_fallthru
          _
        // Predicated region
        $region17: #{tpu_custom_call.1} parent=11 // pred_check
          %p344 = pneg %p90
        $region18: #{tpu_custom_call.1} parent=11 // pred_check_branch
          %346 = sbr.rel (%p344) target = $region20
        $region19: #{tpu_custom_call.1} parent=11 // pred_region
          _
        $region20: #{tpu_custom_call.1} parent=11 // pred_fallthru
          _
        // Predicated region
        $region21: #{tpu_custom_call.1} parent=11 // pred_check
          %p347 = pneg %p111
        $region22: #{tpu_custom_call.1} parent=11 // pred_check_branch
          %349 = sbr.rel (%p347) target = $region24
        $region23: #{tpu_custom_call.1} parent=11 // pred_region
          _
        $region24: #{tpu_custom_call.1} parent=11 // pred_fallthru
          _
        // Predicated region
        $region25: #{tpu_custom_call.1} parent=11 // pred_check
          %p350 = pneg %p132
        $region26: #{tpu_custom_call.1} parent=11 // pred_check_branch
          %352 = sbr.rel (%p350) target = $region28
        $region27: #{tpu_custom_call.1} parent=11 // pred_region
          _
        $region28: #{tpu_custom_call.1} parent=11 // pred_fallthru
          _
        // Predicated region
        $region29: #{tpu_custom_call.1} parent=11 // pred_check
          %p353 = pneg %p153
        $region30: #{tpu_custom_call.1} parent=11 // pred_check_branch
          %355 = sbr.rel (%p353) target = $region32
        $region31: #{tpu_custom_call.1} parent=11 // pred_region
          _
        $region32: #{tpu_custom_call.1} parent=11 // pred_fallthru
          _
        // Predicated region
        $region33: #{tpu_custom_call.1} parent=11 // pred_check
          %p356 = pneg %p174
        $region34: #{tpu_custom_call.1} parent=11 // pred_check_branch
          %358 = sbr.rel (%p356) target = $region36
        $region35: #{tpu_custom_call.1} parent=11 // pred_region
          _
        $region36: #{tpu_custom_call.1} parent=11 // pred_fallthru
          _
        // Predicated region
        $region37: #{tpu_custom_call.1} parent=11 // pred_check
          %p359 = pneg %p195
        $region38: #{tpu_custom_call.1} parent=11 // pred_check_branch
          %361 = sbr.rel (%p359) target = $region40
        $region39: #{tpu_custom_call.1} parent=11 // pred_region
          _
        $region40: #{tpu_custom_call.1} parent=11 // pred_fallthru
          _
        // Predicated region
        $region41: #{tpu_custom_call.1} parent=11 // pred_check
          %p362 = pneg %p216
        $region42: #{tpu_custom_call.1} parent=11 // pred_check_branch
          %364 = sbr.rel (%p362) target = $region44
        $region43: #{tpu_custom_call.1} parent=11 // pred_region
          _
        $region44: #{tpu_custom_call.1} parent=11 // pred_fallthru
          _
        // Predicated region
        $region45: #{tpu_custom_call.1} parent=11 // pred_check
          %p365 = pneg %p237
        $region46: #{tpu_custom_call.1} parent=11 // pred_check_branch
          %367 = sbr.rel (%p365) target = $region48
        $region47: #{tpu_custom_call.1} parent=11 // pred_region
          _
        $region48: #{tpu_custom_call.1} parent=11 // pred_fallthru
          _
        // Predicated region
        $region49: #{tpu_custom_call.1} parent=11 // pred_check
          %p368 = pneg %p258
        $region50: #{tpu_custom_call.1} parent=11 // pred_check_branch
          %370 = sbr.rel (%p368) target = $region52
        $region51: #{tpu_custom_call.1} parent=11 // pred_region
          _
        $region52: #{tpu_custom_call.1} parent=11 // pred_fallthru
          _
        // Predicated region
        $region53: #{tpu_custom_call.1} parent=11 // pred_check
          %p371 = pneg %p279
        $region54: #{tpu_custom_call.1} parent=11 // pred_check_branch
          %373 = sbr.rel (%p371) target = $region56
        $region55: #{tpu_custom_call.1} parent=11 // pred_region
          _
        $region56: #{tpu_custom_call.1} parent=11 // pred_fallthru
          _
        // Predicated region
        $region57: #{tpu_custom_call.1} parent=11 // pred_check
          %p374 = pneg %p300
        $region58: #{tpu_custom_call.1} parent=11 // pred_check_branch
          %376 = sbr.rel (%p374) target = $region60
        $region59: #{tpu_custom_call.1} parent=11 // pred_region
          _
        $region60: #{tpu_custom_call.1} parent=11 // pred_fallthru
          _
      $region12: #{tpu_custom_call.1} parent=5 // pred_fallthru
        _
      %p377 = scmp.lt.s32.totalorder %s22, 2
      // Predicated region
      $region61: #{tpu_custom_call.1} parent=5 // pred_check
        %p378 = pneg %p377
      $region62: #{tpu_custom_call.1} parent=5 // pred_check_branch
        %380 = sbr.rel (%p378) target = $region64
      $region63: #{tpu_custom_call.1} parent=5 // pred_region
        // Predicated region
        $region65: #{tpu_custom_call.1} parent=63 // pred_check
          %p381 = pneg %p42
        $region66: #{tpu_custom_call.1} parent=63 // pred_check_branch
          %383 = sbr.rel (%p381) target = $region68
        $region67: #{tpu_custom_call.1} parent=63 // pred_region
          %s384 = smul.u32 16, %s22
          %p385 = scmp.lt.s32.totalorder %s384, 31
          %s386 = scalar_select %p385, %s384, 31
          %s387 = smul.addr %s386, 8
          %s388 = scalar_lea.vmem %s0, %s387
          %s389 = smul.u32 16, %s22
        $region68: #{tpu_custom_call.1} parent=63 // pred_fallthru
          _
      $region64: #{tpu_custom_call.1} parent=5 // pred_fallthru
        _
      %p390 = scmp.le.s32.totalorder 1, %s22
      %p391 = scmp.lt.s32.totalorder %s22, 3
      %p392 = pnand %p390, %p391
      %p393 = pneg %p392
      // Predicated region
      $region69: #{tpu_custom_call.1} parent=5 // pred_check
        _
      $region70: #{tpu_custom_call.1} parent=5 // pred_check_branch
        %395 = sbr.rel (%p392) target = $region72
      $region71: #{tpu_custom_call.1} parent=5 // pred_region
        %s396 = ssub.s32 %s22, 1
        %s397 = smul.u32 16, %s27
        %p398 = scmp.lt.s32.totalorder %s397, 31
        %s399 = scalar_select %p398, %s397, 31
        %s400 = smul.addr %s399, 8
        %s401 = scalar_lea.vmem %s0, %s400
        %p402 = pneg %p48
        %p403 = pneg %p45
        %p404 = pneg %p69
        %p405 = pneg %p66
        %p406 = pneg %p90
        %p407 = pneg %p87
        %p408 = pneg %p111
        %p409 = pneg %p108
        %p410 = pneg %p132
        %p411 = pneg %p129
        %p412 = pneg %p153
        %p413 = pneg %p150
        %p414 = pneg %p174
        %p415 = pneg %p171
        %p416 = pneg %p195
        %p417 = pneg %p192
        %p418 = pneg %p216
        %p419 = pneg %p213
        %p420 = pneg %p237
        %p421 = pneg %p234
        %p422 = pneg %p258
        %p423 = pneg %p255
        %p424 = pneg %p279
        %p425 = pneg %p276
        %p426 = pneg %p300
        %p427 = pneg %p297
        %p428 = pneg %p326
        %p429 = pneg %p323
        %s430 = sand.u32 %s313, 1
        %s431 = scalar_lea.sflag [#allocation3], %s430
        %s432 = sand.u32 %s313, 1
        %s433 = smul.addr %s432, 128
        %s434 = scalar_lea.vmem [#allocation2], %s433
        %s435 = smul.u32 16, %s27
        %p436 = scmp.lt.s32.totalorder %s435, 31
        %s437 = scalar_select %p436, %s435, 31
        %s438 = smul.addr %s437, 8
        %s439 = scalar_lea.vmem %s0, %s438
        %s440 = smul.u32 16, %s27
        %s441 = smul.u32 16, %s27
        %v443 = vld [vmem:[%s439] sm:$0xff]
        %v444 = vld [vmem:[%s439 + $0x8] sm:$0xff]
        %v445 = vld [vmem:[%s439 + $0x10] sm:$0xff]
        %v446 = vld [vmem:[%s439 + $0x18] sm:$0xff]
        %v447 = vld [vmem:[%s439 + $0x20] sm:$0xff]
        %v448 = vld [vmem:[%s439 + $0x28] sm:$0xff]
        %v449 = vld [vmem:[%s439 + $0x30] sm:$0xff]
        %v450 = vld [vmem:[%s439 + $0x38] sm:$0xff]
        %v451 = vld [vmem:[%s439 + $0x40] sm:$0xff]
        %v452 = vld [vmem:[%s439 + $0x48] sm:$0xff]
        %v453 = vld [vmem:[%s439 + $0x50] sm:$0xff]
        %v454 = vld [vmem:[%s439 + $0x58] sm:$0xff]
        %v455 = vld [vmem:[%s439 + $0x60] sm:$0xff]
        %v456 = vld [vmem:[%s439 + $0x68] sm:$0xff]
        %v457 = vld [vmem:[%s439 + $0x70] sm:$0xff]
        %v458 = vld [vmem:[%s439 + $0x78] sm:$0xff]
        %vm459 = vcmask 130048
        %v460 = vsel %vm459, %v443, 0.0
        %461 = vadd.xlane.f32.xlu0 %v460
        %v462 = vpop.xlane.xlu0 %461
        %v463 = vsel %vm459, %v444, 0.0
        %464 = vadd.xlane.f32.xlu0 %v463
        %v465 = vpop.xlane.xlu0 %464
        %v466 = vsel %vm459, %v445, 0.0
        %467 = vadd.xlane.f32.xlu0 %v466
        %v468 = vpop.xlane.xlu0 %467
        %v469 = vsel %vm459, %v446, 0.0
        %470 = vadd.xlane.f32.xlu0 %v469
        %v471 = vpop.xlane.xlu0 %470
        %v472 = vsel %vm459, %v447, 0.0
        %473 = vadd.xlane.f32.xlu0 %v472
        %v474 = vpop.xlane.xlu0 %473
        %v475 = vsel %vm459, %v448, 0.0
        %476 = vadd.xlane.f32.xlu0 %v475
        %v477 = vpop.xlane.xlu0 %476
        %v478 = vsel %vm459, %v449, 0.0
        %479 = vadd.xlane.f32.xlu0 %v478
        %v480 = vpop.xlane.xlu0 %479
        %v481 = vsel %vm459, %v450, 0.0
        %482 = vadd.xlane.f32.xlu0 %v481
        %v483 = vpop.xlane.xlu0 %482
        %v484 = vsel %vm459, %v451, 0.0
        %485 = vadd.xlane.f32.xlu0 %v484
        %v486 = vpop.xlane.xlu0 %485
        %v487 = vsel %vm459, %v452, 0.0
        %488 = vadd.xlane.f32.xlu0 %v487
        %v489 = vpop.xlane.xlu0 %488
        %v490 = vsel %vm459, %v453, 0.0
        %491 = vadd.xlane.f32.xlu0 %v490
        %v492 = vpop.xlane.xlu0 %491
        %v493 = vsel %vm459, %v454, 0.0
        %494 = vadd.xlane.f32.xlu0 %v493
        %v495 = vpop.xlane.xlu0 %494
        %v496 = vsel %vm459, %v455, 0.0
        %497 = vadd.xlane.f32.xlu0 %v496
        %v498 = vpop.xlane.xlu0 %497
        %v499 = vsel %vm459, %v456, 0.0
        %500 = vadd.xlane.f32.xlu0 %v499
        %v501 = vpop.xlane.xlu0 %500
        %v502 = vsel %vm459, %v457, 0.0
        %503 = vadd.xlane.f32.xlu0 %v502
        %v504 = vpop.xlane.xlu0 %503
        %v505 = vsel %vm459, %v458, 0.0
        %506 = vadd.xlane.f32.xlu0 %v505
        %v507 = vpop.xlane.xlu0 %506
        %v508 = vrcp.pop 16.0
        %v509 = vmul.f32 %v462, %v508
        %v510 = vmul.f32 %v465, %v508
        %v511 = vmul.f32 %v468, %v508
        %v512 = vmul.f32 %v471, %v508
        %v513 = vmul.f32 %v474, %v508
        %v514 = vmul.f32 %v477, %v508
        %v515 = vmul.f32 %v480, %v508
        %v516 = vmul.f32 %v483, %v508
        %v517 = vmul.f32 %v486, %v508
        %v518 = vmul.f32 %v489, %v508
        %v519 = vmul.f32 %v492, %v508
        %v520 = vmul.f32 %v495, %v508
        %v521 = vmul.f32 %v498, %v508
        %v522 = vmul.f32 %v501, %v508
        %v523 = vmul.f32 %v504, %v508
        %v524 = vmul.f32 %v507, %v508
        %v525 = vmul.f32 %v443, %v443
        %v526 = vmul.f32 %v444, %v444
        %v527 = vmul.f32 %v445, %v445
        %v528 = vmul.f32 %v446, %v446
        %v529 = vmul.f32 %v447, %v447
        %v530 = vmul.f32 %v448, %v448
        %v531 = vmul.f32 %v449, %v449
        %v532 = vmul.f32 %v450, %v450
        %v533 = vmul.f32 %v451, %v451
        %v534 = vmul.f32 %v452, %v452
        %v535 = vmul.f32 %v453, %v453
        %v536 = vmul.f32 %v454, %v454
        %v537 = vmul.f32 %v455, %v455
        %v538 = vmul.f32 %v456, %v456
        %v539 = vmul.f32 %v457, %v457
        %v540 = vmul.f32 %v458, %v458
        %v541 = vsel %vm459, %v525, 0.0
        %542 = vadd.xlane.f32.xlu0 %v541
        %v543 = vpop.xlane.xlu0 %542
        %v544 = vsel %vm459, %v526, 0.0
        %545 = vadd.xlane.f32.xlu0 %v544
        %v546 = vpop.xlane.xlu0 %545
        %v547 = vsel %vm459, %v527, 0.0
        %548 = vadd.xlane.f32.xlu0 %v547
        %v549 = vpop.xlane.xlu0 %548
        %v550 = vsel %vm459, %v528, 0.0
        %551 = vadd.xlane.f32.xlu0 %v550
        %v552 = vpop.xlane.xlu0 %551
        %v553 = vsel %vm459, %v529, 0.0
        %554 = vadd.xlane.f32.xlu0 %v553
        %v555 = vpop.xlane.xlu0 %554
        %v556 = vsel %vm459, %v530, 0.0
        %557 = vadd.xlane.f32.xlu0 %v556
        %v558 = vpop.xlane.xlu0 %557
        %v559 = vsel %vm459, %v531, 0.0
        %560 = vadd.xlane.f32.xlu0 %v559
        %v561 = vpop.xlane.xlu0 %560
        %v562 = vsel %vm459, %v532, 0.0
        %563 = vadd.xlane.f32.xlu0 %v562
        %v564 = vpop.xlane.xlu0 %563
        %v565 = vsel %vm459, %v533, 0.0
        %566 = vadd.xlane.f32.xlu0 %v565
        %v567 = vpop.xlane.xlu0 %566
        %v568 = vsel %vm459, %v534, 0.0
        %569 = vadd.xlane.f32.xlu0 %v568
        %v570 = vpop.xlane.xlu0 %569
        %v571 = vsel %vm459, %v535, 0.0
        %572 = vadd.xlane.f32.xlu0 %v571
        %v573 = vpop.xlane.xlu0 %572
        %v574 = vsel %vm459, %v536, 0.0
        %575 = vadd.xlane.f32.xlu0 %v574
        %v576 = vpop.xlane.xlu0 %575
        %v577 = vsel %vm459, %v537, 0.0
        %578 = vadd.xlane.f32.xlu0 %v577
        %v579 = vpop.xlane.xlu0 %578
        %v580 = vsel %vm459, %v538, 0.0
        %581 = vadd.xlane.f32.xlu0 %v580
        %v582 = vpop.xlane.xlu0 %581
        %v583 = vsel %vm459, %v539, 0.0
        %584 = vadd.xlane.f32.xlu0 %v583
        %v585 = vpop.xlane.xlu0 %584
        %v586 = vsel %vm459, %v540, 0.0
        %587 = vadd.xlane.f32.xlu0 %v586
        %v588 = vpop.xlane.xlu0 %587
        %v589 = vmul.f32 %v543, %v508
        %v590 = vmul.f32 %v546, %v508
        %v591 = vmul.f32 %v549, %v508
        %v592 = vmul.f32 %v552, %v508
        %v593 = vmul.f32 %v555, %v508
        %v594 = vmul.f32 %v558, %v508
        %v595 = vmul.f32 %v561, %v508
        %v596 = vmul.f32 %v564, %v508
        %v597 = vmul.f32 %v567, %v508
        %v598 = vmul.f32 %v570, %v508
        %v599 = vmul.f32 %v573, %v508
        %v600 = vmul.f32 %v576, %v508
        %v601 = vmul.f32 %v579, %v508
        %v602 = vmul.f32 %v582, %v508
        %v603 = vmul.f32 %v585, %v508
        %v604 = vmul.f32 %v588, %v508
        %v605 = vmul.f32 %v509, %v509
        %v606 = vmul.f32 %v510, %v510
        %v607 = vmul.f32 %v511, %v511
        %v608 = vmul.f32 %v512, %v512
        %v609 = vmul.f32 %v513, %v513
        %v610 = vmul.f32 %v514, %v514
        %v611 = vmul.f32 %v515, %v515
        %v612 = vmul.f32 %v516, %v516
        %v613 = vmul.f32 %v517, %v517
        %v614 = vmul.f32 %v518, %v518
        %v615 = vmul.f32 %v519, %v519
        %v616 = vmul.f32 %v520, %v520
        %v617 = vmul.f32 %v521, %v521
        %v618 = vmul.f32 %v522, %v522
        %v619 = vmul.f32 %v523, %v523
        %v620 = vmul.f32 %v524, %v524
        %v621 = vsub.f32 %v589, %v605
        %v622 = vsub.f32 %v590, %v606
        %v623 = vsub.f32 %v591, %v607
        %v624 = vsub.f32 %v592, %v608
        %v625 = vsub.f32 %v593, %v609
        %v626 = vsub.f32 %v594, %v610
        %v627 = vsub.f32 %v595, %v611
        %v628 = vsub.f32 %v596, %v612
        %v629 = vsub.f32 %v597, %v613
        %v630 = vsub.f32 %v598, %v614
        %v631 = vsub.f32 %v599, %v615
        %v632 = vsub.f32 %v600, %v616
        %v633 = vsub.f32 %v601, %v617
        %v634 = vsub.f32 %v602, %v618
        %v635 = vsub.f32 %v603, %v619
        %v636 = vsub.f32 %v604, %v620
        %v637 = vmax.f32 %v621, 0.0
        %v638 = vmax.f32 %v622, 0.0
        %v639 = vmax.f32 %v623, 0.0
        %v640 = vmax.f32 %v624, 0.0
        %v641 = vmax.f32 %v625, 0.0
        %v642 = vmax.f32 %v626, 0.0
        %v643 = vmax.f32 %v627, 0.0
        %v644 = vmax.f32 %v628, 0.0
        %v645 = vmax.f32 %v629, 0.0
        %v646 = vmax.f32 %v630, 0.0
        %v647 = vmax.f32 %v631, 0.0
        %v648 = vmax.f32 %v632, 0.0
        %v649 = vmax.f32 %v633, 0.0
        %v650 = vmax.f32 %v634, 0.0
        %v651 = vmax.f32 %v635, 0.0
        %v652 = vmax.f32 %v636, 0.0
        %v653 = vsub.f32 %v443, %v509
        %v654 = vsub.f32 %v444, %v510
        %v655 = vsub.f32 %v445, %v511
        %v656 = vsub.f32 %v446, %v512
        %v657 = vsub.f32 %v447, %v513
        %v658 = vsub.f32 %v448, %v514
        %v659 = vsub.f32 %v449, %v515
        %v660 = vsub.f32 %v450, %v516
        %v661 = vsub.f32 %v451, %v517
        %v662 = vsub.f32 %v452, %v518
        %v663 = vsub.f32 %v453, %v519
        %v664 = vsub.f32 %v454, %v520
        %v665 = vsub.f32 %v455, %v521
        %v666 = vsub.f32 %v456, %v522
        %v667 = vsub.f32 %v457, %v523
        %v668 = vsub.f32 %v458, %v524
        %v669 = vadd.f32 %v637, 1e-05
        %v670 = vadd.f32 %v638, 1e-05
        %v671 = vadd.f32 %v639, 1e-05
        %v672 = vadd.f32 %v640, 1e-05
        %v673 = vadd.f32 %v641, 1e-05
        %v674 = vadd.f32 %v642, 1e-05
        %v675 = vadd.f32 %v643, 1e-05
        %v676 = vadd.f32 %v644, 1e-05
        %v677 = vadd.f32 %v645, 1e-05
        %v678 = vadd.f32 %v646, 1e-05
        %v679 = vadd.f32 %v647, 1e-05
        %v680 = vadd.f32 %v648, 1e-05
        %v681 = vadd.f32 %v649, 1e-05
        %v682 = vadd.f32 %v650, 1e-05
        %v683 = vadd.f32 %v651, 1e-05
        %v684 = vadd.f32 %v652, 1e-05
        %v685 = vrsqrt.pop %v669
        %v686 = vrsqrt.pop %v670
        %v687 = vrsqrt.pop %v671
        %v688 = vrsqrt.pop %v672
        %v689 = vrsqrt.pop %v673
        %v690 = vrsqrt.pop %v674
        %v691 = vrsqrt.pop %v675
        %v692 = vrsqrt.pop %v676
        %v693 = vrsqrt.pop %v677
        %v694 = vrsqrt.pop %v678
        %v695 = vrsqrt.pop %v679
        %v696 = vrsqrt.pop %v680
        %v697 = vrsqrt.pop %v681
        %v698 = vrsqrt.pop %v682
        %v699 = vrsqrt.pop %v683
        %v700 = vrsqrt.pop %v684
        %v701 = vmul.f32 %v653, %v685
        %v702 = vmul.f32 %v654, %v686
        %v703 = vmul.f32 %v655, %v687
        %v704 = vmul.f32 %v656, %v688
        %v705 = vmul.f32 %v657, %v689
        %v706 = vmul.f32 %v658, %v690
        %v707 = vmul.f32 %v659, %v691
        %v708 = vmul.f32 %v660, %v692
        %v709 = vmul.f32 %v661, %v693
        %v710 = vmul.f32 %v662, %v694
        %v711 = vmul.f32 %v663, %v695
        %v712 = vmul.f32 %v664, %v696
        %v713 = vmul.f32 %v665, %v697
        %v714 = vmul.f32 %v666, %v698
        %v715 = vmul.f32 %v667, %v699
        %v716 = vmul.f32 %v668, %v700
        %v717 = vld [vmem:[%s1] sm:$0x1]
        %v719 = vlaneseq
        %v720 = vshrl.u32 %v719, 7
        %v721 = vsub.s32 0, %v720
        %v722 = vrot.slane %v717, %v721
        %v724 = vmul.f32 %v701, %v722
        %v725 = vmul.f32 %v702, %v722
        %v726 = vmul.f32 %v703, %v722
        %v727 = vmul.f32 %v704, %v722
        %v728 = vmul.f32 %v705, %v722
        %v729 = vmul.f32 %v706, %v722
        %v730 = vmul.f32 %v707, %v722
        %v731 = vmul.f32 %v708, %v722
        %v732 = vmul.f32 %v709, %v722
        %v733 = vmul.f32 %v710, %v722
        %v734 = vmul.f32 %v711, %v722
        %v735 = vmul.f32 %v712, %v722
        %v736 = vmul.f32 %v713, %v722
        %v737 = vmul.f32 %v714, %v722
        %v738 = vmul.f32 %v715, %v722
        %v739 = vmul.f32 %v716, %v722
        %v740 = vld [vmem:[%s2] sm:$0x1]
        %v742 = vlaneseq
        %v743 = vshrl.u32 %v742, 7
        %v744 = vsub.s32 0, %v743
        %v745 = vrot.slane %v740, %v744
        %v747 = vadd.f32 %v724, %v745
        %v748 = vadd.f32 %v725, %v745
        %v749 = vadd.f32 %v726, %v745
        %v750 = vadd.f32 %v727, %v745
        %v751 = vadd.f32 %v728, %v745
        %v752 = vadd.f32 %v729, %v745
        %v753 = vadd.f32 %v730, %v745
        %v754 = vadd.f32 %v731, %v745
        %v755 = vadd.f32 %v732, %v745
        %v756 = vadd.f32 %v733, %v745
        %v757 = vadd.f32 %v734, %v745
        %v758 = vadd.f32 %v735, %v745
        %v759 = vadd.f32 %v736, %v745
        %v760 = vadd.f32 %v737, %v745
        %v761 = vadd.f32 %v738, %v745
        %v762 = vadd.f32 %v739, %v745
        %779 = vrot.lane.b32.xlu0 %v747, 16
        %v780 = vpop.permute.xlu0 %779
        %781 = vrot.lane.b32.xlu0 %v748, 16
        %v782 = vpop.permute.xlu0 %781
        %783 = vrot.lane.b32.xlu0 %v749, 16
        %v784 = vpop.permute.xlu0 %783
        %785 = vrot.lane.b32.xlu0 %v750, 16
        %v786 = vpop.permute.xlu0 %785
        %787 = vrot.lane.b32.xlu0 %v751, 16
        %v788 = vpop.permute.xlu0 %787
        %789 = vrot.lane.b32.xlu0 %v752, 16
        %v790 = vpop.permute.xlu0 %789
        %791 = vrot.lane.b32.xlu0 %v753, 16
        %v792 = vpop.permute.xlu0 %791
        %793 = vrot.lane.b32.xlu0 %v754, 16
        %v794 = vpop.permute.xlu0 %793
        %795 = vrot.lane.b32.xlu0 %v755, 16
        %v796 = vpop.permute.xlu0 %795
        %797 = vrot.lane.b32.xlu0 %v756, 16
        %v798 = vpop.permute.xlu0 %797
        %799 = vrot.lane.b32.xlu0 %v757, 16
        %v800 = vpop.permute.xlu0 %799
        %801 = vrot.lane.b32.xlu0 %v758, 16
        %v802 = vpop.permute.xlu0 %801
        %803 = vrot.lane.b32.xlu0 %v759, 16
        %v804 = vpop.permute.xlu0 %803
        %805 = vrot.lane.b32.xlu0 %v760, 16
        %v806 = vpop.permute.xlu0 %805
        %807 = vrot.lane.b32.xlu0 %v761, 16
        %v808 = vpop.permute.xlu0 %807
        %809 = vrot.lane.b32.xlu0 %v762, 16
        %v810 = vpop.permute.xlu0 %809
        %827 = vrot.lane.b32.xlu0 %v747, 32
        %v828 = vpop.permute.xlu0 %827
        %829 = vrot.lane.b32.xlu0 %v748, 32
        %v830 = vpop.permute.xlu0 %829
        %831 = vrot.lane.b32.xlu0 %v749, 32
        %v832 = vpop.permute.xlu0 %831
        %833 = vrot.lane.b32.xlu0 %v750, 32
        %v834 = vpop.permute.xlu0 %833
        %835 = vrot.lane.b32.xlu0 %v751, 32
        %v836 = vpop.permute.xlu0 %835
        %837 = vrot.lane.b32.xlu0 %v752, 32
        %v838 = vpop.permute.xlu0 %837
        %839 = vrot.lane.b32.xlu0 %v753, 32
        %v840 = vpop.permute.xlu0 %839
        %841 = vrot.lane.b32.xlu0 %v754, 32
        %v842 = vpop.permute.xlu0 %841
        %843 = vrot.lane.b32.xlu0 %v755, 32
        %v844 = vpop.permute.xlu0 %843
        %845 = vrot.lane.b32.xlu0 %v756, 32
        %v846 = vpop.permute.xlu0 %845
        %847 = vrot.lane.b32.xlu0 %v757, 32
        %v848 = vpop.permute.xlu0 %847
        %849 = vrot.lane.b32.xlu0 %v758, 32
        %v850 = vpop.permute.xlu0 %849
        %851 = vrot.lane.b32.xlu0 %v759, 32
        %v852 = vpop.permute.xlu0 %851
        %853 = vrot.lane.b32.xlu0 %v760, 32
        %v854 = vpop.permute.xlu0 %853
        %855 = vrot.lane.b32.xlu0 %v761, 32
        %v856 = vpop.permute.xlu0 %855
        %857 = vrot.lane.b32.xlu0 %v762, 32
        %v858 = vpop.permute.xlu0 %857
        %875 = vrot.lane.b32.xlu0 %v747, 48
        %v876 = vpop.permute.xlu0 %875
        %877 = vrot.lane.b32.xlu0 %v748, 48
        %v878 = vpop.permute.xlu0 %877
        %879 = vrot.lane.b32.xlu0 %v749, 48
        %v880 = vpop.permute.xlu0 %879
        %881 = vrot.lane.b32.xlu0 %v750, 48
        %v882 = vpop.permute.xlu0 %881
        %883 = vrot.lane.b32.xlu0 %v751, 48
        %v884 = vpop.permute.xlu0 %883
        %885 = vrot.lane.b32.xlu0 %v752, 48
        %v886 = vpop.permute.xlu0 %885
        %887 = vrot.lane.b32.xlu0 %v753, 48
        %v888 = vpop.permute.xlu0 %887
        %889 = vrot.lane.b32.xlu0 %v754, 48
        %v890 = vpop.permute.xlu0 %889
        %891 = vrot.lane.b32.xlu0 %v755, 48
        %v892 = vpop.permute.xlu0 %891
        %893 = vrot.lane.b32.xlu0 %v756, 48
        %v894 = vpop.permute.xlu0 %893
        %895 = vrot.lane.b32.xlu0 %v757, 48
        %v896 = vpop.permute.xlu0 %895
        %897 = vrot.lane.b32.xlu0 %v758, 48
        %v898 = vpop.permute.xlu0 %897
        %899 = vrot.lane.b32.xlu0 %v759, 48
        %v900 = vpop.permute.xlu0 %899
        %901 = vrot.lane.b32.xlu0 %v760, 48
        %v902 = vpop.permute.xlu0 %901
        %903 = vrot.lane.b32.xlu0 %v761, 48
        %v904 = vpop.permute.xlu0 %903
        %905 = vrot.lane.b32.xlu0 %v762, 48
        %v906 = vpop.permute.xlu0 %905
        %923 = vrot.lane.b32.xlu0 %v747, 64
        %v924 = vpop.permute.xlu0 %923
        %925 = vrot.lane.b32.xlu0 %v748, 64
        %v926 = vpop.permute.xlu0 %925
        %927 = vrot.lane.b32.xlu0 %v749, 64
        %v928 = vpop.permute.xlu0 %927
        %929 = vrot.lane.b32.xlu0 %v750, 64
        %v930 = vpop.permute.xlu0 %929
        %931 = vrot.lane.b32.xlu0 %v751, 64
        %v932 = vpop.permute.xlu0 %931
        %933 = vrot.lane.b32.xlu0 %v752, 64
        %v934 = vpop.permute.xlu0 %933
        %935 = vrot.lane.b32.xlu0 %v753, 64
        %v936 = vpop.permute.xlu0 %935
        %937 = vrot.lane.b32.xlu0 %v754, 64
        %v938 = vpop.permute.xlu0 %937
        %939 = vrot.lane.b32.xlu0 %v755, 64
        %v940 = vpop.permute.xlu0 %939
        %941 = vrot.lane.b32.xlu0 %v756, 64
        %v942 = vpop.permute.xlu0 %941
        %943 = vrot.lane.b32.xlu0 %v757, 64
        %v944 = vpop.permute.xlu0 %943
        %945 = vrot.lane.b32.xlu0 %v758, 64
        %v946 = vpop.permute.xlu0 %945
        %947 = vrot.lane.b32.xlu0 %v759, 64
        %v948 = vpop.permute.xlu0 %947
        %949 = vrot.lane.b32.xlu0 %v760, 64
        %v950 = vpop.permute.xlu0 %949
        %951 = vrot.lane.b32.xlu0 %v761, 64
        %v952 = vpop.permute.xlu0 %951
        %953 = vrot.lane.b32.xlu0 %v762, 64
        %v954 = vpop.permute.xlu0 %953
        %971 = vrot.lane.b32.xlu0 %v747, 80
        %v972 = vpop.permute.xlu0 %971
        %973 = vrot.lane.b32.xlu0 %v748, 80
        %v974 = vpop.permute.xlu0 %973
        %975 = vrot.lane.b32.xlu0 %v749, 80
        %v976 = vpop.permute.xlu0 %975
        %977 = vrot.lane.b32.xlu0 %v750, 80
        %v978 = vpop.permute.xlu0 %977
        %979 = vrot.lane.b32.xlu0 %v751, 80
        %v980 = vpop.permute.xlu0 %979
        %981 = vrot.lane.b32.xlu0 %v752, 80
        %v982 = vpop.permute.xlu0 %981
        %983 = vrot.lane.b32.xlu0 %v753, 80
        %v984 = vpop.permute.xlu0 %983
        %985 = vrot.lane.b32.xlu0 %v754, 80
        %v986 = vpop.permute.xlu0 %985
        %987 = vrot.lane.b32.xlu0 %v755, 80
        %v988 = vpop.permute.xlu0 %987
        %989 = vrot.lane.b32.xlu0 %v756, 80
        %v990 = vpop.permute.xlu0 %989
        %991 = vrot.lane.b32.xlu0 %v757, 80
        %v992 = vpop.permute.xlu0 %991
        %993 = vrot.lane.b32.xlu0 %v758, 80
        %v994 = vpop.permute.xlu0 %993
        %995 = vrot.lane.b32.xlu0 %v759, 80
        %v996 = vpop.permute.xlu0 %995
        %997 = vrot.lane.b32.xlu0 %v760, 80
        %v998 = vpop.permute.xlu0 %997
        %999 = vrot.lane.b32.xlu0 %v761, 80
        %v1000 = vpop.permute.xlu0 %999
        %1001 = vrot.lane.b32.xlu0 %v762, 80
        %v1002 = vpop.permute.xlu0 %1001
        %1019 = vrot.lane.b32.xlu0 %v747, 96
        %v1020 = vpop.permute.xlu0 %1019
        %1021 = vrot.lane.b32.xlu0 %v748, 96
        %v1022 = vpop.permute.xlu0 %1021
        %1023 = vrot.lane.b32.xlu0 %v749, 96
        %v1024 = vpop.permute.xlu0 %1023
        %1025 = vrot.lane.b32.xlu0 %v750, 96
        %v1026 = vpop.permute.xlu0 %1025
        %1027 = vrot.lane.b32.xlu0 %v751, 96
        %v1028 = vpop.permute.xlu0 %1027
        %1029 = vrot.lane.b32.xlu0 %v752, 96
        %v1030 = vpop.permute.xlu0 %1029
        %1031 = vrot.lane.b32.xlu0 %v753, 96
        %v1032 = vpop.permute.xlu0 %1031
        %1033 = vrot.lane.b32.xlu0 %v754, 96
        %v1034 = vpop.permute.xlu0 %1033
        %1035 = vrot.lane.b32.xlu0 %v755, 96
        %v1036 = vpop.permute.xlu0 %1035
        %1037 = vrot.lane.b32.xlu0 %v756, 96
        %v1038 = vpop.permute.xlu0 %1037
        %1039 = vrot.lane.b32.xlu0 %v757, 96
        %v1040 = vpop.permute.xlu0 %1039
        %1041 = vrot.lane.b32.xlu0 %v758, 96
        %v1042 = vpop.permute.xlu0 %1041
        %1043 = vrot.lane.b32.xlu0 %v759, 96
        %v1044 = vpop.permute.xlu0 %1043
        %1045 = vrot.lane.b32.xlu0 %v760, 96
        %v1046 = vpop.permute.xlu0 %1045
        %1047 = vrot.lane.b32.xlu0 %v761, 96
        %v1048 = vpop.permute.xlu0 %1047
        %1049 = vrot.lane.b32.xlu0 %v762, 96
        %v1050 = vpop.permute.xlu0 %1049
        %1067 = vrot.lane.b32.xlu0 %v747, 112
        %v1068 = vpop.permute.xlu0 %1067
        %1069 = vrot.lane.b32.xlu0 %v748, 112
        %v1070 = vpop.permute.xlu0 %1069
        %1071 = vrot.lane.b32.xlu0 %v749, 112
        %v1072 = vpop.permute.xlu0 %1071
        %1073 = vrot.lane.b32.xlu0 %v750, 112
        %v1074 = vpop.permute.xlu0 %1073
        %1075 = vrot.lane.b32.xlu0 %v751, 112
        %v1076 = vpop.permute.xlu0 %1075
        %1077 = vrot.lane.b32.xlu0 %v752, 112
        %v1078 = vpop.permute.xlu0 %1077
        %1079 = vrot.lane.b32.xlu0 %v753, 112
        %v1080 = vpop.permute.xlu0 %1079
        %1081 = vrot.lane.b32.xlu0 %v754, 112
        %v1082 = vpop.permute.xlu0 %1081
        %1083 = vrot.lane.b32.xlu0 %v755, 112
        %v1084 = vpop.permute.xlu0 %1083
        %1085 = vrot.lane.b32.xlu0 %v756, 112
        %v1086 = vpop.permute.xlu0 %1085
        %1087 = vrot.lane.b32.xlu0 %v757, 112
        %v1088 = vpop.permute.xlu0 %1087
        %1089 = vrot.lane.b32.xlu0 %v758, 112
        %v1090 = vpop.permute.xlu0 %1089
        %1091 = vrot.lane.b32.xlu0 %v759, 112
        %v1092 = vpop.permute.xlu0 %1091
        %1093 = vrot.lane.b32.xlu0 %v760, 112
        %v1094 = vpop.permute.xlu0 %1093
        %1095 = vrot.lane.b32.xlu0 %v761, 112
        %v1096 = vpop.permute.xlu0 %1095
        %1097 = vrot.lane.b32.xlu0 %v762, 112
        %v1098 = vpop.permute.xlu0 %1097
        %v1115 = vsel %vm459, %v747, %v780
        %v1116 = vsel %vm459, %v748, %v782
        %v1117 = vsel %vm459, %v749, %v784
        %v1118 = vsel %vm459, %v750, %v786
        %v1119 = vsel %vm459, %v751, %v788
        %v1120 = vsel %vm459, %v752, %v790
        %v1121 = vsel %vm459, %v753, %v792
        %v1122 = vsel %vm459, %v754, %v794
        %v1123 = vsel %vm459, %v755, %v796
        %v1124 = vsel %vm459, %v756, %v798
        %v1125 = vsel %vm459, %v757, %v800
        %v1126 = vsel %vm459, %v758, %v802
        %v1127 = vsel %vm459, %v759, %v804
        %v1128 = vsel %vm459, %v760, %v806
        %v1129 = vsel %vm459, %v761, %v808
        %v1130 = vsel %vm459, %v762, %v810
        %vm1131 = vcmask 261120
        %v1132 = vsel %vm1131, %v1115, %v828
        %v1133 = vsel %vm1131, %v1116, %v830
        %v1134 = vsel %vm1131, %v1117, %v832
        %v1135 = vsel %vm1131, %v1118, %v834
        %v1136 = vsel %vm1131, %v1119, %v836
        %v1137 = vsel %vm1131, %v1120, %v838
        %v1138 = vsel %vm1131, %v1121, %v840
        %v1139 = vsel %vm1131, %v1122, %v842
        %v1140 = vsel %vm1131, %v1123, %v844
        %v1141 = vsel %vm1131, %v1124, %v846
        %v1142 = vsel %vm1131, %v1125, %v848
        %v1143 = vsel %vm1131, %v1126, %v850
        %v1144 = vsel %vm1131, %v1127, %v852
        %v1145 = vsel %vm1131, %v1128, %v854
        %v1146 = vsel %vm1131, %v1129, %v856
        %v1147 = vsel %vm1131, %v1130, %v858
        %vm1148 = vcmask 392192
        %v1149 = vsel %vm1148, %v1132, %v876
        %v1150 = vsel %vm1148, %v1133, %v878
        %v1151 = vsel %vm1148, %v1134, %v880
        %v1152 = vsel %vm1148, %v1135, %v882
        %v1153 = vsel %vm1148, %v1136, %v884
        %v1154 = vsel %vm1148, %v1137, %v886
        %v1155 = vsel %vm1148, %v1138, %v888
        %v1156 = vsel %vm1148, %v1139, %v890
        %v1157 = vsel %vm1148, %v1140, %v892
        %v1158 = vsel %vm1148, %v1141, %v894
        %v1159 = vsel %vm1148, %v1142, %v896
        %v1160 = vsel %vm1148, %v1143, %v898
        %v1161 = vsel %vm1148, %v1144, %v900
        %v1162 = vsel %vm1148, %v1145, %v902
        %v1163 = vsel %vm1148, %v1146, %v904
        %v1164 = vsel %vm1148, %v1147, %v906
        %vm1165 = vcmask 523264
        %v1166 = vsel %vm1165, %v1149, %v924
        %v1167 = vsel %vm1165, %v1150, %v926
        %v1168 = vsel %vm1165, %v1151, %v928
        %v1169 = vsel %vm1165, %v1152, %v930
        %v1170 = vsel %vm1165, %v1153, %v932
        %v1171 = vsel %vm1165, %v1154, %v934
        %v1172 = vsel %vm1165, %v1155, %v936
        %v1173 = vsel %vm1165, %v1156, %v938
        %v1174 = vsel %vm1165, %v1157, %v940
        %v1175 = vsel %vm1165, %v1158, %v942
        %v1176 = vsel %vm1165, %v1159, %v944
        %v1177 = vsel %vm1165, %v1160, %v946
        %v1178 = vsel %vm1165, %v1161, %v948
        %v1179 = vsel %vm1165, %v1162, %v950
        %v1180 = vsel %vm1165, %v1163, %v952
        %v1181 = vsel %vm1165, %v1164, %v954
        %vm1182 = vcmask 654336
        %v1183 = vsel %vm1182, %v1166, %v972
        %v1184 = vsel %vm1182, %v1167, %v974
        %v1185 = vsel %vm1182, %v1168, %v976
        %v1186 = vsel %vm1182, %v1169, %v978
        %v1187 = vsel %vm1182, %v1170, %v980
        %v1188 = vsel %vm1182, %v1171, %v982
        %v1189 = vsel %vm1182, %v1172, %v984
        %v1190 = vsel %vm1182, %v1173, %v986
        %v1191 = vsel %vm1182, %v1174, %v988
        %v1192 = vsel %vm1182, %v1175, %v990
        %v1193 = vsel %vm1182, %v1176, %v992
        %v1194 = vsel %vm1182, %v1177, %v994
        %v1195 = vsel %vm1182, %v1178, %v996
        %v1196 = vsel %vm1182, %v1179, %v998
        %v1197 = vsel %vm1182, %v1180, %v1000
        %v1198 = vsel %vm1182, %v1181, %v1002
        %vm1199 = vcmask 785408
        %v1200 = vsel %vm1199, %v1183, %v1020
        %v1201 = vsel %vm1199, %v1184, %v1022
        %v1202 = vsel %vm1199, %v1185, %v1024
        %v1203 = vsel %vm1199, %v1186, %v1026
        %v1204 = vsel %vm1199, %v1187, %v1028
        %v1205 = vsel %vm1199, %v1188, %v1030
        %v1206 = vsel %vm1199, %v1189, %v1032
        %v1207 = vsel %vm1199, %v1190, %v1034
        %v1208 = vsel %vm1199, %v1191, %v1036
        %v1209 = vsel %vm1199, %v1192, %v1038
        %v1210 = vsel %vm1199, %v1193, %v1040
        %v1211 = vsel %vm1199, %v1194, %v1042
        %v1212 = vsel %vm1199, %v1195, %v1044
        %v1213 = vsel %vm1199, %v1196, %v1046
        %v1214 = vsel %vm1199, %v1197, %v1048
        %v1215 = vsel %vm1199, %v1198, %v1050
        %vm1216 = vcmask 916480
        %v1217 = vsel %vm1216, %v1200, %v1068
        %v1218 = vsel %vm1216, %v1201, %v1070
        %v1219 = vsel %vm1216, %v1202, %v1072
        %v1220 = vsel %vm1216, %v1203, %v1074
        %v1221 = vsel %vm1216, %v1204, %v1076
        %v1222 = vsel %vm1216, %v1205, %v1078
        %v1223 = vsel %vm1216, %v1206, %v1080
        %v1224 = vsel %vm1216, %v1207, %v1082
        %v1225 = vsel %vm1216, %v1208, %v1084
        %v1226 = vsel %vm1216, %v1209, %v1086
        %v1227 = vsel %vm1216, %v1210, %v1088
        %v1228 = vsel %vm1216, %v1211, %v1090
        %v1229 = vsel %vm1216, %v1212, %v1092
        %v1230 = vsel %vm1216, %v1213, %v1094
        %v1231 = vsel %vm1216, %v1214, %v1096
        %v1232 = vsel %vm1216, %v1215, %v1098
        %v1233 = vld [vmem:[%s3] sm:$0x1]
        %v1235 = vlaneseq
        %v1236 = vshrl.u32 %v1235, 7
        %v1237 = vsub.s32 0, %v1236
        %v1238 = vrot.slane %v1233, %v1237
        %v1240 = vsub.f32 %v1217, %v1238
        %v1241 = vsub.f32 %v1218, %v1238
        %v1242 = vsub.f32 %v1219, %v1238
        %v1243 = vsub.f32 %v1220, %v1238
        %v1244 = vsub.f32 %v1221, %v1238
        %v1245 = vsub.f32 %v1222, %v1238
        %v1246 = vsub.f32 %v1223, %v1238
        %v1247 = vsub.f32 %v1224, %v1238
        %v1248 = vsub.f32 %v1225, %v1238
        %v1249 = vsub.f32 %v1226, %v1238
        %v1250 = vsub.f32 %v1227, %v1238
        %v1251 = vsub.f32 %v1228, %v1238
        %v1252 = vsub.f32 %v1229, %v1238
        %v1253 = vsub.f32 %v1230, %v1238
        %v1254 = vsub.f32 %v1231, %v1238
        %v1255 = vsub.f32 %v1232, %v1238
        %v1256 = vmax.f32 %v1240, 0.0
        %v1257 = vmax.f32 %v1241, 0.0
        %v1258 = vmax.f32 %v1242, 0.0
        %v1259 = vmax.f32 %v1243, 0.0
        %v1260 = vmax.f32 %v1244, 0.0
        %v1261 = vmax.f32 %v1245, 0.0
        %v1262 = vmax.f32 %v1246, 0.0
        %v1263 = vmax.f32 %v1247, 0.0
        %v1264 = vmax.f32 %v1248, 0.0
        %v1265 = vmax.f32 %v1249, 0.0
        %v1266 = vmax.f32 %v1250, 0.0
        %v1267 = vmax.f32 %v1251, 0.0
        %v1268 = vmax.f32 %v1252, 0.0
        %v1269 = vmax.f32 %v1253, 0.0
        %v1270 = vmax.f32 %v1254, 0.0
        %v1271 = vmax.f32 %v1255, 0.0
        %v1272 = vld [vmem:[%s4] sm:$0x1]
        %v1274 = vlaneseq
        %v1275 = vshrl.u32 %v1274, 7
        %v1276 = vsub.s32 0, %v1275
        %v1277 = vrot.slane %v1272, %v1276
        %v1279 = vsub.f32 %v1277, %v1217
        %v1280 = vsub.f32 %v1277, %v1218
        %v1281 = vsub.f32 %v1277, %v1219
        %v1282 = vsub.f32 %v1277, %v1220
        %v1283 = vsub.f32 %v1277, %v1221
        %v1284 = vsub.f32 %v1277, %v1222
        %v1285 = vsub.f32 %v1277, %v1223
        %v1286 = vsub.f32 %v1277, %v1224
        %v1287 = vsub.f32 %v1277, %v1225
        %v1288 = vsub.f32 %v1277, %v1226
        %v1289 = vsub.f32 %v1277, %v1227
        %v1290 = vsub.f32 %v1277, %v1228
        %v1291 = vsub.f32 %v1277, %v1229
        %v1292 = vsub.f32 %v1277, %v1230
        %v1293 = vsub.f32 %v1277, %v1231
        %v1294 = vsub.f32 %v1277, %v1232
        %v1295 = vmax.f32 %v1279, 0.0
        %v1296 = vmax.f32 %v1280, 0.0
        %v1297 = vmax.f32 %v1281, 0.0
        %v1298 = vmax.f32 %v1282, 0.0
        %v1299 = vmax.f32 %v1283, 0.0
        %v1300 = vmax.f32 %v1284, 0.0
        %v1301 = vmax.f32 %v1285, 0.0
        %v1302 = vmax.f32 %v1286, 0.0
        %v1303 = vmax.f32 %v1287, 0.0
        %v1304 = vmax.f32 %v1288, 0.0
        %v1305 = vmax.f32 %v1289, 0.0
        %v1306 = vmax.f32 %v1290, 0.0
        %v1307 = vmax.f32 %v1291, 0.0
        %v1308 = vmax.f32 %v1292, 0.0
        %v1309 = vmax.f32 %v1293, 0.0
        %v1310 = vmax.f32 %v1294, 0.0
        %v1311 = vmul.f32 %v1256, %v1295
        %v1312 = vmul.f32 %v1257, %v1296
        %v1313 = vmul.f32 %v1258, %v1297
        %v1314 = vmul.f32 %v1259, %v1298
        %v1315 = vmul.f32 %v1260, %v1299
        %v1316 = vmul.f32 %v1261, %v1300
        %v1317 = vmul.f32 %v1262, %v1301
        %v1318 = vmul.f32 %v1263, %v1302
        %v1319 = vmul.f32 %v1264, %v1303
        %v1320 = vmul.f32 %v1265, %v1304
        %v1321 = vmul.f32 %v1266, %v1305
        %v1322 = vmul.f32 %v1267, %v1306
        %v1323 = vmul.f32 %v1268, %v1307
        %v1324 = vmul.f32 %v1269, %v1308
        %v1325 = vmul.f32 %v1270, %v1309
        %v1326 = vmul.f32 %v1271, %v1310
        %v1327 = vmul.f32 %v1311, %v1311
        %v1328 = vmul.f32 %v1312, %v1312
        %v1329 = vmul.f32 %v1313, %v1313
        %v1330 = vmul.f32 %v1314, %v1314
        %v1331 = vmul.f32 %v1315, %v1315
        %v1332 = vmul.f32 %v1316, %v1316
        %v1333 = vmul.f32 %v1317, %v1317
        %v1334 = vmul.f32 %v1318, %v1318
        %v1335 = vmul.f32 %v1319, %v1319
        %v1336 = vmul.f32 %v1320, %v1320
        %v1337 = vmul.f32 %v1321, %v1321
        %v1338 = vmul.f32 %v1322, %v1322
        %v1339 = vmul.f32 %v1323, %v1323
        %v1340 = vmul.f32 %v1324, %v1324
        %v1341 = vmul.f32 %v1325, %v1325
        %v1342 = vmul.f32 %v1326, %v1326
        %v1343 = vpack.c.bf16 %v1328, %v1327
        %v1344 = vpack.c.bf16 %v1330, %v1329
        %v1345 = vpack.c.bf16 %v1332, %v1331
        %v1346 = vpack.c.bf16 %v1334, %v1333
        %v1347 = vpack.c.bf16 %v1336, %v1335
        %v1348 = vpack.c.bf16 %v1338, %v1337
        %v1349 = vpack.c.bf16 %v1340, %v1339
        %v1350 = vpack.c.bf16 %v1342, %v1341
        %v1351 = vld [vmem:[%s5] sm:$0xf]
        %v1352 = vld [vmem:[%s5 + $0x4] sm:$0xf]
        %v1353 = vld [vmem:[%s5 + $0x8] sm:$0xf]
        %v1354 = vld [vmem:[%s5 + $0xc] sm:$0xf]
        %v1355 = vld [vmem:[%s5 + $0x10] sm:$0xf]
        %v1356 = vld [vmem:[%s5 + $0x14] sm:$0xf]
        %v1357 = vld [vmem:[%s5 + $0x18] sm:$0xf]
        %v1358 = vld [vmem:[%s5 + $0x1c] sm:$0xf]
        %v1359 = vld [vmem:[%s5 + $0x20] sm:$0xf]
        %v1360 = vld [vmem:[%s5 + $0x24] sm:$0xf]
        %v1361 = vld [vmem:[%s5 + $0x28] sm:$0xf]
        %v1362 = vld [vmem:[%s5 + $0x2c] sm:$0xf]
        %v1363 = vld [vmem:[%s5 + $0x30] sm:$0xf]
        %v1364 = vld [vmem:[%s5 + $0x34] sm:$0xf]
        %v1365 = vld [vmem:[%s5 + $0x38] sm:$0xf]
        %v1366 = vld [vmem:[%s5 + $0x3c] sm:$0xf]
        %v1367 = vld [vmem:[%s6] sm:$0x1]
        %v1369 = vlaneseq
        %v1370 = vshrl.u32 %v1369, 7
        %v1371 = vsub.s32 0, %v1370
        %v1372 = vrot.slane %v1367, %v1371
        %v1390 = vunpack.c.l.b16 %v1351
        %v1391 = vunpack.c.l.b16 %v1352
        %v1392 = vunpack.c.l.b16 %v1353
        %v1393 = vunpack.c.l.b16 %v1354
        %v1394 = vunpack.c.l.b16 %v1355
        %v1395 = vunpack.c.l.b16 %v1356
        %v1396 = vunpack.c.l.b16 %v1357
        %v1397 = vunpack.c.l.b16 %v1358
        %v1398 = vunpack.c.l.b16 %v1359
        %v1399 = vunpack.c.l.b16 %v1360
        %v1400 = vunpack.c.l.b16 %v1361
        %v1401 = vunpack.c.l.b16 %v1362
        %v1402 = vunpack.c.l.b16 %v1363
        %v1403 = vunpack.c.l.b16 %v1364
        %v1404 = vunpack.c.l.b16 %v1365
        %v1405 = vunpack.c.l.b16 %v1366
        %v1406 = vpack.c.b16 %v1391, %v1390
        %v1407 = vpack.c.b16 %v1393, %v1392
        %v1408 = vpack.c.b16 %v1395, %v1394
        %v1409 = vpack.c.b16 %v1397, %v1396
        %v1410 = vpack.c.b16 %v1399, %v1398
        %v1411 = vpack.c.b16 %v1401, %v1400
        %v1412 = vpack.c.b16 %v1403, %v1402
        %v1413 = vpack.c.b16 %v1405, %v1404
        %1422 = vmatprep.subr.bf16.mxu0 0
        %1423 = vmatpush1.bf16.msra.mxu0 %v1413
        %1424 = vmatprep.subr.bf16.mxu0 0
        %1425 = vmatpush1.bf16.msra.mxu0 %v1412
        %1426 = vmatprep.subr.bf16.mxu0 0
        %1427 = vmatpush1.bf16.msra.mxu0 %v1411
        %1428 = vmatprep.subr.bf16.mxu0 0
        %1429 = vmatpush1.bf16.msra.mxu0 %v1410
        %1430 = vmatprep.subr.bf16.mxu0 0
        %1431 = vmatpush1.bf16.msra.mxu0 %v1409
        %1432 = vmatprep.subr.bf16.mxu0 0
        %1433 = vmatpush1.bf16.msra.mxu0 %v1408
        %1434 = vmatprep.subr.bf16.mxu0 0
        %1435 = vmatpush1.bf16.msra.mxu0 %v1407
        %1436 = vmatprep.subr.bf16.mxu0 0
        %1437 = vmatpush1.bf16.msra.mxu0 %v1406
        %1438 = vmatprep.subr.bf16.mxu0 0
        %1439 = vmatpush2.bf16.msra.mxu0 0
        %1440 = vmatprep.subr.bf16.mxu0 0
        %1441 = vmatpush2.bf16.msra.mxu0 0
        %1442 = vmatprep.subr.bf16.mxu0 0
        %1443 = vmatpush2.bf16.msra.mxu0 0
        %1444 = vmatprep.subr.bf16.mxu0 0
        %1445 = vmatpush2.bf16.msra.mxu0 0
        %1446 = vmatprep.subr.bf16.mxu0 0
        %1447 = vmatpush2.bf16.msra.mxu0 0
        %1448 = vmatprep.subr.bf16.mxu0 0
        %1449 = vmatpush2.bf16.msra.mxu0 0
        %1450 = vmatprep.subr.bf16.mxu0 0
        %1451 = vmatpush2.bf16.msra.mxu0 0
        %1452 = vmatprep.subr.bf16.mxu0 0
        %1453 = vmatpush2.bf16.msra.mxu0 0
        %1454 = vmatprep.mubr.bf16.mxu0 0
        %1455 = vmatmul.mubr.bf16.gmra.mxu0 %v1343
        %v1456 = vpop.f32.mrf.mxu0
        %v1457 = vadd.f32 %v1372, %v1456
        %v1458 = vpop.f32.mrf.mxu0
        %v1459 = vpop.f32.mrf.mxu0
        %v1460 = vadd.f32 %v1372, %v1459
        %v1461 = vpop.f32.mrf.mxu0
        %1462 = vmatprep.mubr.bf16.mxu0 0
        %1463 = vmatmul.mubr.bf16.gmra.mxu0 %v1344
        %v1464 = vpop.f32.mrf.mxu0
        %v1465 = vadd.f32 %v1372, %v1464
        %v1466 = vpop.f32.mrf.mxu0
        %v1467 = vpop.f32.mrf.mxu0
        %v1468 = vadd.f32 %v1372, %v1467
        %v1469 = vpop.f32.mrf.mxu0
        %1470 = vmatprep.mubr.bf16.mxu0 0
        %1471 = vmatmul.mubr.bf16.gmra.mxu0 %v1345
        %v1472 = vpop.f32.mrf.mxu0
        %v1473 = vadd.f32 %v1372, %v1472
        %v1474 = vpop.f32.mrf.mxu0
        %v1475 = vpop.f32.mrf.mxu0
        %v1476 = vadd.f32 %v1372, %v1475
        %v1477 = vpop.f32.mrf.mxu0
        %1478 = vmatprep.mubr.bf16.mxu0 0
        %1479 = vmatmul.mubr.bf16.gmra.mxu0 %v1346
        %v1480 = vpop.f32.mrf.mxu0
        %v1481 = vadd.f32 %v1372, %v1480
        %v1482 = vpop.f32.mrf.mxu0
        %v1483 = vpop.f32.mrf.mxu0
        %v1484 = vadd.f32 %v1372, %v1483
        %v1485 = vpop.f32.mrf.mxu0
        %1486 = vmatprep.mubr.bf16.mxu0 0
        %1487 = vmatmul.mubr.bf16.gmra.mxu0 %v1347
        %v1488 = vpop.f32.mrf.mxu0
        %v1489 = vadd.f32 %v1372, %v1488
        %v1490 = vpop.f32.mrf.mxu0
        %v1491 = vpop.f32.mrf.mxu0
        %v1492 = vadd.f32 %v1372, %v1491
        %v1493 = vpop.f32.mrf.mxu0
        %1494 = vmatprep.mubr.bf16.mxu0 0
        %1495 = vmatmul.mubr.bf16.gmra.mxu0 %v1348
        %v1496 = vpop.f32.mrf.mxu0
        %v1497 = vadd.f32 %v1372, %v1496
        %v1498 = vpop.f32.mrf.mxu0
        %v1499 = vpop.f32.mrf.mxu0
        %v1500 = vadd.f32 %v1372, %v1499
        %v1501 = vpop.f32.mrf.mxu0
        %1502 = vmatprep.mubr.bf16.mxu0 0
        %1503 = vmatmul.mubr.bf16.gmra.mxu0 %v1349
        %v1504 = vpop.f32.mrf.mxu0
        %v1505 = vadd.f32 %v1372, %v1504
        %v1506 = vpop.f32.mrf.mxu0
        %v1507 = vpop.f32.mrf.mxu0
        %v1508 = vadd.f32 %v1372, %v1507
        %v1509 = vpop.f32.mrf.mxu0
        %1510 = vmatprep.mubr.bf16.mxu0 0
        %1511 = vmatmul.mubr.bf16.gmra.mxu0 %v1350
        %v1512 = vpop.f32.mrf.mxu0
        %v1513 = vadd.f32 %v1372, %v1512
        %v1514 = vpop.f32.mrf.mxu0
        %v1515 = vpop.f32.mrf.mxu0
        %v1516 = vadd.f32 %v1372, %v1515
        %v1517 = vpop.f32.mrf.mxu0
        %1518 = vdwg.mxu0
        %v1519 = vsel %vm1131, %v1457, 0.0
        %1520 = vadd.xlane.f32.xlu0 %v1519
        %v1521 = vpop.xlane.xlu0 %1520
        %v1522 = vsel %vm1131, %v1460, 0.0
        %1523 = vadd.xlane.f32.xlu0 %v1522
        %v1524 = vpop.xlane.xlu0 %1523
        %v1525 = vsel %vm1131, %v1465, 0.0
        %1526 = vadd.xlane.f32.xlu0 %v1525
        %v1527 = vpop.xlane.xlu0 %1526
        %v1528 = vsel %vm1131, %v1468, 0.0
        %1529 = vadd.xlane.f32.xlu0 %v1528
        %v1530 = vpop.xlane.xlu0 %1529
        %v1531 = vsel %vm1131, %v1473, 0.0
        %1532 = vadd.xlane.f32.xlu0 %v1531
        %v1533 = vpop.xlane.xlu0 %1532
        %v1534 = vsel %vm1131, %v1476, 0.0
        %1535 = vadd.xlane.f32.xlu0 %v1534
        %v1536 = vpop.xlane.xlu0 %1535
        %v1537 = vsel %vm1131, %v1481, 0.0
        %1538 = vadd.xlane.f32.xlu0 %v1537
        %v1539 = vpop.xlane.xlu0 %1538
        %v1540 = vsel %vm1131, %v1484, 0.0
        %1541 = vadd.xlane.f32.xlu0 %v1540
        %v1542 = vpop.xlane.xlu0 %1541
        %v1543 = vsel %vm1131, %v1489, 0.0
        %1544 = vadd.xlane.f32.xlu0 %v1543
        %v1545 = vpop.xlane.xlu0 %1544
        %v1546 = vsel %vm1131, %v1492, 0.0
        %1547 = vadd.xlane.f32.xlu0 %v1546
        %v1548 = vpop.xlane.xlu0 %1547
        %v1549 = vsel %vm1131, %v1497, 0.0
        %1550 = vadd.xlane.f32.xlu0 %v1549
        %v1551 = vpop.xlane.xlu0 %1550
        %v1552 = vsel %vm1131, %v1500, 0.0
        %1553 = vadd.xlane.f32.xlu0 %v1552
        %v1554 = vpop.xlane.xlu0 %1553
        %v1555 = vsel %vm1131, %v1505, 0.0
        %1556 = vadd.xlane.f32.xlu0 %v1555
        %v1557 = vpop.xlane.xlu0 %1556
        %v1558 = vsel %vm1131, %v1508, 0.0
        %1559 = vadd.xlane.f32.xlu0 %v1558
        %v1560 = vpop.xlane.xlu0 %1559
        %v1561 = vsel %vm1131, %v1513, 0.0
        %1562 = vadd.xlane.f32.xlu0 %v1561
        %v1563 = vpop.xlane.xlu0 %1562
        %v1564 = vsel %vm1131, %v1516, 0.0
        %1565 = vadd.xlane.f32.xlu0 %v1564
        %v1566 = vpop.xlane.xlu0 %1565
        %v1567 = vrcp.pop 32.0
        %v1568 = vmul.f32 %v1521, %v1567
        %v1569 = vmul.f32 %v1524, %v1567
        %v1570 = vmul.f32 %v1527, %v1567
        %v1571 = vmul.f32 %v1530, %v1567
        %v1572 = vmul.f32 %v1533, %v1567
        %v1573 = vmul.f32 %v1536, %v1567
        %v1574 = vmul.f32 %v1539, %v1567
        %v1575 = vmul.f32 %v1542, %v1567
        %v1576 = vmul.f32 %v1545, %v1567
        %v1577 = vmul.f32 %v1548, %v1567
        %v1578 = vmul.f32 %v1551, %v1567
        %v1579 = vmul.f32 %v1554, %v1567
        %v1580 = vmul.f32 %v1557, %v1567
        %v1581 = vmul.f32 %v1560, %v1567
        %v1582 = vmul.f32 %v1563, %v1567
        %v1583 = vmul.f32 %v1566, %v1567
        %v1584 = vmul.f32 %v1457, %v1457
        %v1585 = vmul.f32 %v1460, %v1460
        %v1586 = vmul.f32 %v1465, %v1465
        %v1587 = vmul.f32 %v1468, %v1468
        %v1588 = vmul.f32 %v1473, %v1473
        %v1589 = vmul.f32 %v1476, %v1476
        %v1590 = vmul.f32 %v1481, %v1481
        %v1591 = vmul.f32 %v1484, %v1484
        %v1592 = vmul.f32 %v1489, %v1489
        %v1593 = vmul.f32 %v1492, %v1492
        %v1594 = vmul.f32 %v1497, %v1497
        %v1595 = vmul.f32 %v1500, %v1500
        %v1596 = vmul.f32 %v1505, %v1505
        %v1597 = vmul.f32 %v1508, %v1508
        %v1598 = vmul.f32 %v1513, %v1513
        %v1599 = vmul.f32 %v1516, %v1516
        %v1600 = vsel %vm1131, %v1584, 0.0
        %1601 = vadd.xlane.f32.xlu0 %v1600
        %v1602 = vpop.xlane.xlu0 %1601
        %v1603 = vsel %vm1131, %v1585, 0.0
        %1604 = vadd.xlane.f32.xlu0 %v1603
        %v1605 = vpop.xlane.xlu0 %1604
        %v1606 = vsel %vm1131, %v1586, 0.0
        %1607 = vadd.xlane.f32.xlu0 %v1606
        %v1608 = vpop.xlane.xlu0 %1607
        %v1609 = vsel %vm1131, %v1587, 0.0
        %1610 = vadd.xlane.f32.xlu0 %v1609
        %v1611 = vpop.xlane.xlu0 %1610
        %v1612 = vsel %vm1131, %v1588, 0.0
        %1613 = vadd.xlane.f32.xlu0 %v1612
        %v1614 = vpop.xlane.xlu0 %1613
        %v1615 = vsel %vm1131, %v1589, 0.0
        %1616 = vadd.xlane.f32.xlu0 %v1615
        %v1617 = vpop.xlane.xlu0 %1616
        %v1618 = vsel %vm1131, %v1590, 0.0
        %1619 = vadd.xlane.f32.xlu0 %v1618
        %v1620 = vpop.xlane.xlu0 %1619
        %v1621 = vsel %vm1131, %v1591, 0.0
        %1622 = vadd.xlane.f32.xlu0 %v1621
        %v1623 = vpop.xlane.xlu0 %1622
        %v1624 = vsel %vm1131, %v1592, 0.0
        %1625 = vadd.xlane.f32.xlu0 %v1624
        %v1626 = vpop.xlane.xlu0 %1625
        %v1627 = vsel %vm1131, %v1593, 0.0
        %1628 = vadd.xlane.f32.xlu0 %v1627
        %v1629 = vpop.xlane.xlu0 %1628
        %v1630 = vsel %vm1131, %v1594, 0.0
        %1631 = vadd.xlane.f32.xlu0 %v1630
        %v1632 = vpop.xlane.xlu0 %1631
        %v1633 = vsel %vm1131, %v1595, 0.0
        %1634 = vadd.xlane.f32.xlu0 %v1633
        %v1635 = vpop.xlane.xlu0 %1634
        %v1636 = vsel %vm1131, %v1596, 0.0
        %1637 = vadd.xlane.f32.xlu0 %v1636
        %v1638 = vpop.xlane.xlu0 %1637
        %v1639 = vsel %vm1131, %v1597, 0.0
        %1640 = vadd.xlane.f32.xlu0 %v1639
        %v1641 = vpop.xlane.xlu0 %1640
        %v1642 = vsel %vm1131, %v1598, 0.0
        %1643 = vadd.xlane.f32.xlu0 %v1642
        %v1644 = vpop.xlane.xlu0 %1643
        %v1645 = vsel %vm1131, %v1599, 0.0
        %1646 = vadd.xlane.f32.xlu0 %v1645
        %v1647 = vpop.xlane.xlu0 %1646
        %v1648 = vmul.f32 %v1602, %v1567
        %v1649 = vmul.f32 %v1605, %v1567
        %v1650 = vmul.f32 %v1608, %v1567
        %v1651 = vmul.f32 %v1611, %v1567
        %v1652 = vmul.f32 %v1614, %v1567
        %v1653 = vmul.f32 %v1617, %v1567
        %v1654 = vmul.f32 %v1620, %v1567
        %v1655 = vmul.f32 %v1623, %v1567
        %v1656 = vmul.f32 %v1626, %v1567
        %v1657 = vmul.f32 %v1629, %v1567
        %v1658 = vmul.f32 %v1632, %v1567
        %v1659 = vmul.f32 %v1635, %v1567
        %v1660 = vmul.f32 %v1638, %v1567
        %v1661 = vmul.f32 %v1641, %v1567
        %v1662 = vmul.f32 %v1644, %v1567
        %v1663 = vmul.f32 %v1647, %v1567
        %v1664 = vmul.f32 %v1568, %v1568
        %v1665 = vmul.f32 %v1569, %v1569
        %v1666 = vmul.f32 %v1570, %v1570
        %v1667 = vmul.f32 %v1571, %v1571
        %v1668 = vmul.f32 %v1572, %v1572
        %v1669 = vmul.f32 %v1573, %v1573
        %v1670 = vmul.f32 %v1574, %v1574
        %v1671 = vmul.f32 %v1575, %v1575
        %v1672 = vmul.f32 %v1576, %v1576
        %v1673 = vmul.f32 %v1577, %v1577
        %v1674 = vmul.f32 %v1578, %v1578
        %v1675 = vmul.f32 %v1579, %v1579
        %v1676 = vmul.f32 %v1580, %v1580
        %v1677 = vmul.f32 %v1581, %v1581
        %v1678 = vmul.f32 %v1582, %v1582
        %v1679 = vmul.f32 %v1583, %v1583
        %v1680 = vsub.f32 %v1648, %v1664
        %v1681 = vsub.f32 %v1649, %v1665
        %v1682 = vsub.f32 %v1650, %v1666
        %v1683 = vsub.f32 %v1651, %v1667
        %v1684 = vsub.f32 %v1652, %v1668
        %v1685 = vsub.f32 %v1653, %v1669
        %v1686 = vsub.f32 %v1654, %v1670
        %v1687 = vsub.f32 %v1655, %v1671
        %v1688 = vsub.f32 %v1656, %v1672
        %v1689 = vsub.f32 %v1657, %v1673
        %v1690 = vsub.f32 %v1658, %v1674
        %v1691 = vsub.f32 %v1659, %v1675
        %v1692 = vsub.f32 %v1660, %v1676
        %v1693 = vsub.f32 %v1661, %v1677
        %v1694 = vsub.f32 %v1662, %v1678
        %v1695 = vsub.f32 %v1663, %v1679
        %v1696 = vmax.f32 %v1680, 0.0
        %v1697 = vmax.f32 %v1681, 0.0
        %v1698 = vmax.f32 %v1682, 0.0
        %v1699 = vmax.f32 %v1683, 0.0
        %v1700 = vmax.f32 %v1684, 0.0
        %v1701 = vmax.f32 %v1685, 0.0
        %v1702 = vmax.f32 %v1686, 0.0
        %v1703 = vmax.f32 %v1687, 0.0
        %v1704 = vmax.f32 %v1688, 0.0
        %v1705 = vmax.f32 %v1689, 0.0
        %v1706 = vmax.f32 %v1690, 0.0
        %v1707 = vmax.f32 %v1691, 0.0
        %v1708 = vmax.f32 %v1692, 0.0
        %v1709 = vmax.f32 %v1693, 0.0
        %v1710 = vmax.f32 %v1694, 0.0
        %v1711 = vmax.f32 %v1695, 0.0
        %v1712 = vsub.f32 %v1457, %v1568
        %v1713 = vsub.f32 %v1460, %v1569
        %v1714 = vsub.f32 %v1465, %v1570
        %v1715 = vsub.f32 %v1468, %v1571
        %v1716 = vsub.f32 %v1473, %v1572
        %v1717 = vsub.f32 %v1476, %v1573
        %v1718 = vsub.f32 %v1481, %v1574
        %v1719 = vsub.f32 %v1484, %v1575
        %v1720 = vsub.f32 %v1489, %v1576
        %v1721 = vsub.f32 %v1492, %v1577
        %v1722 = vsub.f32 %v1497, %v1578
        %v1723 = vsub.f32 %v1500, %v1579
        %v1724 = vsub.f32 %v1505, %v1580
        %v1725 = vsub.f32 %v1508, %v1581
        %v1726 = vsub.f32 %v1513, %v1582
        %v1727 = vsub.f32 %v1516, %v1583
        %v1728 = vadd.f32 %v1696, 1e-05
        %v1729 = vadd.f32 %v1697, 1e-05
        %v1730 = vadd.f32 %v1698, 1e-05
        %v1731 = vadd.f32 %v1699, 1e-05
        %v1732 = vadd.f32 %v1700, 1e-05
        %v1733 = vadd.f32 %v1701, 1e-05
        %v1734 = vadd.f32 %v1702, 1e-05
        %v1735 = vadd.f32 %v1703, 1e-05
        %v1736 = vadd.f32 %v1704, 1e-05
        %v1737 = vadd.f32 %v1705, 1e-05
        %v1738 = vadd.f32 %v1706, 1e-05
        %v1739 = vadd.f32 %v1707, 1e-05
        %v1740 = vadd.f32 %v1708, 1e-05
        %v1741 = vadd.f32 %v1709, 1e-05
        %v1742 = vadd.f32 %v1710, 1e-05
        %v1743 = vadd.f32 %v1711, 1e-05
        %v1744 = vrsqrt.pop %v1728
        %v1745 = vrsqrt.pop %v1729
        %v1746 = vrsqrt.pop %v1730
        %v1747 = vrsqrt.pop %v1731
        %v1748 = vrsqrt.pop %v1732
        %v1749 = vrsqrt.pop %v1733
        %v1750 = vrsqrt.pop %v1734
        %v1751 = vrsqrt.pop %v1735
        %v1752 = vrsqrt.pop %v1736
        %v1753 = vrsqrt.pop %v1737
        %v1754 = vrsqrt.pop %v1738
        %v1755 = vrsqrt.pop %v1739
        %v1756 = vrsqrt.pop %v1740
        %v1757 = vrsqrt.pop %v1741
        %v1758 = vrsqrt.pop %v1742
        %v1759 = vrsqrt.pop %v1743
        %v1760 = vmul.f32 %v1712, %v1744
        %v1761 = vmul.f32 %v1713, %v1745
        %v1762 = vmul.f32 %v1714, %v1746
        %v1763 = vmul.f32 %v1715, %v1747
        %v1764 = vmul.f32 %v1716, %v1748
        %v1765 = vmul.f32 %v1717, %v1749
        %v1766 = vmul.f32 %v1718, %v1750
        %v1767 = vmul.f32 %v1719, %v1751
        %v1768 = vmul.f32 %v1720, %v1752
        %v1769 = vmul.f32 %v1721, %v1753
        %v1770 = vmul.f32 %v1722, %v1754
        %v1771 = vmul.f32 %v1723, %v1755
        %v1772 = vmul.f32 %v1724, %v1756
        %v1773 = vmul.f32 %v1725, %v1757
        %v1774 = vmul.f32 %v1726, %v1758
        %v1775 = vmul.f32 %v1727, %v1759
        %v1776 = vld [vmem:[%s7] sm:$0x1]
        %v1778 = vlaneseq
        %v1779 = vshrl.u32 %v1778, 7
        %v1780 = vsub.s32 0, %v1779
        %v1781 = vrot.slane %v1776, %v1780
        %v1783 = vmul.f32 %v1760, %v1781
        %v1784 = vmul.f32 %v1761, %v1781
        %v1785 = vmul.f32 %v1762, %v1781
        %v1786 = vmul.f32 %v1763, %v1781
        %v1787 = vmul.f32 %v1764, %v1781
        %v1788 = vmul.f32 %v1765, %v1781
        %v1789 = vmul.f32 %v1766, %v1781
        %v1790 = vmul.f32 %v1767, %v1781
        %v1791 = vmul.f32 %v1768, %v1781
        %v1792 = vmul.f32 %v1769, %v1781
        %v1793 = vmul.f32 %v1770, %v1781
        %v1794 = vmul.f32 %v1771, %v1781
        %v1795 = vmul.f32 %v1772, %v1781
        %v1796 = vmul.f32 %v1773, %v1781
        %v1797 = vmul.f32 %v1774, %v1781
        %v1798 = vmul.f32 %v1775, %v1781
        %v1799 = vld [vmem:[%s8] sm:$0x1]
        %v1801 = vlaneseq
        %v1802 = vshrl.u32 %v1801, 7
        %v1803 = vsub.s32 0, %v1802
        %v1804 = vrot.slane %v1799, %v1803
        %v1806 = vadd.f32 %v1783, %v1804
        %v1807 = vadd.f32 %v1784, %v1804
        %v1808 = vadd.f32 %v1785, %v1804
        %v1809 = vadd.f32 %v1786, %v1804
        %v1810 = vadd.f32 %v1787, %v1804
        %v1811 = vadd.f32 %v1788, %v1804
        %v1812 = vadd.f32 %v1789, %v1804
        %v1813 = vadd.f32 %v1790, %v1804
        %v1814 = vadd.f32 %v1791, %v1804
        %v1815 = vadd.f32 %v1792, %v1804
        %v1816 = vadd.f32 %v1793, %v1804
        %v1817 = vadd.f32 %v1794, %v1804
        %v1818 = vadd.f32 %v1795, %v1804
        %v1819 = vadd.f32 %v1796, %v1804
        %v1820 = vadd.f32 %v1797, %v1804
        %v1821 = vadd.f32 %v1798, %v1804
        %1838 = vrot.lane.b32.xlu0 %v1806, 32
        %v1839 = vpop.permute.xlu0 %1838
        %1840 = vrot.lane.b32.xlu0 %v1807, 32
        %v1841 = vpop.permute.xlu0 %1840
        %1842 = vrot.lane.b32.xlu0 %v1808, 32
        %v1843 = vpop.permute.xlu0 %1842
        %1844 = vrot.lane.b32.xlu0 %v1809, 32
        %v1845 = vpop.permute.xlu0 %1844
        %1846 = vrot.lane.b32.xlu0 %v1810, 32
        %v1847 = vpop.permute.xlu0 %1846
        %1848 = vrot.lane.b32.xlu0 %v1811, 32
        %v1849 = vpop.permute.xlu0 %1848
        %1850 = vrot.lane.b32.xlu0 %v1812, 32
        %v1851 = vpop.permute.xlu0 %1850
        %1852 = vrot.lane.b32.xlu0 %v1813, 32
        %v1853 = vpop.permute.xlu0 %1852
        %1854 = vrot.lane.b32.xlu0 %v1814, 32
        %v1855 = vpop.permute.xlu0 %1854
        %1856 = vrot.lane.b32.xlu0 %v1815, 32
        %v1857 = vpop.permute.xlu0 %1856
        %1858 = vrot.lane.b32.xlu0 %v1816, 32
        %v1859 = vpop.permute.xlu0 %1858
        %1860 = vrot.lane.b32.xlu0 %v1817, 32
        %v1861 = vpop.permute.xlu0 %1860
        %1862 = vrot.lane.b32.xlu0 %v1818, 32
        %v1863 = vpop.permute.xlu0 %1862
        %1864 = vrot.lane.b32.xlu0 %v1819, 32
        %v1865 = vpop.permute.xlu0 %1864
        %1866 = vrot.lane.b32.xlu0 %v1820, 32
        %v1867 = vpop.permute.xlu0 %1866
        %1868 = vrot.lane.b32.xlu0 %v1821, 32
        %v1869 = vpop.permute.xlu0 %1868
        %1886 = vrot.lane.b32.xlu0 %v1806, 64
        %v1887 = vpop.permute.xlu0 %1886
        %1888 = vrot.lane.b32.xlu0 %v1807, 64
        %v1889 = vpop.permute.xlu0 %1888
        %1890 = vrot.lane.b32.xlu0 %v1808, 64
        %v1891 = vpop.permute.xlu0 %1890
        %1892 = vrot.lane.b32.xlu0 %v1809, 64
        %v1893 = vpop.permute.xlu0 %1892
        %1894 = vrot.lane.b32.xlu0 %v1810, 64
        %v1895 = vpop.permute.xlu0 %1894
        %1896 = vrot.lane.b32.xlu0 %v1811, 64
        %v1897 = vpop.permute.xlu0 %1896
        %1898 = vrot.lane.b32.xlu0 %v1812, 64
        %v1899 = vpop.permute.xlu0 %1898
        %1900 = vrot.lane.b32.xlu0 %v1813, 64
        %v1901 = vpop.permute.xlu0 %1900
        %1902 = vrot.lane.b32.xlu0 %v1814, 64
        %v1903 = vpop.permute.xlu0 %1902
        %1904 = vrot.lane.b32.xlu0 %v1815, 64
        %v1905 = vpop.permute.xlu0 %1904
        %1906 = vrot.lane.b32.xlu0 %v1816, 64
        %v1907 = vpop.permute.xlu0 %1906
        %1908 = vrot.lane.b32.xlu0 %v1817, 64
        %v1909 = vpop.permute.xlu0 %1908
        %1910 = vrot.lane.b32.xlu0 %v1818, 64
        %v1911 = vpop.permute.xlu0 %1910
        %1912 = vrot.lane.b32.xlu0 %v1819, 64
        %v1913 = vpop.permute.xlu0 %1912
        %1914 = vrot.lane.b32.xlu0 %v1820, 64
        %v1915 = vpop.permute.xlu0 %1914
        %1916 = vrot.lane.b32.xlu0 %v1821, 64
        %v1917 = vpop.permute.xlu0 %1916
        %1934 = vrot.lane.b32.xlu0 %v1806, 96
        %v1935 = vpop.permute.xlu0 %1934
        %1936 = vrot.lane.b32.xlu0 %v1807, 96
        %v1937 = vpop.permute.xlu0 %1936
        %1938 = vrot.lane.b32.xlu0 %v1808, 96
        %v1939 = vpop.permute.xlu0 %1938
        %1940 = vrot.lane.b32.xlu0 %v1809, 96
        %v1941 = vpop.permute.xlu0 %1940
        %1942 = vrot.lane.b32.xlu0 %v1810, 96
        %v1943 = vpop.permute.xlu0 %1942
        %1944 = vrot.lane.b32.xlu0 %v1811, 96
        %v1945 = vpop.permute.xlu0 %1944
        %1946 = vrot.lane.b32.xlu0 %v1812, 96
        %v1947 = vpop.permute.xlu0 %1946
        %1948 = vrot.lane.b32.xlu0 %v1813, 96
        %v1949 = vpop.permute.xlu0 %1948
        %1950 = vrot.lane.b32.xlu0 %v1814, 96
        %v1951 = vpop.permute.xlu0 %1950
        %1952 = vrot.lane.b32.xlu0 %v1815, 96
        %v1953 = vpop.permute.xlu0 %1952
        %1954 = vrot.lane.b32.xlu0 %v1816, 96
        %v1955 = vpop.permute.xlu0 %1954
        %1956 = vrot.lane.b32.xlu0 %v1817, 96
        %v1957 = vpop.permute.xlu0 %1956
        %1958 = vrot.lane.b32.xlu0 %v1818, 96
        %v1959 = vpop.permute.xlu0 %1958
        %1960 = vrot.lane.b32.xlu0 %v1819, 96
        %v1961 = vpop.permute.xlu0 %1960
        %1962 = vrot.lane.b32.xlu0 %v1820, 96
        %v1963 = vpop.permute.xlu0 %1962
        %1964 = vrot.lane.b32.xlu0 %v1821, 96
        %v1965 = vpop.permute.xlu0 %1964
        %v1982 = vsel %vm1131, %v1806, %v1839
        %v1983 = vsel %vm1131, %v1807, %v1841
        %v1984 = vsel %vm1131, %v1808, %v1843
        %v1985 = vsel %vm1131, %v1809, %v1845
        %v1986 = vsel %vm1131, %v1810, %v1847
        %v1987 = vsel %vm1131, %v1811, %v1849
        %v1988 = vsel %vm1131, %v1812, %v1851
        %v1989 = vsel %vm1131, %v1813, %v1853
        %v1990 = vsel %vm1131, %v1814, %v1855
        %v1991 = vsel %vm1131, %v1815, %v1857
        %v1992 = vsel %vm1131, %v1816, %v1859
        %v1993 = vsel %vm1131, %v1817, %v1861
        %v1994 = vsel %vm1131, %v1818, %v1863
        %v1995 = vsel %vm1131, %v1819, %v1865
        %v1996 = vsel %vm1131, %v1820, %v1867
        %v1997 = vsel %vm1131, %v1821, %v1869
        %v1998 = vsel %vm1165, %v1982, %v1887
        %v1999 = vsel %vm1165, %v1983, %v1889
        %v2000 = vsel %vm1165, %v1984, %v1891
        %v2001 = vsel %vm1165, %v1985, %v1893
        %v2002 = vsel %vm1165, %v1986, %v1895
        %v2003 = vsel %vm1165, %v1987, %v1897
        %v2004 = vsel %vm1165, %v1988, %v1899
        %v2005 = vsel %vm1165, %v1989, %v1901
        %v2006 = vsel %vm1165, %v1990, %v1903
        %v2007 = vsel %vm1165, %v1991, %v1905
        %v2008 = vsel %vm1165, %v1992, %v1907
        %v2009 = vsel %vm1165, %v1993, %v1909
        %v2010 = vsel %vm1165, %v1994, %v1911
        %v2011 = vsel %vm1165, %v1995, %v1913
        %v2012 = vsel %vm1165, %v1996, %v1915
        %v2013 = vsel %vm1165, %v1997, %v1917
        %v2014 = vsel %vm1199, %v1998, %v1935
        %v2015 = vsel %vm1199, %v1999, %v1937
        %v2016 = vsel %vm1199, %v2000, %v1939
        %v2017 = vsel %vm1199, %v2001, %v1941
        %v2018 = vsel %vm1199, %v2002, %v1943
        %v2019 = vsel %vm1199, %v2003, %v1945
        %v2020 = vsel %vm1199, %v2004, %v1947
        %v2021 = vsel %vm1199, %v2005, %v1949
        %v2022 = vsel %vm1199, %v2006, %v1951
        %v2023 = vsel %vm1199, %v2007, %v1953
        %v2024 = vsel %vm1199, %v2008, %v1955
        %v2025 = vsel %vm1199, %v2009, %v1957
        %v2026 = vsel %vm1199, %v2010, %v1959
        %v2027 = vsel %vm1199, %v2011, %v1961
        %v2028 = vsel %vm1199, %v2012, %v1963
        %v2029 = vsel %vm1199, %v2013, %v1965
        %v2030 = vld [vmem:[%s9] sm:$0x3]
        %v2032 = vlaneseq
        %v2033 = vshrl.u32 %v2032, 7
        %v2034 = vsub.s32 0, %v2033
        %v2035 = vrot.slane %v2030, %v2034
        %v2036 = vlaneseq
        %v2037 = vshrl.u32 %v2036, 7
        %v2038 = vsub.s32 1, %v2037
        %v2039 = vrot.slane %v2030, %v2038
        %v2042 = vsub.f32 %v2014, %v2035
        %v2043 = vsub.f32 %v2014, %v2039
        %v2044 = vsub.f32 %v2015, %v2035
        %v2045 = vsub.f32 %v2015, %v2039
        %v2046 = vsub.f32 %v2016, %v2035
        %v2047 = vsub.f32 %v2016, %v2039
        %v2048 = vsub.f32 %v2017, %v2035
        %v2049 = vsub.f32 %v2017, %v2039
        %v2050 = vsub.f32 %v2018, %v2035
        %v2051 = vsub.f32 %v2018, %v2039
        %v2052 = vsub.f32 %v2019, %v2035
        %v2053 = vsub.f32 %v2019, %v2039
        %v2054 = vsub.f32 %v2020, %v2035
        %v2055 = vsub.f32 %v2020, %v2039
        %v2056 = vsub.f32 %v2021, %v2035
        %v2057 = vsub.f32 %v2021, %v2039
        %v2058 = vsub.f32 %v2022, %v2035
        %v2059 = vsub.f32 %v2022, %v2039
        %v2060 = vsub.f32 %v2023, %v2035
        %v2061 = vsub.f32 %v2023, %v2039
        %v2062 = vsub.f32 %v2024, %v2035
        %v2063 = vsub.f32 %v2024, %v2039
        %v2064 = vsub.f32 %v2025, %v2035
        %v2065 = vsub.f32 %v2025, %v2039
        %v2066 = vsub.f32 %v2026, %v2035
        %v2067 = vsub.f32 %v2026, %v2039
        %v2068 = vsub.f32 %v2027, %v2035
        %v2069 = vsub.f32 %v2027, %v2039
        %v2070 = vsub.f32 %v2028, %v2035
        %v2071 = vsub.f32 %v2028, %v2039
        %v2072 = vsub.f32 %v2029, %v2035
        %v2073 = vsub.f32 %v2029, %v2039
        %v2074 = vmax.f32 %v2042, 0.0
        %v2075 = vmax.f32 %v2043, 0.0
        %v2076 = vmax.f32 %v2044, 0.0
        %v2077 = vmax.f32 %v2045, 0.0
        %v2078 = vmax.f32 %v2046, 0.0
        %v2079 = vmax.f32 %v2047, 0.0
        %v2080 = vmax.f32 %v2048, 0.0
        %v2081 = vmax.f32 %v2049, 0.0
        %v2082 = vmax.f32 %v2050, 0.0
        %v2083 = vmax.f32 %v2051, 0.0
        %v2084 = vmax.f32 %v2052, 0.0
        %v2085 = vmax.f32 %v2053, 0.0
        %v2086 = vmax.f32 %v2054, 0.0
        %v2087 = vmax.f32 %v2055, 0.0
        %v2088 = vmax.f32 %v2056, 0.0
        %v2089 = vmax.f32 %v2057, 0.0
        %v2090 = vmax.f32 %v2058, 0.0
        %v2091 = vmax.f32 %v2059, 0.0
        %v2092 = vmax.f32 %v2060, 0.0
        %v2093 = vmax.f32 %v2061, 0.0
        %v2094 = vmax.f32 %v2062, 0.0
        %v2095 = vmax.f32 %v2063, 0.0
        %v2096 = vmax.f32 %v2064, 0.0
        %v2097 = vmax.f32 %v2065, 0.0
        %v2098 = vmax.f32 %v2066, 0.0
        %v2099 = vmax.f32 %v2067, 0.0
        %v2100 = vmax.f32 %v2068, 0.0
        %v2101 = vmax.f32 %v2069, 0.0
        %v2102 = vmax.f32 %v2070, 0.0
        %v2103 = vmax.f32 %v2071, 0.0
        %v2104 = vmax.f32 %v2072, 0.0
        %v2105 = vmax.f32 %v2073, 0.0
        %v2106 = vld [vmem:[%s10] sm:$0x3]
        %v2108 = vlaneseq
        %v2109 = vshrl.u32 %v2108, 7
        %v2110 = vsub.s32 0, %v2109
        %v2111 = vrot.slane %v2106, %v2110
        %v2112 = vlaneseq
        %v2113 = vshrl.u32 %v2112, 7
        %v2114 = vsub.s32 1, %v2113
        %v2115 = vrot.slane %v2106, %v2114
        %v2118 = vsub.f32 %v2111, %v2014
        %v2119 = vsub.f32 %v2115, %v2014
        %v2120 = vsub.f32 %v2111, %v2015
        %v2121 = vsub.f32 %v2115, %v2015
        %v2122 = vsub.f32 %v2111, %v2016
        %v2123 = vsub.f32 %v2115, %v2016
        %v2124 = vsub.f32 %v2111, %v2017
        %v2125 = vsub.f32 %v2115, %v2017
        %v2126 = vsub.f32 %v2111, %v2018
        %v2127 = vsub.f32 %v2115, %v2018
        %v2128 = vsub.f32 %v2111, %v2019
        %v2129 = vsub.f32 %v2115, %v2019
        %v2130 = vsub.f32 %v2111, %v2020
        %v2131 = vsub.f32 %v2115, %v2020
        %v2132 = vsub.f32 %v2111, %v2021
        %v2133 = vsub.f32 %v2115, %v2021
        %v2134 = vsub.f32 %v2111, %v2022
        %v2135 = vsub.f32 %v2115, %v2022
        %v2136 = vsub.f32 %v2111, %v2023
        %v2137 = vsub.f32 %v2115, %v2023
        %v2138 = vsub.f32 %v2111, %v2024
        %v2139 = vsub.f32 %v2115, %v2024
        %v2140 = vsub.f32 %v2111, %v2025
        %v2141 = vsub.f32 %v2115, %v2025
        %v2142 = vsub.f32 %v2111, %v2026
        %v2143 = vsub.f32 %v2115, %v2026
        %v2144 = vsub.f32 %v2111, %v2027
        %v2145 = vsub.f32 %v2115, %v2027
        %v2146 = vsub.f32 %v2111, %v2028
        %v2147 = vsub.f32 %v2115, %v2028
        %v2148 = vsub.f32 %v2111, %v2029
        %v2149 = vsub.f32 %v2115, %v2029
        %v2150 = vmax.f32 %v2118, 0.0
        %v2151 = vmax.f32 %v2119, 0.0
        %v2152 = vmax.f32 %v2120, 0.0
        %v2153 = vmax.f32 %v2121, 0.0
        %v2154 = vmax.f32 %v2122, 0.0
        %v2155 = vmax.f32 %v2123, 0.0
        %v2156 = vmax.f32 %v2124, 0.0
        %v2157 = vmax.f32 %v2125, 0.0
        %v2158 = vmax.f32 %v2126, 0.0
        %v2159 = vmax.f32 %v2127, 0.0
        %v2160 = vmax.f32 %v2128, 0.0
        %v2161 = vmax.f32 %v2129, 0.0
        %v2162 = vmax.f32 %v2130, 0.0
        %v2163 = vmax.f32 %v2131, 0.0
        %v2164 = vmax.f32 %v2132, 0.0
        %v2165 = vmax.f32 %v2133, 0.0
        %v2166 = vmax.f32 %v2134, 0.0
        %v2167 = vmax.f32 %v2135, 0.0
        %v2168 = vmax.f32 %v2136, 0.0
        %v2169 = vmax.f32 %v2137, 0.0
        %v2170 = vmax.f32 %v2138, 0.0
        %v2171 = vmax.f32 %v2139, 0.0
        %v2172 = vmax.f32 %v2140, 0.0
        %v2173 = vmax.f32 %v2141, 0.0
        %v2174 = vmax.f32 %v2142, 0.0
        %v2175 = vmax.f32 %v2143, 0.0
        %v2176 = vmax.f32 %v2144, 0.0
        %v2177 = vmax.f32 %v2145, 0.0
        %v2178 = vmax.f32 %v2146, 0.0
        %v2179 = vmax.f32 %v2147, 0.0
        %v2180 = vmax.f32 %v2148, 0.0
        %v2181 = vmax.f32 %v2149, 0.0
        %v2182 = vmul.f32 %v2074, %v2150
        %v2183 = vmul.f32 %v2075, %v2151
        %v2184 = vmul.f32 %v2076, %v2152
        %v2185 = vmul.f32 %v2077, %v2153
        %v2186 = vmul.f32 %v2078, %v2154
        %v2187 = vmul.f32 %v2079, %v2155
        %v2188 = vmul.f32 %v2080, %v2156
        %v2189 = vmul.f32 %v2081, %v2157
        %v2190 = vmul.f32 %v2082, %v2158
        %v2191 = vmul.f32 %v2083, %v2159
        %v2192 = vmul.f32 %v2084, %v2160
        %v2193 = vmul.f32 %v2085, %v2161
        %v2194 = vmul.f32 %v2086, %v2162
        %v2195 = vmul.f32 %v2087, %v2163
        %v2196 = vmul.f32 %v2088, %v2164
        %v2197 = vmul.f32 %v2089, %v2165
        %v2198 = vmul.f32 %v2090, %v2166
        %v2199 = vmul.f32 %v2091, %v2167
        %v2200 = vmul.f32 %v2092, %v2168
        %v2201 = vmul.f32 %v2093, %v2169
        %v2202 = vmul.f32 %v2094, %v2170
        %v2203 = vmul.f32 %v2095, %v2171
        %v2204 = vmul.f32 %v2096, %v2172
        %v2205 = vmul.f32 %v2097, %v2173
        %v2206 = vmul.f32 %v2098, %v2174
        %v2207 = vmul.f32 %v2099, %v2175
        %v2208 = vmul.f32 %v2100, %v2176
        %v2209 = vmul.f32 %v2101, %v2177
        %v2210 = vmul.f32 %v2102, %v2178
        %v2211 = vmul.f32 %v2103, %v2179
        %v2212 = vmul.f32 %v2104, %v2180
        %v2213 = vmul.f32 %v2105, %v2181
        %v2214 = vmul.f32 %v2182, %v2182
        %v2215 = vmul.f32 %v2183, %v2183
        %v2216 = vmul.f32 %v2184, %v2184
        %v2217 = vmul.f32 %v2185, %v2185
        %v2218 = vmul.f32 %v2186, %v2186
        %v2219 = vmul.f32 %v2187, %v2187
        %v2220 = vmul.f32 %v2188, %v2188
        %v2221 = vmul.f32 %v2189, %v2189
        %v2222 = vmul.f32 %v2190, %v2190
        %v2223 = vmul.f32 %v2191, %v2191
        %v2224 = vmul.f32 %v2192, %v2192
        %v2225 = vmul.f32 %v2193, %v2193
        %v2226 = vmul.f32 %v2194, %v2194
        %v2227 = vmul.f32 %v2195, %v2195
        %v2228 = vmul.f32 %v2196, %v2196
        %v2229 = vmul.f32 %v2197, %v2197
        %v2230 = vmul.f32 %v2198, %v2198
        %v2231 = vmul.f32 %v2199, %v2199
        %v2232 = vmul.f32 %v2200, %v2200
        %v2233 = vmul.f32 %v2201, %v2201
        %v2234 = vmul.f32 %v2202, %v2202
        %v2235 = vmul.f32 %v2203, %v2203
        %v2236 = vmul.f32 %v2204, %v2204
        %v2237 = vmul.f32 %v2205, %v2205
        %v2238 = vmul.f32 %v2206, %v2206
        %v2239 = vmul.f32 %v2207, %v2207
        %v2240 = vmul.f32 %v2208, %v2208
        %v2241 = vmul.f32 %v2209, %v2209
        %v2242 = vmul.f32 %v2210, %v2210
        %v2243 = vmul.f32 %v2211, %v2211
        %v2244 = vmul.f32 %v2212, %v2212
        %v2245 = vmul.f32 %v2213, %v2213
        %v2246 = vpack.c.bf16 %v2216, %v2214
        %v2247 = vpack.c.bf16 %v2217, %v2215
        %v2248 = vpack.c.bf16 %v2220, %v2218
        %v2249 = vpack.c.bf16 %v2221, %v2219
        %v2250 = vpack.c.bf16 %v2224, %v2222
        %v2251 = vpack.c.bf16 %v2225, %v2223
        %v2252 = vpack.c.bf16 %v2228, %v2226
        %v2253 = vpack.c.bf16 %v2229, %v2227
        %v2254 = vpack.c.bf16 %v2232, %v2230
        %v2255 = vpack.c.bf16 %v2233, %v2231
        %v2256 = vpack.c.bf16 %v2236, %v2234
        %v2257 = vpack.c.bf16 %v2237, %v2235
        %v2258 = vpack.c.bf16 %v2240, %v2238
        %v2259 = vpack.c.bf16 %v2241, %v2239
        %v2260 = vpack.c.bf16 %v2244, %v2242
        %v2261 = vpack.c.bf16 %v2245, %v2243
        %v2262 = vld [vmem:[%s11] sm:$0xf]
        %v2263 = vld [vmem:[%s11 + $0x4] sm:$0xf]
        %v2264 = vld [vmem:[%s11 + $0x8] sm:$0xf]
        %v2265 = vld [vmem:[%s11 + $0xc] sm:$0xf]
        %v2266 = vld [vmem:[%s11 + $0x10] sm:$0xf]
        %v2267 = vld [vmem:[%s11 + $0x14] sm:$0xf]
        %v2268 = vld [vmem:[%s11 + $0x18] sm:$0xf]
        %v2269 = vld [vmem:[%s11 + $0x1c] sm:$0xf]
        %v2270 = vld [vmem:[%s11 + $0x20] sm:$0xf]
        %v2271 = vld [vmem:[%s11 + $0x24] sm:$0xf]
        %v2272 = vld [vmem:[%s11 + $0x28] sm:$0xf]
        %v2273 = vld [vmem:[%s11 + $0x2c] sm:$0xf]
        %v2274 = vld [vmem:[%s11 + $0x30] sm:$0xf]
        %v2275 = vld [vmem:[%s11 + $0x34] sm:$0xf]
        %v2276 = vld [vmem:[%s11 + $0x38] sm:$0xf]
        %v2277 = vld [vmem:[%s11 + $0x3c] sm:$0xf]
        %v2278 = vld [vmem:[%s11 + $0x40] sm:$0xf]
        %v2279 = vld [vmem:[%s11 + $0x44] sm:$0xf]
        %v2280 = vld [vmem:[%s11 + $0x48] sm:$0xf]
        %v2281 = vld [vmem:[%s11 + $0x4c] sm:$0xf]
        %v2282 = vld [vmem:[%s11 + $0x50] sm:$0xf]
        %v2283 = vld [vmem:[%s11 + $0x54] sm:$0xf]
        %v2284 = vld [vmem:[%s11 + $0x58] sm:$0xf]
        %v2285 = vld [vmem:[%s11 + $0x5c] sm:$0xf]
        %v2286 = vld [vmem:[%s11 + $0x60] sm:$0xf]
        %v2287 = vld [vmem:[%s11 + $0x64] sm:$0xf]
        %v2288 = vld [vmem:[%s11 + $0x68] sm:$0xf]
        %v2289 = vld [vmem:[%s11 + $0x6c] sm:$0xf]
        %v2290 = vld [vmem:[%s11 + $0x70] sm:$0xf]
        %v2291 = vld [vmem:[%s11 + $0x74] sm:$0xf]
        %v2292 = vld [vmem:[%s11 + $0x78] sm:$0xf]
        %v2293 = vld [vmem:[%s11 + $0x7c] sm:$0xf]
        %v2294 = vld [vmem:[%s12] sm:$0x1]
        %v2296 = vlaneseq
        %v2297 = vshrl.u32 %v2296, 7
        %v2298 = vsub.s32 0, %v2297
        %v2299 = vrot.slane %v2294, %v2298
        %v2333 = vunpack.c.l.b16 %v2262
        %v2334 = vunpack.c.l.b16 %v2263
        %v2335 = vunpack.c.l.b16 %v2264
        %v2336 = vunpack.c.l.b16 %v2265
        %v2337 = vunpack.c.l.b16 %v2266
        %v2338 = vunpack.c.l.b16 %v2267
        %v2339 = vunpack.c.l.b16 %v2268
        %v2340 = vunpack.c.l.b16 %v2269
        %v2341 = vunpack.c.l.b16 %v2270
        %v2342 = vunpack.c.l.b16 %v2271
        %v2343 = vunpack.c.l.b16 %v2272
        %v2344 = vunpack.c.l.b16 %v2273
        %v2345 = vunpack.c.l.b16 %v2274
        %v2346 = vunpack.c.l.b16 %v2275
        %v2347 = vunpack.c.l.b16 %v2276
        %v2348 = vunpack.c.l.b16 %v2277
        %v2349 = vunpack.c.l.b16 %v2278
        %v2350 = vunpack.c.l.b16 %v2279
        %v2351 = vunpack.c.l.b16 %v2280
        %v2352 = vunpack.c.l.b16 %v2281
        %v2353 = vunpack.c.l.b16 %v2282
        %v2354 = vunpack.c.l.b16 %v2283
        %v2355 = vunpack.c.l.b16 %v2284
        %v2356 = vunpack.c.l.b16 %v2285
        %v2357 = vunpack.c.l.b16 %v2286
        %v2358 = vunpack.c.l.b16 %v2287
        %v2359 = vunpack.c.l.b16 %v2288
        %v2360 = vunpack.c.l.b16 %v2289
        %v2361 = vunpack.c.l.b16 %v2290
        %v2362 = vunpack.c.l.b16 %v2291
        %v2363 = vunpack.c.l.b16 %v2292
        %v2364 = vunpack.c.l.b16 %v2293
        %v2365 = vpack.c.b16 %v2334, %v2333
        %v2366 = vpack.c.b16 %v2336, %v2335
        %v2367 = vpack.c.b16 %v2338, %v2337
        %v2368 = vpack.c.b16 %v2340, %v2339
        %v2369 = vpack.c.b16 %v2342, %v2341
        %v2370 = vpack.c.b16 %v2344, %v2343
        %v2371 = vpack.c.b16 %v2346, %v2345
        %v2372 = vpack.c.b16 %v2348, %v2347
        %v2373 = vpack.c.b16 %v2350, %v2349
        %v2374 = vpack.c.b16 %v2352, %v2351
        %v2375 = vpack.c.b16 %v2354, %v2353
        %v2376 = vpack.c.b16 %v2356, %v2355
        %v2377 = vpack.c.b16 %v2358, %v2357
        %v2378 = vpack.c.b16 %v2360, %v2359
        %v2379 = vpack.c.b16 %v2362, %v2361
        %v2380 = vpack.c.b16 %v2364, %v2363
        %2397 = vmatprep.subr.bf16.mxu0 0
        %2398 = vmatpush1.bf16.msra.mxu0 %v2372
        %2399 = vmatprep.subr.bf16.mxu0 0
        %2400 = vmatpush1.bf16.msra.mxu0 %v2371
        %2401 = vmatprep.subr.bf16.mxu0 0
        %2402 = vmatpush1.bf16.msra.mxu0 %v2370
        %2403 = vmatprep.subr.bf16.mxu0 0
        %2404 = vmatpush1.bf16.msra.mxu0 %v2369
        %2405 = vmatprep.subr.bf16.mxu0 0
        %2406 = vmatpush1.bf16.msra.mxu0 %v2368
        %2407 = vmatprep.subr.bf16.mxu0 0
        %2408 = vmatpush1.bf16.msra.mxu0 %v2367
        %2409 = vmatprep.subr.bf16.mxu0 0
        %2410 = vmatpush1.bf16.msra.mxu0 %v2366
        %2411 = vmatprep.subr.bf16.mxu0 0
        %2412 = vmatpush1.bf16.msra.mxu0 %v2365
        %2413 = vmatprep.subr.bf16.mxu0 0
        %2414 = vmatpush2.bf16.msra.mxu0 %v2380
        %2415 = vmatprep.subr.bf16.mxu0 0
        %2416 = vmatpush2.bf16.msra.mxu0 %v2379
        %2417 = vmatprep.subr.bf16.mxu0 0
        %2418 = vmatpush2.bf16.msra.mxu0 %v2378
        %2419 = vmatprep.subr.bf16.mxu0 0
        %2420 = vmatpush2.bf16.msra.mxu0 %v2377
        %2421 = vmatprep.subr.bf16.mxu0 0
        %2422 = vmatpush2.bf16.msra.mxu0 %v2376
        %2423 = vmatprep.subr.bf16.mxu0 0
        %2424 = vmatpush2.bf16.msra.mxu0 %v2375
        %2425 = vmatprep.subr.bf16.mxu0 0
        %2426 = vmatpush2.bf16.msra.mxu0 %v2374
        %2427 = vmatprep.subr.bf16.mxu0 0
        %2428 = vmatpush2.bf16.msra.mxu0 %v2373
        %2429 = vmatprep.mubr.bf16.mxu0 %v2247
        %2430 = vmatmul.mubr.bf16.gmra.mxu0 %v2246
        %v2431 = vpop.f32.mrf.mxu0
        %v2432 = vadd.f32 %v2299, %v2431
        %v2433 = vpop.f32.mrf.mxu0
        %v2434 = vpop.f32.mrf.mxu0
        %v2435 = vadd.f32 %v2299, %v2434
        %v2436 = vpop.f32.mrf.mxu0
        %2437 = vmatprep.mubr.bf16.mxu0 %v2249
        %2438 = vmatmul.mubr.bf16.gmra.mxu0 %v2248
        %v2439 = vpop.f32.mrf.mxu0
        %v2440 = vadd.f32 %v2299, %v2439
        %v2441 = vpop.f32.mrf.mxu0
        %v2442 = vpop.f32.mrf.mxu0
        %v2443 = vadd.f32 %v2299, %v2442
        %v2444 = vpop.f32.mrf.mxu0
        %2445 = vmatprep.mubr.bf16.mxu0 %v2251
        %2446 = vmatmul.mubr.bf16.gmra.mxu0 %v2250
        %v2447 = vpop.f32.mrf.mxu0
        %v2448 = vadd.f32 %v2299, %v2447
        %v2449 = vpop.f32.mrf.mxu0
        %v2450 = vpop.f32.mrf.mxu0
        %v2451 = vadd.f32 %v2299, %v2450
        %v2452 = vpop.f32.mrf.mxu0
        %2453 = vmatprep.mubr.bf16.mxu0 %v2253
        %2454 = vmatmul.mubr.bf16.gmra.mxu0 %v2252
        %v2455 = vpop.f32.mrf.mxu0
        %v2456 = vadd.f32 %v2299, %v2455
        %v2457 = vpop.f32.mrf.mxu0
        %v2458 = vpop.f32.mrf.mxu0
        %v2459 = vadd.f32 %v2299, %v2458
        %v2460 = vpop.f32.mrf.mxu0
        %2461 = vmatprep.mubr.bf16.mxu0 %v2255
        %2462 = vmatmul.mubr.bf16.gmra.mxu0 %v2254
        %v2463 = vpop.f32.mrf.mxu0
        %v2464 = vadd.f32 %v2299, %v2463
        %v2465 = vpop.f32.mrf.mxu0
        %v2466 = vpop.f32.mrf.mxu0
        %v2467 = vadd.f32 %v2299, %v2466
        %v2468 = vpop.f32.mrf.mxu0
        %2469 = vmatprep.mubr.bf16.mxu0 %v2257
        %2470 = vmatmul.mubr.bf16.gmra.mxu0 %v2256
        %v2471 = vpop.f32.mrf.mxu0
        %v2472 = vadd.f32 %v2299, %v2471
        %v2473 = vpop.f32.mrf.mxu0
        %v2474 = vpop.f32.mrf.mxu0
        %v2475 = vadd.f32 %v2299, %v2474
        %v2476 = vpop.f32.mrf.mxu0
        %2477 = vmatprep.mubr.bf16.mxu0 %v2259
        %2478 = vmatmul.mubr.bf16.gmra.mxu0 %v2258
        %v2479 = vpop.f32.mrf.mxu0
        %v2480 = vadd.f32 %v2299, %v2479
        %v2481 = vpop.f32.mrf.mxu0
        %v2482 = vpop.f32.mrf.mxu0
        %v2483 = vadd.f32 %v2299, %v2482
        %v2484 = vpop.f32.mrf.mxu0
        %2485 = vmatprep.mubr.bf16.mxu0 %v2261
        %2486 = vmatmul.mubr.bf16.gmra.mxu0 %v2260
        %v2487 = vpop.f32.mrf.mxu0
        %v2488 = vadd.f32 %v2299, %v2487
        %v2489 = vpop.f32.mrf.mxu0
        %v2490 = vpop.f32.mrf.mxu0
        %v2491 = vadd.f32 %v2299, %v2490
        %v2492 = vpop.f32.mrf.mxu0
        %2493 = vdwg.mxu0
        %2494 = vst [vmem:[%s434] sm:$0xff] %v2432
        %2495 = vst [vmem:[%s434 + $0x8] sm:$0xff] %v2435
        %2496 = vst [vmem:[%s434 + $0x10] sm:$0xff] %v2440
        %2497 = vst [vmem:[%s434 + $0x18] sm:$0xff] %v2443
        %2498 = vst [vmem:[%s434 + $0x20] sm:$0xff] %v2448
        %2499 = vst [vmem:[%s434 + $0x28] sm:$0xff] %v2451
        %2500 = vst [vmem:[%s434 + $0x30] sm:$0xff] %v2456
        %2501 = vst [vmem:[%s434 + $0x38] sm:$0xff] %v2459
        %2502 = vst [vmem:[%s434 + $0x40] sm:$0xff] %v2464
        %2503 = vst [vmem:[%s434 + $0x48] sm:$0xff] %v2467
        %2504 = vst [vmem:[%s434 + $0x50] sm:$0xff] %v2472
        %2505 = vst [vmem:[%s434 + $0x58] sm:$0xff] %v2475
        %2506 = vst [vmem:[%s434 + $0x60] sm:$0xff] %v2480
        %2507 = vst [vmem:[%s434 + $0x68] sm:$0xff] %v2483
        %2508 = vst [vmem:[%s434 + $0x70] sm:$0xff] %v2488
        %2509 = vst [vmem:[%s434 + $0x78] sm:$0xff] %v2491
        %s2510 = sand.u32 %s313, 1
        %s2511 = scalar_lea.sflag [#allocation3], %s2510
        %s2512 = sand.u32 %s313, 1
        %s2513 = smul.addr %s2512, 128
        %s2514 = scalar_lea.vmem [#allocation2], %s2513
        // Predicated region
        $region73: #{tpu_custom_call.1} parent=71 // pred_check
          %p2515 = pneg %p323
        $region74: #{tpu_custom_call.1} parent=71 // pred_check_branch
          %2517 = sbr.rel (%p2515) target = $region76
        $region75: #{tpu_custom_call.1} parent=71 // pred_region
          %s2518 = smul.u32 16, %s27
          %s2520 = ssub.s32 2048, 2048
          %2521 = vsyncadd %s2511, %s2520
          %s2522 = smul.addr %s2518, 128
          %s2523 = scalar_lea.hbm %s13, %s2522
          %s2524 = sshll.u32 %s2514, 4
          %s2525 = int_to_ptr.vmem [resolvable:$true] %s2524
          %2530 = dma.vmem_to_hbm [thread:$0]  %s2525, 2048, %s2523, %s2511, 128, 128, 8
        $region76: #{tpu_custom_call.1} parent=71 // pred_fallthru
          _
      $region72: #{tpu_custom_call.1} parent=5 // pred_fallthru
        _
      %p2531 = scmp.le.s32.totalorder 2, %s22
      // Predicated region
      $region77: #{tpu_custom_call.1} parent=5 // pred_check
        %p2532 = pneg %p2531
      $region78: #{tpu_custom_call.1} parent=5 // pred_check_branch
        %2534 = sbr.rel (%p2532) target = $region80
      $region79: #{tpu_custom_call.1} parent=5 // pred_region
        %s2535 = ssub.s32 %s22, 2
        // Predicated region
        $region81: #{tpu_custom_call.1} parent=79 // pred_check
          %p2536 = pneg %p329
        $region82: #{tpu_custom_call.1} parent=79 // pred_check_branch
          %2538 = sbr.rel (%p2536) target = $region84
        $region83: #{tpu_custom_call.1} parent=79 // pred_region
          %s2539 = sand.u32 %s314, 1
          %s2540 = scalar_lea.sflag [#allocation3], %s2539
          %s2541 = sand.u32 %s314, 1
          %s2542 = smul.addr %s2541, 128
          %s2543 = scalar_lea.vmem [#allocation2], %s2542
          %2544 = dma.done %s2540, 2048
        $region84: #{tpu_custom_call.1} parent=79 // pred_fallthru
          _
      $region80: #{tpu_custom_call.1} parent=5 // pred_fallthru
        _
    $region6: #{tpu_custom_call.1} parent=1 // loop_footer
      %s26 = sadd.s32 1, %s22
    $region7: #{tpu_custom_call.1} parent=1 // loop_footer_branch
      %21 = sbr.rel target = $region3
    $region8: #{tpu_custom_call.1} parent=1 // loop_exit
      _
    %2545 = vsyncpa [#allocation3], 1
    %s2546 = scalar_lea.sflag [#allocation3], 1
    %2547 = vsyncpa %s2546, 1

// kernel: tpu_custom_call.1
$region0: #{tpu_custom_call.1}
  #allocation0 [shape = 'u32[]', space=smem, size = 0x4, offset = 0x4, fixed_abs, tag = 'smem constant byte address 0x4 - core index']
  #allocation1 [shape = 'u32[144,128]{1,0:T(1,128)}', space=vmem, size = 0x12000, scoped, tag = 'internal scratch']
  %s0 = inlined_call_operand.vmem [shape: f32[256,16], index: 0, kind: input, shape index: {}]
  %s1 = inlined_call_operand.vmem [shape: f32[1,16], index: 1, kind: input, shape index: {}]
  %s2 = inlined_call_operand.vmem [shape: f32[1,16], index: 2, kind: input, shape index: {}]
  %s3 = inlined_call_operand.vmem [shape: f32[1,128], index: 3, kind: input, shape index: {}]
  %s4 = inlined_call_operand.vmem [shape: f32[1,128], index: 4, kind: input, shape index: {}]
  %s5 = inlined_call_operand.vmem [shape: bf16[128,32], index: 5, kind: input, shape index: {}]
  %s6 = inlined_call_operand.vmem [shape: f32[1,32], index: 6, kind: input, shape index: {}]
  %s7 = inlined_call_operand.vmem [shape: f32[1,32], index: 7, kind: input, shape index: {}]
  %s8 = inlined_call_operand.vmem [shape: f32[1,32], index: 8, kind: input, shape index: {}]
  %s9 = inlined_call_operand.vmem [shape: f32[1,256], index: 9, kind: input, shape index: {}]
  %s10 = inlined_call_operand.vmem [shape: f32[1,256], index: 10, kind: input, shape index: {}]
  %s11 = inlined_call_operand.vmem [shape: bf16[256,128], index: 11, kind: input, shape index: {}]
  %s12 = inlined_call_operand.vmem [shape: f32[1,128], index: 12, kind: input, shape index: {}]
  %s13 = inlined_call_operand.hbm [shape: f32[256,128], index: 13, kind: output, shape index: {}]
  %s14 = sld [smem:[#allocation0]]
  $region85: #{tpu_custom_call.1} parent=0
    _
  %s16 = ssub.s32 1, %s14
  %s17 = scalar_select 0, %s16, %s14
  $region1: #{tpu_custom_call.1} parent=0
    #allocation2 [shape = 'u8[131072]{0}', space=vmem, size = 0x20000, scoped, tag = 'output window, operand 0']
    #allocation3 [shape = 's32[2]{0}', space=sflag, size = 0x8, scoped, tag = 'scoped memory for tpu_custom_call.1']
    %18 = vsyncpa [#allocation3], 0
    %s19 = scalar_lea.sflag [#allocation3], 1
    %20 = vsyncpa %s19, 0
    loop: start=0, step=1, limit=4
    $region2: #{tpu_custom_call.1} parent=1 // loop_pre_header
      _
    $region3: #{tpu_custom_call.1} parent=1 // loop_header
      %s22 = sphi 0, %s26
      %p23 = scmp.ge.s32.totalorder %s22, 4
      %s32 = sphi 0, %s34
      %s35 = sphi 0, %s32
      %s36 = sphi 0, %s35
      %s52 = sphi 0, %s36
      %s56 = sphi 0, %s56
      %s58 = sphi 0, %s56
      %s59 = sphi 0, %s58
      %s73 = sphi 0, %s59
      %s77 = sphi 0, %s77
      %s79 = sphi 0, %s77
      %s80 = sphi 0, %s79
      %s94 = sphi 0, %s80
      %s98 = sphi 0, %s98
      %s100 = sphi 0, %s98
      %s101 = sphi 0, %s100
      %s115 = sphi 0, %s101
      %s119 = sphi 0, %s119
      %s121 = sphi 0, %s119
      %s122 = sphi 0, %s121
      %s136 = sphi 0, %s122
      %s140 = sphi 0, %s140
      %s142 = sphi 0, %s140
      %s143 = sphi 0, %s142
      %s157 = sphi 0, %s143
      %s161 = sphi 0, %s161
      %s163 = sphi 0, %s161
      %s164 = sphi 0, %s163
      %s178 = sphi 0, %s164
      %s182 = sphi 0, %s182
      %s184 = sphi 0, %s182
      %s185 = sphi 0, %s184
      %s199 = sphi 0, %s185
      %s203 = sphi 0, %s203
      %s205 = sphi 0, %s203
      %s206 = sphi 0, %s205
      %s220 = sphi 0, %s206
      %s224 = sphi 0, %s224
      %s226 = sphi 0, %s224
      %s227 = sphi 0, %s226
      %s241 = sphi 0, %s227
      %s245 = sphi 0, %s245
      %s247 = sphi 0, %s245
      %s248 = sphi 0, %s247
      %s262 = sphi 0, %s248
      %s266 = sphi 0, %s266
      %s268 = sphi 0, %s266
      %s269 = sphi 0, %s268
      %s283 = sphi 0, %s269
      %s287 = sphi 0, %s287
      %s289 = sphi 0, %s287
      %s290 = sphi 0, %s289
      %s304 = sphi 0, %s290
      %s310 = sphi 0, %s312
      %s313 = sphi 0, %s310
      %s314 = sphi 0, %s313
      %s330 = sphi 0, %s314
    $region4: #{tpu_custom_call.1} parent=1 // loop_header_branch
      %25 = sbr.rel (%p23) target = $region8
    $region5: #{tpu_custom_call.1} parent=1 // loop_body
      %s27 = ssub.s32 %s22, 1
      %s28 = ssub.s32 %s22, 2
      %s29 = sadd.s32 %s22, 1
      %s30 = ssub.s32 %s22, %s29
      %p31 = scmp.eq.s32.totalorder %s30, 0
      %s33 = sadd.s32 %s32, 1
      %s34 = scalar_select %p31, %s32, %s33
      %p37 = pneg %p31
      %p38 = scmp.eq.s32.totalorder %s22, 1
      %p39 = por %p37, %p38
      %p40 = scmp.ne.s32.totalorder %s32, %s35
      %p41 = scmp.eq.s32.totalorder %s22, 0
      %p42 = por %p40, %p41
      %p43 = scmp.ne.s32.totalorder %s32, %s35
      %p44 = scmp.eq.s32.totalorder %s27, 1
      %p45 = por %p43, %p44
      %p46 = scmp.ne.s32.totalorder %s35, %s36
      %p47 = scmp.eq.s32.totalorder %s27, 0
      %p48 = por %p46, %p47
      %p49 = scmp.ne.s32.totalorder %s35, %s36
      %p50 = scmp.eq.s32.totalorder %s28, 1
      %p51 = por %p49, %p50
      %p53 = scmp.ne.s32.totalorder %s36, %s52
      %p54 = scmp.eq.s32.totalorder %s28, 0
      %p55 = por %p53, %p54
      %s57 = sadd.s32 %s56, 1
      %p60 = scmp.eq.s32.totalorder %s22, 1
      %p61 = scmp.ne.s32.totalorder %s56, %s58
      %p62 = scmp.eq.s32.totalorder %s22, 0
      %p63 = por %p61, %p62
      %p64 = scmp.ne.s32.totalorder %s56, %s58
      %p65 = scmp.eq.s32.totalorder %s27, 1
      %p66 = por %p64, %p65
      %p67 = scmp.ne.s32.totalorder %s58, %s59
      %p68 = scmp.eq.s32.totalorder %s27, 0
      %p69 = por %p67, %p68
      %p70 = scmp.ne.s32.totalorder %s58, %s59
      %p71 = scmp.eq.s32.totalorder %s28, 1
      %p72 = por %p70, %p71
      %p74 = scmp.ne.s32.totalorder %s59, %s73
      %p75 = scmp.eq.s32.totalorder %s28, 0
      %p76 = por %p74, %p75
      %s78 = sadd.s32 %s77, 1
      %p81 = scmp.eq.s32.totalorder %s22, 1
      %p82 = scmp.ne.s32.totalorder %s77, %s79
      %p83 = scmp.eq.s32.totalorder %s22, 0
      %p84 = por %p82, %p83
      %p85 = scmp.ne.s32.totalorder %s77, %s79
      %p86 = scmp.eq.s32.totalorder %s27, 1
      %p87 = por %p85, %p86
      %p88 = scmp.ne.s32.totalorder %s79, %s80
      %p89 = scmp.eq.s32.totalorder %s27, 0
      %p90 = por %p88, %p89
      %p91 = scmp.ne.s32.totalorder %s79, %s80
      %p92 = scmp.eq.s32.totalorder %s28, 1
      %p93 = por %p91, %p92
      %p95 = scmp.ne.s32.totalorder %s80, %s94
      %p96 = scmp.eq.s32.totalorder %s28, 0
      %p97 = por %p95, %p96
      %s99 = sadd.s32 %s98, 1
      %p102 = scmp.eq.s32.totalorder %s22, 1
      %p103 = scmp.ne.s32.totalorder %s98, %s100
      %p104 = scmp.eq.s32.totalorder %s22, 0
      %p105 = por %p103, %p104
      %p106 = scmp.ne.s32.totalorder %s98, %s100
      %p107 = scmp.eq.s32.totalorder %s27, 1
      %p108 = por %p106, %p107
      %p109 = scmp.ne.s32.totalorder %s100, %s101
      %p110 = scmp.eq.s32.totalorder %s27, 0
      %p111 = por %p109, %p110
      %p112 = scmp.ne.s32.totalorder %s100, %s101
      %p113 = scmp.eq.s32.totalorder %s28, 1
      %p114 = por %p112, %p113
      %p116 = scmp.ne.s32.totalorder %s101, %s115
      %p117 = scmp.eq.s32.totalorder %s28, 0
      %p118 = por %p116, %p117
      %s120 = sadd.s32 %s119, 1
      %p123 = scmp.eq.s32.totalorder %s22, 1
      %p124 = scmp.ne.s32.totalorder %s119, %s121
      %p125 = scmp.eq.s32.totalorder %s22, 0
      %p126 = por %p124, %p125
      %p127 = scmp.ne.s32.totalorder %s119, %s121
      %p128 = scmp.eq.s32.totalorder %s27, 1
      %p129 = por %p127, %p128
      %p130 = scmp.ne.s32.totalorder %s121, %s122
      %p131 = scmp.eq.s32.totalorder %s27, 0
      %p132 = por %p130, %p131
      %p133 = scmp.ne.s32.totalorder %s121, %s122
      %p134 = scmp.eq.s32.totalorder %s28, 1
      %p135 = por %p133, %p134
      %p137 = scmp.ne.s32.totalorder %s122, %s136
      %p138 = scmp.eq.s32.totalorder %s28, 0
      %p139 = por %p137, %p138
      %s141 = sadd.s32 %s140, 1
      %p144 = scmp.eq.s32.totalorder %s22, 1
      %p145 = scmp.ne.s32.totalorder %s140, %s142
      %p146 = scmp.eq.s32.totalorder %s22, 0
      %p147 = por %p145, %p146
      %p148 = scmp.ne.s32.totalorder %s140, %s142
      %p149 = scmp.eq.s32.totalorder %s27, 1
      %p150 = por %p148, %p149
      %p151 = scmp.ne.s32.totalorder %s142, %s143
      %p152 = scmp.eq.s32.totalorder %s27, 0
      %p153 = por %p151, %p152
      %p154 = scmp.ne.s32.totalorder %s142, %s143
      %p155 = scmp.eq.s32.totalorder %s28, 1
      %p156 = por %p154, %p155
      %p158 = scmp.ne.s32.totalorder %s143, %s157
      %p159 = scmp.eq.s32.totalorder %s28, 0
      %p160 = por %p158, %p159
      %s162 = sadd.s32 %s161, 1
      %p165 = scmp.eq.s32.totalorder %s22, 1
      %p166 = scmp.ne.s32.totalorder %s161, %s163
      %p167 = scmp.eq.s32.totalorder %s22, 0
      %p168 = por %p166, %p167
      %p169 = scmp.ne.s32.totalorder %s161, %s163
      %p170 = scmp.eq.s32.totalorder %s27, 1
      %p171 = por %p169, %p170
      %p172 = scmp.ne.s32.totalorder %s163, %s164
      %p173 = scmp.eq.s32.totalorder %s27, 0
      %p174 = por %p172, %p173
      %p175 = scmp.ne.s32.totalorder %s163, %s164
      %p176 = scmp.eq.s32.totalorder %s28, 1
      %p177 = por %p175, %p176
      %p179 = scmp.ne.s32.totalorder %s164, %s178
      %p180 = scmp.eq.s32.totalorder %s28, 0
      %p181 = por %p179, %p180
      %s183 = sadd.s32 %s182, 1
      %p186 = scmp.eq.s32.totalorder %s22, 1
      %p187 = scmp.ne.s32.totalorder %s182, %s184
      %p188 = scmp.eq.s32.totalorder %s22, 0
      %p189 = por %p187, %p188
      %p190 = scmp.ne.s32.totalorder %s182, %s184
      %p191 = scmp.eq.s32.totalorder %s27, 1
      %p192 = por %p190, %p191
      %p193 = scmp.ne.s32.totalorder %s184, %s185
      %p194 = scmp.eq.s32.totalorder %s27, 0
      %p195 = por %p193, %p194
      %p196 = scmp.ne.s32.totalorder %s184, %s185
      %p197 = scmp.eq.s32.totalorder %s28, 1
      %p198 = por %p196, %p197
      %p200 = scmp.ne.s32.totalorder %s185, %s199
      %p201 = scmp.eq.s32.totalorder %s28, 0
      %p202 = por %p200, %p201
      %s204 = sadd.s32 %s203, 1
      %p207 = scmp.eq.s32.totalorder %s22, 1
      %p208 = scmp.ne.s32.totalorder %s203, %s205
      %p209 = scmp.eq.s32.totalorder %s22, 0
      %p210 = por %p208, %p209
      %p211 = scmp.ne.s32.totalorder %s203, %s205
      %p212 = scmp.eq.s32.totalorder %s27, 1
      %p213 = por %p211, %p212
      %p214 = scmp.ne.s32.totalorder %s205, %s206
      %p215 = scmp.eq.s32.totalorder %s27, 0
      %p216 = por %p214, %p215
      %p217 = scmp.ne.s32.totalorder %s205, %s206
      %p218 = scmp.eq.s32.totalorder %s28, 1
      %p219 = por %p217, %p218
      %p221 = scmp.ne.s32.totalorder %s206, %s220
      %p222 = scmp.eq.s32.totalorder %s28, 0
      %p223 = por %p221, %p222
      %s225 = sadd.s32 %s224, 1
      %p228 = scmp.eq.s32.totalorder %s22, 1
      %p229 = scmp.ne.s32.totalorder %s224, %s226
      %p230 = scmp.eq.s32.totalorder %s22, 0
      %p231 = por %p229, %p230
      %p232 = scmp.ne.s32.totalorder %s224, %s226
      %p233 = scmp.eq.s32.totalorder %s27, 1
      %p234 = por %p232, %p233
      %p235 = scmp.ne.s32.totalorder %s226, %s227
      %p236 = scmp.eq.s32.totalorder %s27, 0
      %p237 = por %p235, %p236
      %p238 = scmp.ne.s32.totalorder %s226, %s227
      %p239 = scmp.eq.s32.totalorder %s28, 1
      %p240 = por %p238, %p239
      %p242 = scmp.ne.s32.totalorder %s227, %s241
      %p243 = scmp.eq.s32.totalorder %s28, 0
      %p244 = por %p242, %p243
      %s246 = sadd.s32 %s245, 1
      %p249 = scmp.eq.s32.totalorder %s22, 1
      %p250 = scmp.ne.s32.totalorder %s245, %s247
      %p251 = scmp.eq.s32.totalorder %s22, 0
      %p252 = por %p250, %p251
      %p253 = scmp.ne.s32.totalorder %s245, %s247
      %p254 = scmp.eq.s32.totalorder %s27, 1
      %p255 = por %p253, %p254
      %p256 = scmp.ne.s32.totalorder %s247, %s248
      %p257 = scmp.eq.s32.totalorder %s27, 0
      %p258 = por %p256, %p257
      %p259 = scmp.ne.s32.totalorder %s247, %s248
      %p260 = scmp.eq.s32.totalorder %s28, 1
      %p261 = por %p259, %p260
      %p263 = scmp.ne.s32.totalorder %s248, %s262
      %p264 = scmp.eq.s32.totalorder %s28, 0
      %p265 = por %p263, %p264
      %s267 = sadd.s32 %s266, 1
      %p270 = scmp.eq.s32.totalorder %s22, 1
      %p271 = scmp.ne.s32.totalorder %s266, %s268
      %p272 = scmp.eq.s32.totalorder %s22, 0
      %p273 = por %p271, %p272
      %p274 = scmp.ne.s32.totalorder %s266, %s268
      %p275 = scmp.eq.s32.totalorder %s27, 1
      %p276 = por %p274, %p275
      %p277 = scmp.ne.s32.totalorder %s268, %s269
      %p278 = scmp.eq.s32.totalorder %s27, 0
      %p279 = por %p277, %p278
      %p280 = scmp.ne.s32.totalorder %s268, %s269
      %p281 = scmp.eq.s32.totalorder %s28, 1
      %p282 = por %p280, %p281
      %p284 = scmp.ne.s32.totalorder %s269, %s283
      %p285 = scmp.eq.s32.totalorder %s28, 0
      %p286 = por %p284, %p285
      %s288 = sadd.s32 %s287, 1
      %p291 = scmp.eq.s32.totalorder %s22, 1
      %p292 = scmp.ne.s32.totalorder %s287, %s289
      %p293 = scmp.eq.s32.totalorder %s22, 0
      %p294 = por %p292, %p293
      %p295 = scmp.ne.s32.totalorder %s287, %s289
      %p296 = scmp.eq.s32.totalorder %s27, 1
      %p297 = por %p295, %p296
      %p298 = scmp.ne.s32.totalorder %s289, %s290
      %p299 = scmp.eq.s32.totalorder %s27, 0
      %p300 = por %p298, %p299
      %p301 = scmp.ne.s32.totalorder %s289, %s290
      %p302 = scmp.eq.s32.totalorder %s28, 1
      %p303 = por %p301, %p302
      %p305 = scmp.ne.s32.totalorder %s290, %s304
      %p306 = scmp.eq.s32.totalorder %s28, 0
      %p307 = por %p305, %p306
      %s308 = ssub.s32 %s22, %s29
      %p309 = scmp.eq.s32.totalorder %s308, 0
      %s311 = sadd.s32 %s310, 1
      %s312 = scalar_select %p309, %s310, %s311
      %p315 = pneg %p309
      %p316 = scmp.eq.s32.totalorder %s22, 1
      %p317 = por %p315, %p316
      %p318 = scmp.ne.s32.totalorder %s310, %s313
      %p319 = scmp.eq.s32.totalorder %s22, 0
      %p320 = por %p318, %p319
      %p321 = scmp.ne.s32.totalorder %s310, %s313
      %p322 = scmp.eq.s32.totalorder %s27, 1
      %p323 = por %p321, %p322
      %p324 = scmp.ne.s32.totalorder %s313, %s314
      %p325 = scmp.eq.s32.totalorder %s27, 0
      %p326 = por %p324, %p325
      %p327 = scmp.ne.s32.totalorder %s313, %s314
      %p328 = scmp.eq.s32.totalorder %s28, 1
      %p329 = por %p327, %p328
      %p331 = scmp.ne.s32.totalorder %s314, %s330
      %p332 = scmp.eq.s32.totalorder %s28, 0
      %p333 = por %p331, %p332
      %p334 = scmp.le.s32.totalorder 1, %s22
      %p335 = scmp.lt.s32.totalorder %s22, 3
      %p336 = pnand %p334, %p335
      %p337 = pneg %p336
      // Predicated region
      $region9: #{tpu_custom_call.1} parent=5 // pred_check
        _
      $region10: #{tpu_custom_call.1} parent=5 // pred_check_branch
        %339 = sbr.rel (%p336) target = $region12
      $region11: #{tpu_custom_call.1} parent=5 // pred_region
        %s340 = ssub.s32 %s22, 1
        // Predicated region
        $region13: #{tpu_custom_call.1} parent=11 // pred_check
          %p341 = pneg %p69
        $region14: #{tpu_custom_call.1} parent=11 // pred_check_branch
          %343 = sbr.rel (%p341) target = $region16
        $region15: #{tpu_custom_call.1} parent=11 // pred_region
          _
        $region16: #{tpu_custom_call.1} parent=11 // pred_fallthru
          _
        // Predicated region
        $region17: #{tpu_custom_call.1} parent=11 // pred_check
          %p344 = pneg %p90
        $region18: #{tpu_custom_call.1} parent=11 // pred_check_branch
          %346 = sbr.rel (%p344) target = $region20
        $region19: #{tpu_custom_call.1} parent=11 // pred_region
          _
        $region20: #{tpu_custom_call.1} parent=11 // pred_fallthru
          _
        // Predicated region
        $region21: #{tpu_custom_call.1} parent=11 // pred_check
          %p347 = pneg %p111
        $region22: #{tpu_custom_call.1} parent=11 // pred_check_branch
          %349 = sbr.rel (%p347) target = $region24
        $region23: #{tpu_custom_call.1} parent=11 // pred_region
          _
        $region24: #{tpu_custom_call.1} parent=11 // pred_fallthru
          _
        // Predicated region
        $region25: #{tpu_custom_call.1} parent=11 // pred_check
          %p350 = pneg %p132
        $region26: #{tpu_custom_call.1} parent=11 // pred_check_branch
          %352 = sbr.rel (%p350) target = $region28
        $region27: #{tpu_custom_call.1} parent=11 // pred_region
          _
        $region28: #{tpu_custom_call.1} parent=11 // pred_fallthru
          _
        // Predicated region
        $region29: #{tpu_custom_call.1} parent=11 // pred_check
          %p353 = pneg %p153
        $region30: #{tpu_custom_call.1} parent=11 // pred_check_branch
          %355 = sbr.rel (%p353) target = $region32
        $region31: #{tpu_custom_call.1} parent=11 // pred_region
          _
        $region32: #{tpu_custom_call.1} parent=11 // pred_fallthru
          _
        // Predicated region
        $region33: #{tpu_custom_call.1} parent=11 // pred_check
          %p356 = pneg %p174
        $region34: #{tpu_custom_call.1} parent=11 // pred_check_branch
          %358 = sbr.rel (%p356) target = $region36
        $region35: #{tpu_custom_call.1} parent=11 // pred_region
          _
        $region36: #{tpu_custom_call.1} parent=11 // pred_fallthru
          _
        // Predicated region
        $region37: #{tpu_custom_call.1} parent=11 // pred_check
          %p359 = pneg %p195
        $region38: #{tpu_custom_call.1} parent=11 // pred_check_branch
          %361 = sbr.rel (%p359) target = $region40
        $region39: #{tpu_custom_call.1} parent=11 // pred_region
          _
        $region40: #{tpu_custom_call.1} parent=11 // pred_fallthru
          _
        // Predicated region
        $region41: #{tpu_custom_call.1} parent=11 // pred_check
          %p362 = pneg %p216
        $region42: #{tpu_custom_call.1} parent=11 // pred_check_branch
          %364 = sbr.rel (%p362) target = $region44
        $region43: #{tpu_custom_call.1} parent=11 // pred_region
          _
        $region44: #{tpu_custom_call.1} parent=11 // pred_fallthru
          _
        // Predicated region
        $region45: #{tpu_custom_call.1} parent=11 // pred_check
          %p365 = pneg %p237
        $region46: #{tpu_custom_call.1} parent=11 // pred_check_branch
          %367 = sbr.rel (%p365) target = $region48
        $region47: #{tpu_custom_call.1} parent=11 // pred_region
          _
        $region48: #{tpu_custom_call.1} parent=11 // pred_fallthru
          _
        // Predicated region
        $region49: #{tpu_custom_call.1} parent=11 // pred_check
          %p368 = pneg %p258
        $region50: #{tpu_custom_call.1} parent=11 // pred_check_branch
          %370 = sbr.rel (%p368) target = $region52
        $region51: #{tpu_custom_call.1} parent=11 // pred_region
          _
        $region52: #{tpu_custom_call.1} parent=11 // pred_fallthru
          _
        // Predicated region
        $region53: #{tpu_custom_call.1} parent=11 // pred_check
          %p371 = pneg %p279
        $region54: #{tpu_custom_call.1} parent=11 // pred_check_branch
          %373 = sbr.rel (%p371) target = $region56
        $region55: #{tpu_custom_call.1} parent=11 // pred_region
          _
        $region56: #{tpu_custom_call.1} parent=11 // pred_fallthru
          _
        // Predicated region
        $region57: #{tpu_custom_call.1} parent=11 // pred_check
          %p374 = pneg %p300
        $region58: #{tpu_custom_call.1} parent=11 // pred_check_branch
          %376 = sbr.rel (%p374) target = $region60
        $region59: #{tpu_custom_call.1} parent=11 // pred_region
          _
        $region60: #{tpu_custom_call.1} parent=11 // pred_fallthru
          _
      $region12: #{tpu_custom_call.1} parent=5 // pred_fallthru
        _
      %p377 = scmp.lt.s32.totalorder %s22, 2
      // Predicated region
      $region61: #{tpu_custom_call.1} parent=5 // pred_check
        %p378 = pneg %p377
      $region62: #{tpu_custom_call.1} parent=5 // pred_check_branch
        %380 = sbr.rel (%p378) target = $region64
      $region63: #{tpu_custom_call.1} parent=5 // pred_region
        // Predicated region
        $region65: #{tpu_custom_call.1} parent=63 // pred_check
          %p381 = pneg %p42
        $region66: #{tpu_custom_call.1} parent=63 // pred_check_branch
          %383 = sbr.rel (%p381) target = $region68
        $region67: #{tpu_custom_call.1} parent=63 // pred_region
          %s384 = smul.u32 16, %s22
          %p385 = scmp.lt.s32.totalorder %s384, 31
          %s386 = scalar_select %p385, %s384, 31
          %s387 = smul.addr %s386, 8
          %s388 = scalar_lea.vmem %s0, %s387
          %s389 = smul.u32 16, %s22
        $region68: #{tpu_custom_call.1} parent=63 // pred_fallthru
          _
      $region64: #{tpu_custom_call.1} parent=5 // pred_fallthru
        _
      %p390 = scmp.le.s32.totalorder 1, %s22
      %p391 = scmp.lt.s32.totalorder %s22, 3
      %p392 = pnand %p390, %p391
      %p393 = pneg %p392
      // Predicated region
      $region69: #{tpu_custom_call.1} parent=5 // pred_check
        _
      $region70: #{tpu_custom_call.1} parent=5 // pred_check_branch
        %395 = sbr.rel (%p392) target = $region72
      $region71: #{tpu_custom_call.1} parent=5 // pred_region
        %s396 = ssub.s32 %s22, 1
        %s397 = smul.u32 16, %s27
        %p398 = scmp.lt.s32.totalorder %s397, 31
        %s399 = scalar_select %p398, %s397, 31
        %s400 = smul.addr %s399, 8
        %s401 = scalar_lea.vmem %s0, %s400
        %p402 = pneg %p48
        %p403 = pneg %p45
        %p404 = pneg %p69
        %p405 = pneg %p66
        %p406 = pneg %p90
        %p407 = pneg %p87
        %p408 = pneg %p111
        %p409 = pneg %p108
        %p410 = pneg %p132
        %p411 = pneg %p129
        %p412 = pneg %p153
        %p413 = pneg %p150
        %p414 = pneg %p174
        %p415 = pneg %p171
        %p416 = pneg %p195
        %p417 = pneg %p192
        %p418 = pneg %p216
        %p419 = pneg %p213
        %p420 = pneg %p237
        %p421 = pneg %p234
        %p422 = pneg %p258
        %p423 = pneg %p255
        %p424 = pneg %p279
        %p425 = pneg %p276
        %p426 = pneg %p300
        %p427 = pneg %p297
        %p428 = pneg %p326
        %p429 = pneg %p323
        %s430 = sand.u32 %s313, 1
        %s431 = scalar_lea.sflag [#allocation3], %s430
        %s432 = sand.u32 %s313, 1
        %s433 = smul.addr %s432, 128
        %s434 = scalar_lea.vmem [#allocation2], %s433
        %s435 = smul.u32 16, %s27
        %p436 = scmp.lt.s32.totalorder %s435, 31
        %s437 = scalar_select %p436, %s435, 31
        %s438 = smul.addr %s437, 8
        %s439 = scalar_lea.vmem %s0, %s438
        %s440 = smul.u32 16, %s27
        %s441 = smul.u32 16, %s27
        %v443 = vld [vmem:[%s439] sm:$0xff]
        %v444 = vld [vmem:[%s439 + $0x8] sm:$0xff]
        %v445 = vld [vmem:[%s439 + $0x10] sm:$0xff]
        %v446 = vld [vmem:[%s439 + $0x18] sm:$0xff]
        %v447 = vld [vmem:[%s439 + $0x20] sm:$0xff]
        %v448 = vld [vmem:[%s439 + $0x28] sm:$0xff]
        %v449 = vld [vmem:[%s439 + $0x30] sm:$0xff]
        %v450 = vld [vmem:[%s439 + $0x38] sm:$0xff]
        %v451 = vld [vmem:[%s439 + $0x40] sm:$0xff]
        %v452 = vld [vmem:[%s439 + $0x48] sm:$0xff]
        %v453 = vld [vmem:[%s439 + $0x50] sm:$0xff]
        %v454 = vld [vmem:[%s439 + $0x58] sm:$0xff]
        %v455 = vld [vmem:[%s439 + $0x60] sm:$0xff]
        %v456 = vld [vmem:[%s439 + $0x68] sm:$0xff]
        %v457 = vld [vmem:[%s439 + $0x70] sm:$0xff]
        %v458 = vld [vmem:[%s439 + $0x78] sm:$0xff]
        %vm459 = vcmask 130048
        %v460 = vsel %vm459, %v443, 0.0
        %461 = vadd.xlane.f32.xlu0 %v460
        %v462 = vpop.xlane.xlu0 %461
        %v463 = vsel %vm459, %v444, 0.0
        %464 = vadd.xlane.f32.xlu0 %v463
        %v465 = vpop.xlane.xlu0 %464
        %v466 = vsel %vm459, %v445, 0.0
        %467 = vadd.xlane.f32.xlu0 %v466
        %v468 = vpop.xlane.xlu0 %467
        %v469 = vsel %vm459, %v446, 0.0
        %470 = vadd.xlane.f32.xlu0 %v469
        %v471 = vpop.xlane.xlu0 %470
        %v472 = vsel %vm459, %v447, 0.0
        %473 = vadd.xlane.f32.xlu0 %v472
        %v474 = vpop.xlane.xlu0 %473
        %v475 = vsel %vm459, %v448, 0.0
        %476 = vadd.xlane.f32.xlu0 %v475
        %v477 = vpop.xlane.xlu0 %476
        %v478 = vsel %vm459, %v449, 0.0
        %479 = vadd.xlane.f32.xlu0 %v478
        %v480 = vpop.xlane.xlu0 %479
        %v481 = vsel %vm459, %v450, 0.0
        %482 = vadd.xlane.f32.xlu0 %v481
        %v483 = vpop.xlane.xlu0 %482
        %v484 = vsel %vm459, %v451, 0.0
        %485 = vadd.xlane.f32.xlu0 %v484
        %v486 = vpop.xlane.xlu0 %485
        %v487 = vsel %vm459, %v452, 0.0
        %488 = vadd.xlane.f32.xlu0 %v487
        %v489 = vpop.xlane.xlu0 %488
        %v490 = vsel %vm459, %v453, 0.0
        %491 = vadd.xlane.f32.xlu0 %v490
        %v492 = vpop.xlane.xlu0 %491
        %v493 = vsel %vm459, %v454, 0.0
        %494 = vadd.xlane.f32.xlu0 %v493
        %v495 = vpop.xlane.xlu0 %494
        %v496 = vsel %vm459, %v455, 0.0
        %497 = vadd.xlane.f32.xlu0 %v496
        %v498 = vpop.xlane.xlu0 %497
        %v499 = vsel %vm459, %v456, 0.0
        %500 = vadd.xlane.f32.xlu0 %v499
        %v501 = vpop.xlane.xlu0 %500
        %v502 = vsel %vm459, %v457, 0.0
        %503 = vadd.xlane.f32.xlu0 %v502
        %v504 = vpop.xlane.xlu0 %503
        %v505 = vsel %vm459, %v458, 0.0
        %506 = vadd.xlane.f32.xlu0 %v505
        %v507 = vpop.xlane.xlu0 %506
        %v508 = vrcp.pop 16.0
        %v509 = vmul.f32 %v462, %v508
        %v510 = vmul.f32 %v465, %v508
        %v511 = vmul.f32 %v468, %v508
        %v512 = vmul.f32 %v471, %v508
        %v513 = vmul.f32 %v474, %v508
        %v514 = vmul.f32 %v477, %v508
        %v515 = vmul.f32 %v480, %v508
        %v516 = vmul.f32 %v483, %v508
        %v517 = vmul.f32 %v486, %v508
        %v518 = vmul.f32 %v489, %v508
        %v519 = vmul.f32 %v492, %v508
        %v520 = vmul.f32 %v495, %v508
        %v521 = vmul.f32 %v498, %v508
        %v522 = vmul.f32 %v501, %v508
        %v523 = vmul.f32 %v504, %v508
        %v524 = vmul.f32 %v507, %v508
        %v525 = vmul.f32 %v443, %v443
        %v526 = vmul.f32 %v444, %v444
        %v527 = vmul.f32 %v445, %v445
        %v528 = vmul.f32 %v446, %v446
        %v529 = vmul.f32 %v447, %v447
        %v530 = vmul.f32 %v448, %v448
        %v531 = vmul.f32 %v449, %v449
        %v532 = vmul.f32 %v450, %v450
        %v533 = vmul.f32 %v451, %v451
        %v534 = vmul.f32 %v452, %v452
        %v535 = vmul.f32 %v453, %v453
        %v536 = vmul.f32 %v454, %v454
        %v537 = vmul.f32 %v455, %v455
        %v538 = vmul.f32 %v456, %v456
        %v539 = vmul.f32 %v457, %v457
        %v540 = vmul.f32 %v458, %v458
        %v541 = vsel %vm459, %v525, 0.0
        %542 = vadd.xlane.f32.xlu0 %v541
        %v543 = vpop.xlane.xlu0 %542
        %v544 = vsel %vm459, %v526, 0.0
        %545 = vadd.xlane.f32.xlu0 %v544
        %v546 = vpop.xlane.xlu0 %545
        %v547 = vsel %vm459, %v527, 0.0
        %548 = vadd.xlane.f32.xlu0 %v547
        %v549 = vpop.xlane.xlu0 %548
        %v550 = vsel %vm459, %v528, 0.0
        %551 = vadd.xlane.f32.xlu0 %v550
        %v552 = vpop.xlane.xlu0 %551
        %v553 = vsel %vm459, %v529, 0.0
        %554 = vadd.xlane.f32.xlu0 %v553
        %v555 = vpop.xlane.xlu0 %554
        %v556 = vsel %vm459, %v530, 0.0
        %557 = vadd.xlane.f32.xlu0 %v556
        %v558 = vpop.xlane.xlu0 %557
        %v559 = vsel %vm459, %v531, 0.0
        %560 = vadd.xlane.f32.xlu0 %v559
        %v561 = vpop.xlane.xlu0 %560
        %v562 = vsel %vm459, %v532, 0.0
        %563 = vadd.xlane.f32.xlu0 %v562
        %v564 = vpop.xlane.xlu0 %563
        %v565 = vsel %vm459, %v533, 0.0
        %566 = vadd.xlane.f32.xlu0 %v565
        %v567 = vpop.xlane.xlu0 %566
        %v568 = vsel %vm459, %v534, 0.0
        %569 = vadd.xlane.f32.xlu0 %v568
        %v570 = vpop.xlane.xlu0 %569
        %v571 = vsel %vm459, %v535, 0.0
        %572 = vadd.xlane.f32.xlu0 %v571
        %v573 = vpop.xlane.xlu0 %572
        %v574 = vsel %vm459, %v536, 0.0
        %575 = vadd.xlane.f32.xlu0 %v574
        %v576 = vpop.xlane.xlu0 %575
        %v577 = vsel %vm459, %v537, 0.0
        %578 = vadd.xlane.f32.xlu0 %v577
        %v579 = vpop.xlane.xlu0 %578
        %v580 = vsel %vm459, %v538, 0.0
        %581 = vadd.xlane.f32.xlu0 %v580
        %v582 = vpop.xlane.xlu0 %581
        %v583 = vsel %vm459, %v539, 0.0
        %584 = vadd.xlane.f32.xlu0 %v583
        %v585 = vpop.xlane.xlu0 %584
        %v586 = vsel %vm459, %v540, 0.0
        %587 = vadd.xlane.f32.xlu0 %v586
        %v588 = vpop.xlane.xlu0 %587
        %v589 = vmul.f32 %v543, %v508
        %v590 = vmul.f32 %v546, %v508
        %v591 = vmul.f32 %v549, %v508
        %v592 = vmul.f32 %v552, %v508
        %v593 = vmul.f32 %v555, %v508
        %v594 = vmul.f32 %v558, %v508
        %v595 = vmul.f32 %v561, %v508
        %v596 = vmul.f32 %v564, %v508
        %v597 = vmul.f32 %v567, %v508
        %v598 = vmul.f32 %v570, %v508
        %v599 = vmul.f32 %v573, %v508
        %v600 = vmul.f32 %v576, %v508
        %v601 = vmul.f32 %v579, %v508
        %v602 = vmul.f32 %v582, %v508
        %v603 = vmul.f32 %v585, %v508
        %v604 = vmul.f32 %v588, %v508
        %v605 = vmul.f32 %v509, %v509
        %v606 = vmul.f32 %v510, %v510
        %v607 = vmul.f32 %v511, %v511
        %v608 = vmul.f32 %v512, %v512
        %v609 = vmul.f32 %v513, %v513
        %v610 = vmul.f32 %v514, %v514
        %v611 = vmul.f32 %v515, %v515
        %v612 = vmul.f32 %v516, %v516
        %v613 = vmul.f32 %v517, %v517
        %v614 = vmul.f32 %v518, %v518
        %v615 = vmul.f32 %v519, %v519
        %v616 = vmul.f32 %v520, %v520
        %v617 = vmul.f32 %v521, %v521
        %v618 = vmul.f32 %v522, %v522
        %v619 = vmul.f32 %v523, %v523
        %v620 = vmul.f32 %v524, %v524
        %v621 = vsub.f32 %v589, %v605
        %v622 = vsub.f32 %v590, %v606
        %v623 = vsub.f32 %v591, %v607
        %v624 = vsub.f32 %v592, %v608
        %v625 = vsub.f32 %v593, %v609
        %v626 = vsub.f32 %v594, %v610
        %v627 = vsub.f32 %v595, %v611
        %v628 = vsub.f32 %v596, %v612
        %v629 = vsub.f32 %v597, %v613
        %v630 = vsub.f32 %v598, %v614
        %v631 = vsub.f32 %v599, %v615
        %v632 = vsub.f32 %v600, %v616
        %v633 = vsub.f32 %v601, %v617
        %v634 = vsub.f32 %v602, %v618
        %v635 = vsub.f32 %v603, %v619
        %v636 = vsub.f32 %v604, %v620
        %v637 = vmax.f32 %v621, 0.0
        %v638 = vmax.f32 %v622, 0.0
        %v639 = vmax.f32 %v623, 0.0
        %v640 = vmax.f32 %v624, 0.0
        %v641 = vmax.f32 %v625, 0.0
        %v642 = vmax.f32 %v626, 0.0
        %v643 = vmax.f32 %v627, 0.0
        %v644 = vmax.f32 %v628, 0.0
        %v645 = vmax.f32 %v629, 0.0
        %v646 = vmax.f32 %v630, 0.0
        %v647 = vmax.f32 %v631, 0.0
        %v648 = vmax.f32 %v632, 0.0
        %v649 = vmax.f32 %v633, 0.0
        %v650 = vmax.f32 %v634, 0.0
        %v651 = vmax.f32 %v635, 0.0
        %v652 = vmax.f32 %v636, 0.0
        %v653 = vsub.f32 %v443, %v509
        %v654 = vsub.f32 %v444, %v510
        %v655 = vsub.f32 %v445, %v511
        %v656 = vsub.f32 %v446, %v512
        %v657 = vsub.f32 %v447, %v513
        %v658 = vsub.f32 %v448, %v514
        %v659 = vsub.f32 %v449, %v515
        %v660 = vsub.f32 %v450, %v516
        %v661 = vsub.f32 %v451, %v517
        %v662 = vsub.f32 %v452, %v518
        %v663 = vsub.f32 %v453, %v519
        %v664 = vsub.f32 %v454, %v520
        %v665 = vsub.f32 %v455, %v521
        %v666 = vsub.f32 %v456, %v522
        %v667 = vsub.f32 %v457, %v523
        %v668 = vsub.f32 %v458, %v524
        %v669 = vadd.f32 %v637, 1e-05
        %v670 = vadd.f32 %v638, 1e-05
        %v671 = vadd.f32 %v639, 1e-05
        %v672 = vadd.f32 %v640, 1e-05
        %v673 = vadd.f32 %v641, 1e-05
        %v674 = vadd.f32 %v642, 1e-05
        %v675 = vadd.f32 %v643, 1e-05
        %v676 = vadd.f32 %v644, 1e-05
        %v677 = vadd.f32 %v645, 1e-05
        %v678 = vadd.f32 %v646, 1e-05
        %v679 = vadd.f32 %v647, 1e-05
        %v680 = vadd.f32 %v648, 1e-05
        %v681 = vadd.f32 %v649, 1e-05
        %v682 = vadd.f32 %v650, 1e-05
        %v683 = vadd.f32 %v651, 1e-05
        %v684 = vadd.f32 %v652, 1e-05
        %v685 = vrsqrt.pop %v669
        %v686 = vrsqrt.pop %v670
        %v687 = vrsqrt.pop %v671
        %v688 = vrsqrt.pop %v672
        %v689 = vrsqrt.pop %v673
        %v690 = vrsqrt.pop %v674
        %v691 = vrsqrt.pop %v675
        %v692 = vrsqrt.pop %v676
        %v693 = vrsqrt.pop %v677
        %v694 = vrsqrt.pop %v678
        %v695 = vrsqrt.pop %v679
        %v696 = vrsqrt.pop %v680
        %v697 = vrsqrt.pop %v681
        %v698 = vrsqrt.pop %v682
        %v699 = vrsqrt.pop %v683
        %v700 = vrsqrt.pop %v684
        %v701 = vmul.f32 %v653, %v685
        %v702 = vmul.f32 %v654, %v686
        %v703 = vmul.f32 %v655, %v687
        %v704 = vmul.f32 %v656, %v688
        %v705 = vmul.f32 %v657, %v689
        %v706 = vmul.f32 %v658, %v690
        %v707 = vmul.f32 %v659, %v691
        %v708 = vmul.f32 %v660, %v692
        %v709 = vmul.f32 %v661, %v693
        %v710 = vmul.f32 %v662, %v694
        %v711 = vmul.f32 %v663, %v695
        %v712 = vmul.f32 %v664, %v696
        %v713 = vmul.f32 %v665, %v697
        %v714 = vmul.f32 %v666, %v698
        %v715 = vmul.f32 %v667, %v699
        %v716 = vmul.f32 %v668, %v700
        %v717 = vld [vmem:[%s1] sm:$0x1]
        %v719 = vlaneseq
        %v720 = vshrl.u32 %v719, 7
        %v721 = vsub.s32 0, %v720
        %v722 = vrot.slane %v717, %v721
        %v724 = vmul.f32 %v701, %v722
        %v725 = vmul.f32 %v702, %v722
        %v726 = vmul.f32 %v703, %v722
        %v727 = vmul.f32 %v704, %v722
        %v728 = vmul.f32 %v705, %v722
        %v729 = vmul.f32 %v706, %v722
        %v730 = vmul.f32 %v707, %v722
        %v731 = vmul.f32 %v708, %v722
        %v732 = vmul.f32 %v709, %v722
        %v733 = vmul.f32 %v710, %v722
        %v734 = vmul.f32 %v711, %v722
        %v735 = vmul.f32 %v712, %v722
        %v736 = vmul.f32 %v713, %v722
        %v737 = vmul.f32 %v714, %v722
        %v738 = vmul.f32 %v715, %v722
        %v739 = vmul.f32 %v716, %v722
        %v740 = vld [vmem:[%s2] sm:$0x1]
        %v742 = vlaneseq
        %v743 = vshrl.u32 %v742, 7
        %v744 = vsub.s32 0, %v743
        %v745 = vrot.slane %v740, %v744
        %v747 = vadd.f32 %v724, %v745
        %v748 = vadd.f32 %v725, %v745
        %v749 = vadd.f32 %v726, %v745
        %v750 = vadd.f32 %v727, %v745
        %v751 = vadd.f32 %v728, %v745
        %v752 = vadd.f32 %v729, %v745
        %v753 = vadd.f32 %v730, %v745
        %v754 = vadd.f32 %v731, %v745
        %v755 = vadd.f32 %v732, %v745
        %v756 = vadd.f32 %v733, %v745
        %v757 = vadd.f32 %v734, %v745
        %v758 = vadd.f32 %v735, %v745
        %v759 = vadd.f32 %v736, %v745
        %v760 = vadd.f32 %v737, %v745
        %v761 = vadd.f32 %v738, %v745
        %v762 = vadd.f32 %v739, %v745
        %779 = vrot.lane.b32.xlu0 %v747, 16
        %v780 = vpop.permute.xlu0 %779
        %781 = vrot.lane.b32.xlu0 %v748, 16
        %v782 = vpop.permute.xlu0 %781
        %783 = vrot.lane.b32.xlu0 %v749, 16
        %v784 = vpop.permute.xlu0 %783
        %785 = vrot.lane.b32.xlu0 %v750, 16
        %v786 = vpop.permute.xlu0 %785
        %787 = vrot.lane.b32.xlu0 %v751, 16
        %v788 = vpop.permute.xlu0 %787
        %789 = vrot.lane.b32.xlu0 %v752, 16
        %v790 = vpop.permute.xlu0 %789
        %791 = vrot.lane.b32.xlu0 %v753, 16
        %v792 = vpop.permute.xlu0 %791
        %793 = vrot.lane.b32.xlu0 %v754, 16
        %v794 = vpop.permute.xlu0 %793
        %795 = vrot.lane.b32.xlu0 %v755, 16
        %v796 = vpop.permute.xlu0 %795
        %797 = vrot.lane.b32.xlu0 %v756, 16
        %v798 = vpop.permute.xlu0 %797
        %799 = vrot.lane.b32.xlu0 %v757, 16
        %v800 = vpop.permute.xlu0 %799
        %801 = vrot.lane.b32.xlu0 %v758, 16
        %v802 = vpop.permute.xlu0 %801
        %803 = vrot.lane.b32.xlu0 %v759, 16
        %v804 = vpop.permute.xlu0 %803
        %805 = vrot.lane.b32.xlu0 %v760, 16
        %v806 = vpop.permute.xlu0 %805
        %807 = vrot.lane.b32.xlu0 %v761, 16
        %v808 = vpop.permute.xlu0 %807
        %809 = vrot.lane.b32.xlu0 %v762, 16
        %v810 = vpop.permute.xlu0 %809
        %827 = vrot.lane.b32.xlu0 %v747, 32
        %v828 = vpop.permute.xlu0 %827
        %829 = vrot.lane.b32.xlu0 %v748, 32
        %v830 = vpop.permute.xlu0 %829
        %831 = vrot.lane.b32.xlu0 %v749, 32
        %v832 = vpop.permute.xlu0 %831
        %833 = vrot.lane.b32.xlu0 %v750, 32
        %v834 = vpop.permute.xlu0 %833
        %835 = vrot.lane.b32.xlu0 %v751, 32
        %v836 = vpop.permute.xlu0 %835
        %837 = vrot.lane.b32.xlu0 %v752, 32
        %v838 = vpop.permute.xlu0 %837
        %839 = vrot.lane.b32.xlu0 %v753, 32
        %v840 = vpop.permute.xlu0 %839
        %841 = vrot.lane.b32.xlu0 %v754, 32
        %v842 = vpop.permute.xlu0 %841
        %843 = vrot.lane.b32.xlu0 %v755, 32
        %v844 = vpop.permute.xlu0 %843
        %845 = vrot.lane.b32.xlu0 %v756, 32
        %v846 = vpop.permute.xlu0 %845
        %847 = vrot.lane.b32.xlu0 %v757, 32
        %v848 = vpop.permute.xlu0 %847
        %849 = vrot.lane.b32.xlu0 %v758, 32
        %v850 = vpop.permute.xlu0 %849
        %851 = vrot.lane.b32.xlu0 %v759, 32
        %v852 = vpop.permute.xlu0 %851
        %853 = vrot.lane.b32.xlu0 %v760, 32
        %v854 = vpop.permute.xlu0 %853
        %855 = vrot.lane.b32.xlu0 %v761, 32
        %v856 = vpop.permute.xlu0 %855
        %857 = vrot.lane.b32.xlu0 %v762, 32
        %v858 = vpop.permute.xlu0 %857
        %875 = vrot.lane.b32.xlu0 %v747, 48
        %v876 = vpop.permute.xlu0 %875
        %877 = vrot.lane.b32.xlu0 %v748, 48
        %v878 = vpop.permute.xlu0 %877
        %879 = vrot.lane.b32.xlu0 %v749, 48
        %v880 = vpop.permute.xlu0 %879
        %881 = vrot.lane.b32.xlu0 %v750, 48
        %v882 = vpop.permute.xlu0 %881
        %883 = vrot.lane.b32.xlu0 %v751, 48
        %v884 = vpop.permute.xlu0 %883
        %885 = vrot.lane.b32.xlu0 %v752, 48
        %v886 = vpop.permute.xlu0 %885
        %887 = vrot.lane.b32.xlu0 %v753, 48
        %v888 = vpop.permute.xlu0 %887
        %889 = vrot.lane.b32.xlu0 %v754, 48
        %v890 = vpop.permute.xlu0 %889
        %891 = vrot.lane.b32.xlu0 %v755, 48
        %v892 = vpop.permute.xlu0 %891
        %893 = vrot.lane.b32.xlu0 %v756, 48
        %v894 = vpop.permute.xlu0 %893
        %895 = vrot.lane.b32.xlu0 %v757, 48
        %v896 = vpop.permute.xlu0 %895
        %897 = vrot.lane.b32.xlu0 %v758, 48
        %v898 = vpop.permute.xlu0 %897
        %899 = vrot.lane.b32.xlu0 %v759, 48
        %v900 = vpop.permute.xlu0 %899
        %901 = vrot.lane.b32.xlu0 %v760, 48
        %v902 = vpop.permute.xlu0 %901
        %903 = vrot.lane.b32.xlu0 %v761, 48
        %v904 = vpop.permute.xlu0 %903
        %905 = vrot.lane.b32.xlu0 %v762, 48
        %v906 = vpop.permute.xlu0 %905
        %923 = vrot.lane.b32.xlu0 %v747, 64
        %v924 = vpop.permute.xlu0 %923
        %925 = vrot.lane.b32.xlu0 %v748, 64
        %v926 = vpop.permute.xlu0 %925
        %927 = vrot.lane.b32.xlu0 %v749, 64
        %v928 = vpop.permute.xlu0 %927
        %929 = vrot.lane.b32.xlu0 %v750, 64
        %v930 = vpop.permute.xlu0 %929
        %931 = vrot.lane.b32.xlu0 %v751, 64
        %v932 = vpop.permute.xlu0 %931
        %933 = vrot.lane.b32.xlu0 %v752, 64
        %v934 = vpop.permute.xlu0 %933
        %935 = vrot.lane.b32.xlu0 %v753, 64
        %v936 = vpop.permute.xlu0 %935
        %937 = vrot.lane.b32.xlu0 %v754, 64
        %v938 = vpop.permute.xlu0 %937
        %939 = vrot.lane.b32.xlu0 %v755, 64
        %v940 = vpop.permute.xlu0 %939
        %941 = vrot.lane.b32.xlu0 %v756, 64
        %v942 = vpop.permute.xlu0 %941
        %943 = vrot.lane.b32.xlu0 %v757, 64
        %v944 = vpop.permute.xlu0 %943
        %945 = vrot.lane.b32.xlu0 %v758, 64
        %v946 = vpop.permute.xlu0 %945
        %947 = vrot.lane.b32.xlu0 %v759, 64
        %v948 = vpop.permute.xlu0 %947
        %949 = vrot.lane.b32.xlu0 %v760, 64
        %v950 = vpop.permute.xlu0 %949
        %951 = vrot.lane.b32.xlu0 %v761, 64
        %v952 = vpop.permute.xlu0 %951
        %953 = vrot.lane.b32.xlu0 %v762, 64
        %v954 = vpop.permute.xlu0 %953
        %971 = vrot.lane.b32.xlu0 %v747, 80
        %v972 = vpop.permute.xlu0 %971
        %973 = vrot.lane.b32.xlu0 %v748, 80
        %v974 = vpop.permute.xlu0 %973
        %975 = vrot.lane.b32.xlu0 %v749, 80
        %v976 = vpop.permute.xlu0 %975
        %977 = vrot.lane.b32.xlu0 %v750, 80
        %v978 = vpop.permute.xlu0 %977
        %979 = vrot.lane.b32.xlu0 %v751, 80
        %v980 = vpop.permute.xlu0 %979
        %981 = vrot.lane.b32.xlu0 %v752, 80
        %v982 = vpop.permute.xlu0 %981
        %983 = vrot.lane.b32.xlu0 %v753, 80
        %v984 = vpop.permute.xlu0 %983
        %985 = vrot.lane.b32.xlu0 %v754, 80
        %v986 = vpop.permute.xlu0 %985
        %987 = vrot.lane.b32.xlu0 %v755, 80
        %v988 = vpop.permute.xlu0 %987
        %989 = vrot.lane.b32.xlu0 %v756, 80
        %v990 = vpop.permute.xlu0 %989
        %991 = vrot.lane.b32.xlu0 %v757, 80
        %v992 = vpop.permute.xlu0 %991
        %993 = vrot.lane.b32.xlu0 %v758, 80
        %v994 = vpop.permute.xlu0 %993
        %995 = vrot.lane.b32.xlu0 %v759, 80
        %v996 = vpop.permute.xlu0 %995
        %997 = vrot.lane.b32.xlu0 %v760, 80
        %v998 = vpop.permute.xlu0 %997
        %999 = vrot.lane.b32.xlu0 %v761, 80
        %v1000 = vpop.permute.xlu0 %999
        %1001 = vrot.lane.b32.xlu0 %v762, 80
        %v1002 = vpop.permute.xlu0 %1001
        %1019 = vrot.lane.b32.xlu0 %v747, 96
        %v1020 = vpop.permute.xlu0 %1019
        %1021 = vrot.lane.b32.xlu0 %v748, 96
        %v1022 = vpop.permute.xlu0 %1021
        %1023 = vrot.lane.b32.xlu0 %v749, 96
        %v1024 = vpop.permute.xlu0 %1023
        %1025 = vrot.lane.b32.xlu0 %v750, 96
        %v1026 = vpop.permute.xlu0 %1025
        %1027 = vrot.lane.b32.xlu0 %v751, 96
        %v1028 = vpop.permute.xlu0 %1027
        %1029 = vrot.lane.b32.xlu0 %v752, 96
        %v1030 = vpop.permute.xlu0 %1029
        %1031 = vrot.lane.b32.xlu0 %v753, 96
        %v1032 = vpop.permute.xlu0 %1031
        %1033 = vrot.lane.b32.xlu0 %v754, 96
        %v1034 = vpop.permute.xlu0 %1033
        %1035 = vrot.lane.b32.xlu0 %v755, 96
        %v1036 = vpop.permute.xlu0 %1035
        %1037 = vrot.lane.b32.xlu0 %v756, 96
        %v1038 = vpop.permute.xlu0 %1037
        %1039 = vrot.lane.b32.xlu0 %v757, 96
        %v1040 = vpop.permute.xlu0 %1039
        %1041 = vrot.lane.b32.xlu0 %v758, 96
        %v1042 = vpop.permute.xlu0 %1041
        %1043 = vrot.lane.b32.xlu0 %v759, 96
        %v1044 = vpop.permute.xlu0 %1043
        %1045 = vrot.lane.b32.xlu0 %v760, 96
        %v1046 = vpop.permute.xlu0 %1045
        %1047 = vrot.lane.b32.xlu0 %v761, 96
        %v1048 = vpop.permute.xlu0 %1047
        %1049 = vrot.lane.b32.xlu0 %v762, 96
        %v1050 = vpop.permute.xlu0 %1049
        %1067 = vrot.lane.b32.xlu0 %v747, 112
        %v1068 = vpop.permute.xlu0 %1067
        %1069 = vrot.lane.b32.xlu0 %v748, 112
        %v1070 = vpop.permute.xlu0 %1069
        %1071 = vrot.lane.b32.xlu0 %v749, 112
        %v1072 = vpop.permute.xlu0 %1071
        %1073 = vrot.lane.b32.xlu0 %v750, 112
        %v1074 = vpop.permute.xlu0 %1073
        %1075 = vrot.lane.b32.xlu0 %v751, 112
        %v1076 = vpop.permute.xlu0 %1075
        %1077 = vrot.lane.b32.xlu0 %v752, 112
        %v1078 = vpop.permute.xlu0 %1077
        %1079 = vrot.lane.b32.xlu0 %v753, 112
        %v1080 = vpop.permute.xlu0 %1079
        %1081 = vrot.lane.b32.xlu0 %v754, 112
        %v1082 = vpop.permute.xlu0 %1081
        %1083 = vrot.lane.b32.xlu0 %v755, 112
        %v1084 = vpop.permute.xlu0 %1083
        %1085 = vrot.lane.b32.xlu0 %v756, 112
        %v1086 = vpop.permute.xlu0 %1085
        %1087 = vrot.lane.b32.xlu0 %v757, 112
        %v1088 = vpop.permute.xlu0 %1087
        %1089 = vrot.lane.b32.xlu0 %v758, 112
        %v1090 = vpop.permute.xlu0 %1089
        %1091 = vrot.lane.b32.xlu0 %v759, 112
        %v1092 = vpop.permute.xlu0 %1091
        %1093 = vrot.lane.b32.xlu0 %v760, 112
        %v1094 = vpop.permute.xlu0 %1093
        %1095 = vrot.lane.b32.xlu0 %v761, 112
        %v1096 = vpop.permute.xlu0 %1095
        %1097 = vrot.lane.b32.xlu0 %v762, 112
        %v1098 = vpop.permute.xlu0 %1097
        %v1115 = vsel %vm459, %v747, %v780
        %v1116 = vsel %vm459, %v748, %v782
        %v1117 = vsel %vm459, %v749, %v784
        %v1118 = vsel %vm459, %v750, %v786
        %v1119 = vsel %vm459, %v751, %v788
        %v1120 = vsel %vm459, %v752, %v790
        %v1121 = vsel %vm459, %v753, %v792
        %v1122 = vsel %vm459, %v754, %v794
        %v1123 = vsel %vm459, %v755, %v796
        %v1124 = vsel %vm459, %v756, %v798
        %v1125 = vsel %vm459, %v757, %v800
        %v1126 = vsel %vm459, %v758, %v802
        %v1127 = vsel %vm459, %v759, %v804
        %v1128 = vsel %vm459, %v760, %v806
        %v1129 = vsel %vm459, %v761, %v808
        %v1130 = vsel %vm459, %v762, %v810
        %vm1131 = vcmask 261120
        %v1132 = vsel %vm1131, %v1115, %v828
        %v1133 = vsel %vm1131, %v1116, %v830
        %v1134 = vsel %vm1131, %v1117, %v832
        %v1135 = vsel %vm1131, %v1118, %v834
        %v1136 = vsel %vm1131, %v1119, %v836
        %v1137 = vsel %vm1131, %v1120, %v838
        %v1138 = vsel %vm1131, %v1121, %v840
        %v1139 = vsel %vm1131, %v1122, %v842
        %v1140 = vsel %vm1131, %v1123, %v844
        %v1141 = vsel %vm1131, %v1124, %v846
        %v1142 = vsel %vm1131, %v1125, %v848
        %v1143 = vsel %vm1131, %v1126, %v850
        %v1144 = vsel %vm1131, %v1127, %v852
        %v1145 = vsel %vm1131, %v1128, %v854
        %v1146 = vsel %vm1131, %v1129, %v856
        %v1147 = vsel %vm1131, %v1130, %v858
        %vm1148 = vcmask 392192
        %v1149 = vsel %vm1148, %v1132, %v876
        %v1150 = vsel %vm1148, %v1133, %v878
        %v1151 = vsel %vm1148, %v1134, %v880
        %v1152 = vsel %vm1148, %v1135, %v882
        %v1153 = vsel %vm1148, %v1136, %v884
        %v1154 = vsel %vm1148, %v1137, %v886
        %v1155 = vsel %vm1148, %v1138, %v888
        %v1156 = vsel %vm1148, %v1139, %v890
        %v1157 = vsel %vm1148, %v1140, %v892
        %v1158 = vsel %vm1148, %v1141, %v894
        %v1159 = vsel %vm1148, %v1142, %v896
        %v1160 = vsel %vm1148, %v1143, %v898
        %v1161 = vsel %vm1148, %v1144, %v900
        %v1162 = vsel %vm1148, %v1145, %v902
        %v1163 = vsel %vm1148, %v1146, %v904
        %v1164 = vsel %vm1148, %v1147, %v906
        %vm1165 = vcmask 523264
        %v1166 = vsel %vm1165, %v1149, %v924
        %v1167 = vsel %vm1165, %v1150, %v926
        %v1168 = vsel %vm1165, %v1151, %v928
        %v1169 = vsel %vm1165, %v1152, %v930
        %v1170 = vsel %vm1165, %v1153, %v932
        %v1171 = vsel %vm1165, %v1154, %v934
        %v1172 = vsel %vm1165, %v1155, %v936
        %v1173 = vsel %vm1165, %v1156, %v938
        %v1174 = vsel %vm1165, %v1157, %v940
        %v1175 = vsel %vm1165, %v1158, %v942
        %v1176 = vsel %vm1165, %v1159, %v944
        %v1177 = vsel %vm1165, %v1160, %v946
        %v1178 = vsel %vm1165, %v1161, %v948
        %v1179 = vsel %vm1165, %v1162, %v950
        %v1180 = vsel %vm1165, %v1163, %v952
        %v1181 = vsel %vm1165, %v1164, %v954
        %vm1182 = vcmask 654336
        %v1183 = vsel %vm1182, %v1166, %v972
        %v1184 = vsel %vm1182, %v1167, %v974
        %v1185 = vsel %vm1182, %v1168, %v976
        %v1186 = vsel %vm1182, %v1169, %v978
        %v1187 = vsel %vm1182, %v1170, %v980
        %v1188 = vsel %vm1182, %v1171, %v982
        %v1189 = vsel %vm1182, %v1172, %v984
        %v1190 = vsel %vm1182, %v1173, %v986
        %v1191 = vsel %vm1182, %v1174, %v988
        %v1192 = vsel %vm1182, %v1175, %v990
        %v1193 = vsel %vm1182, %v1176, %v992
        %v1194 = vsel %vm1182, %v1177, %v994
        %v1195 = vsel %vm1182, %v1178, %v996
        %v1196 = vsel %vm1182, %v1179, %v998
        %v1197 = vsel %vm1182, %v1180, %v1000
        %v1198 = vsel %vm1182, %v1181, %v1002
        %vm1199 = vcmask 785408
        %v1200 = vsel %vm1199, %v1183, %v1020
        %v1201 = vsel %vm1199, %v1184, %v1022
        %v1202 = vsel %vm1199, %v1185, %v1024
        %v1203 = vsel %vm1199, %v1186, %v1026
        %v1204 = vsel %vm1199, %v1187, %v1028
        %v1205 = vsel %vm1199, %v1188, %v1030
        %v1206 = vsel %vm1199, %v1189, %v1032
        %v1207 = vsel %vm1199, %v1190, %v1034
        %v1208 = vsel %vm1199, %v1191, %v1036
        %v1209 = vsel %vm1199, %v1192, %v1038
        %v1210 = vsel %vm1199, %v1193, %v1040
        %v1211 = vsel %vm1199, %v1194, %v1042
        %v1212 = vsel %vm1199, %v1195, %v1044
        %v1213 = vsel %vm1199, %v1196, %v1046
        %v1214 = vsel %vm1199, %v1197, %v1048
        %v1215 = vsel %vm1199, %v1198, %v1050
        %vm1216 = vcmask 916480
        %v1217 = vsel %vm1216, %v1200, %v1068
        %v1218 = vsel %vm1216, %v1201, %v1070
        %v1219 = vsel %vm1216, %v1202, %v1072
        %v1220 = vsel %vm1216, %v1203, %v1074
        %v1221 = vsel %vm1216, %v1204, %v1076
        %v1222 = vsel %vm1216, %v1205, %v1078
        %v1223 = vsel %vm1216, %v1206, %v1080
        %v1224 = vsel %vm1216, %v1207, %v1082
        %v1225 = vsel %vm1216, %v1208, %v1084
        %v1226 = vsel %vm1216, %v1209, %v1086
        %v1227 = vsel %vm1216, %v1210, %v1088
        %v1228 = vsel %vm1216, %v1211, %v1090
        %v1229 = vsel %vm1216, %v1212, %v1092
        %v1230 = vsel %vm1216, %v1213, %v1094
        %v1231 = vsel %vm1216, %v1214, %v1096
        %v1232 = vsel %vm1216, %v1215, %v1098
        %v1233 = vld [vmem:[%s3] sm:$0x1]
        %v1235 = vlaneseq
        %v1236 = vshrl.u32 %v1235, 7
        %v1237 = vsub.s32 0, %v1236
        %v1238 = vrot.slane %v1233, %v1237
        %v1240 = vsub.f32 %v1217, %v1238
        %v1241 = vsub.f32 %v1218, %v1238
        %v1242 = vsub.f32 %v1219, %v1238
        %v1243 = vsub.f32 %v1220, %v1238
        %v1244 = vsub.f32 %v1221, %v1238
        %v1245 = vsub.f32 %v1222, %v1238
        %v1246 = vsub.f32 %v1223, %v1238
        %v1247 = vsub.f32 %v1224, %v1238
        %v1248 = vsub.f32 %v1225, %v1238
        %v1249 = vsub.f32 %v1226, %v1238
        %v1250 = vsub.f32 %v1227, %v1238
        %v1251 = vsub.f32 %v1228, %v1238
        %v1252 = vsub.f32 %v1229, %v1238
        %v1253 = vsub.f32 %v1230, %v1238
        %v1254 = vsub.f32 %v1231, %v1238
        %v1255 = vsub.f32 %v1232, %v1238
        %v1256 = vmax.f32 %v1240, 0.0
        %v1257 = vmax.f32 %v1241, 0.0
        %v1258 = vmax.f32 %v1242, 0.0
        %v1259 = vmax.f32 %v1243, 0.0
        %v1260 = vmax.f32 %v1244, 0.0
        %v1261 = vmax.f32 %v1245, 0.0
        %v1262 = vmax.f32 %v1246, 0.0
        %v1263 = vmax.f32 %v1247, 0.0
        %v1264 = vmax.f32 %v1248, 0.0
        %v1265 = vmax.f32 %v1249, 0.0
        %v1266 = vmax.f32 %v1250, 0.0
        %v1267 = vmax.f32 %v1251, 0.0
        %v1268 = vmax.f32 %v1252, 0.0
        %v1269 = vmax.f32 %v1253, 0.0
        %v1270 = vmax.f32 %v1254, 0.0
        %v1271 = vmax.f32 %v1255, 0.0
        %v1272 = vld [vmem:[%s4] sm:$0x1]
        %v1274 = vlaneseq
        %v1275 = vshrl.u32 %v1274, 7
        %v1276 = vsub.s32 0, %v1275
        %v1277 = vrot.slane %v1272, %v1276
        %v1279 = vsub.f32 %v1277, %v1217
        %v1280 = vsub.f32 %v1277, %v1218
        %v1281 = vsub.f32 %v1277, %v1219
        %v1282 = vsub.f32 %v1277, %v1220
        %v1283 = vsub.f32 %v1277, %v1221
        %v1284 = vsub.f32 %v1277, %v1222
        %v1285 = vsub.f32 %v1277, %v1223
        %v1286 = vsub.f32 %v1277, %v1224
        %v1287 = vsub.f32 %v1277, %v1225
        %v1288 = vsub.f32 %v1277, %v1226
        %v1289 = vsub.f32 %v1277, %v1227
        %v1290 = vsub.f32 %v1277, %v1228
        %v1291 = vsub.f32 %v1277, %v1229
        %v1292 = vsub.f32 %v1277, %v1230
        %v1293 = vsub.f32 %v1277, %v1231
        %v1294 = vsub.f32 %v1277, %v1232
        %v1295 = vmax.f32 %v1279, 0.0
        %v1296 = vmax.f32 %v1280, 0.0
        %v1297 = vmax.f32 %v1281, 0.0
        %v1298 = vmax.f32 %v1282, 0.0
        %v1299 = vmax.f32 %v1283, 0.0
        %v1300 = vmax.f32 %v1284, 0.0
        %v1301 = vmax.f32 %v1285, 0.0
        %v1302 = vmax.f32 %v1286, 0.0
        %v1303 = vmax.f32 %v1287, 0.0
        %v1304 = vmax.f32 %v1288, 0.0
        %v1305 = vmax.f32 %v1289, 0.0
        %v1306 = vmax.f32 %v1290, 0.0
        %v1307 = vmax.f32 %v1291, 0.0
        %v1308 = vmax.f32 %v1292, 0.0
        %v1309 = vmax.f32 %v1293, 0.0
        %v1310 = vmax.f32 %v1294, 0.0
        %v1311 = vmul.f32 %v1256, %v1295
        %v1312 = vmul.f32 %v1257, %v1296
        %v1313 = vmul.f32 %v1258, %v1297
        %v1314 = vmul.f32 %v1259, %v1298
        %v1315 = vmul.f32 %v1260, %v1299
        %v1316 = vmul.f32 %v1261, %v1300
        %v1317 = vmul.f32 %v1262, %v1301
        %v1318 = vmul.f32 %v1263, %v1302
        %v1319 = vmul.f32 %v1264, %v1303
        %v1320 = vmul.f32 %v1265, %v1304
        %v1321 = vmul.f32 %v1266, %v1305
        %v1322 = vmul.f32 %v1267, %v1306
        %v1323 = vmul.f32 %v1268, %v1307
        %v1324 = vmul.f32 %v1269, %v1308
        %v1325 = vmul.f32 %v1270, %v1309
        %v1326 = vmul.f32 %v1271, %v1310
        %v1327 = vmul.f32 %v1311, %v1311
        %v1328 = vmul.f32 %v1312, %v1312
        %v1329 = vmul.f32 %v1313, %v1313
        %v1330 = vmul.f32 %v1314, %v1314
        %v1331 = vmul.f32 %v1315, %v1315
        %v1332 = vmul.f32 %v1316, %v1316
        %v1333 = vmul.f32 %v1317, %v1317
        %v1334 = vmul.f32 %v1318, %v1318
        %v1335 = vmul.f32 %v1319, %v1319
        %v1336 = vmul.f32 %v1320, %v1320
        %v1337 = vmul.f32 %v1321, %v1321
        %v1338 = vmul.f32 %v1322, %v1322
        %v1339 = vmul.f32 %v1323, %v1323
        %v1340 = vmul.f32 %v1324, %v1324
        %v1341 = vmul.f32 %v1325, %v1325
        %v1342 = vmul.f32 %v1326, %v1326
        %v1343 = vpack.c.bf16 %v1328, %v1327
        %v1344 = vpack.c.bf16 %v1330, %v1329
        %v1345 = vpack.c.bf16 %v1332, %v1331
        %v1346 = vpack.c.bf16 %v1334, %v1333
        %v1347 = vpack.c.bf16 %v1336, %v1335
        %v1348 = vpack.c.bf16 %v1338, %v1337
        %v1349 = vpack.c.bf16 %v1340, %v1339
        %v1350 = vpack.c.bf16 %v1342, %v1341
        %v1351 = vld [vmem:[%s5] sm:$0xf]
        %v1352 = vld [vmem:[%s5 + $0x4] sm:$0xf]
        %v1353 = vld [vmem:[%s5 + $0x8] sm:$0xf]
        %v1354 = vld [vmem:[%s5 + $0xc] sm:$0xf]
        %v1355 = vld [vmem:[%s5 + $0x10] sm:$0xf]
        %v1356 = vld [vmem:[%s5 + $0x14] sm:$0xf]
        %v1357 = vld [vmem:[%s5 + $0x18] sm:$0xf]
        %v1358 = vld [vmem:[%s5 + $0x1c] sm:$0xf]
        %v1359 = vld [vmem:[%s5 + $0x20] sm:$0xf]
        %v1360 = vld [vmem:[%s5 + $0x24] sm:$0xf]
        %v1361 = vld [vmem:[%s5 + $0x28] sm:$0xf]
        %v1362 = vld [vmem:[%s5 + $0x2c] sm:$0xf]
        %v1363 = vld [vmem:[%s5 + $0x30] sm:$0xf]
        %v1364 = vld [vmem:[%s5 + $0x34] sm:$0xf]
        %v1365 = vld [vmem:[%s5 + $0x38] sm:$0xf]
        %v1366 = vld [vmem:[%s5 + $0x3c] sm:$0xf]
        %v1367 = vld [vmem:[%s6] sm:$0x1]
        %v1369 = vlaneseq
        %v1370 = vshrl.u32 %v1369, 7
        %v1371 = vsub.s32 0, %v1370
        %v1372 = vrot.slane %v1367, %v1371
        %v1390 = vunpack.c.l.b16 %v1351
        %v1391 = vunpack.c.l.b16 %v1352
        %v1392 = vunpack.c.l.b16 %v1353
        %v1393 = vunpack.c.l.b16 %v1354
        %v1394 = vunpack.c.l.b16 %v1355
        %v1395 = vunpack.c.l.b16 %v1356
        %v1396 = vunpack.c.l.b16 %v1357
        %v1397 = vunpack.c.l.b16 %v1358
        %v1398 = vunpack.c.l.b16 %v1359
        %v1399 = vunpack.c.l.b16 %v1360
        %v1400 = vunpack.c.l.b16 %v1361
        %v1401 = vunpack.c.l.b16 %v1362
        %v1402 = vunpack.c.l.b16 %v1363
        %v1403 = vunpack.c.l.b16 %v1364
        %v1404 = vunpack.c.l.b16 %v1365
        %v1405 = vunpack.c.l.b16 %v1366
        %v1406 = vpack.c.b16 %v1391, %v1390
        %v1407 = vpack.c.b16 %v1393, %v1392
        %v1408 = vpack.c.b16 %v1395, %v1394
        %v1409 = vpack.c.b16 %v1397, %v1396
        %v1410 = vpack.c.b16 %v1399, %v1398
        %v1411 = vpack.c.b16 %v1401, %v1400
        %v1412 = vpack.c.b16 %v1403, %v1402
        %v1413 = vpack.c.b16 %v1405, %v1404
        %1422 = vmatprep.subr.bf16.mxu0 0
        %1423 = vmatpush1.bf16.msra.mxu0 %v1413
        %1424 = vmatprep.subr.bf16.mxu0 0
        %1425 = vmatpush1.bf16.msra.mxu0 %v1412
        %1426 = vmatprep.subr.bf16.mxu0 0
        %1427 = vmatpush1.bf16.msra.mxu0 %v1411
        %1428 = vmatprep.subr.bf16.mxu0 0
        %1429 = vmatpush1.bf16.msra.mxu0 %v1410
        %1430 = vmatprep.subr.bf16.mxu0 0
        %1431 = vmatpush1.bf16.msra.mxu0 %v1409
        %1432 = vmatprep.subr.bf16.mxu0 0
        %1433 = vmatpush1.bf16.msra.mxu0 %v1408
        %1434 = vmatprep.subr.bf16.mxu0 0
        %1435 = vmatpush1.bf16.msra.mxu0 %v1407
        %1436 = vmatprep.subr.bf16.mxu0 0
        %1437 = vmatpush1.bf16.msra.mxu0 %v1406
        %1438 = vmatprep.subr.bf16.mxu0 0
        %1439 = vmatpush2.bf16.msra.mxu0 0
        %1440 = vmatprep.subr.bf16.mxu0 0
        %1441 = vmatpush2.bf16.msra.mxu0 0
        %1442 = vmatprep.subr.bf16.mxu0 0
        %1443 = vmatpush2.bf16.msra.mxu0 0
        %1444 = vmatprep.subr.bf16.mxu0 0
        %1445 = vmatpush2.bf16.msra.mxu0 0
        %1446 = vmatprep.subr.bf16.mxu0 0
        %1447 = vmatpush2.bf16.msra.mxu0 0
        %1448 = vmatprep.subr.bf16.mxu0 0
        %1449 = vmatpush2.bf16.msra.mxu0 0
        %1450 = vmatprep.subr.bf16.mxu0 0
        %1451 = vmatpush2.bf16.msra.mxu0 0
        %1452 = vmatprep.subr.bf16.mxu0 0
        %1453 = vmatpush2.bf16.msra.mxu0 0
        %1454 = vmatprep.mubr.bf16.mxu0 0
        %1455 = vmatmul.mubr.bf16.gmra.mxu0 %v1343
        %v1456 = vpop.f32.mrf.mxu0
        %v1457 = vadd.f32 %v1372, %v1456
        %v1458 = vpop.f32.mrf.mxu0
        %v1459 = vpop.f32.mrf.mxu0
        %v1460 = vadd.f32 %v1372, %v1459
        %v1461 = vpop.f32.mrf.mxu0
        %1462 = vmatprep.mubr.bf16.mxu0 0
        %1463 = vmatmul.mubr.bf16.gmra.mxu0 %v1344
        %v1464 = vpop.f32.mrf.mxu0
        %v1465 = vadd.f32 %v1372, %v1464
        %v1466 = vpop.f32.mrf.mxu0
        %v1467 = vpop.f32.mrf.mxu0
        %v1468 = vadd.f32 %v1372, %v1467
        %v1469 = vpop.f32.mrf.mxu0
        %1470 = vmatprep.mubr.bf16.mxu0 0
        %1471 = vmatmul.mubr.bf16.gmra.mxu0 %v1345
        %v1472 = vpop.f32.mrf.mxu0
        %v1473 = vadd.f32 %v1372, %v1472
        %v1474 = vpop.f32.mrf.mxu0
        %v1475 = vpop.f32.mrf.mxu0
        %v1476 = vadd.f32 %v1372, %v1475
        %v1477 = vpop.f32.mrf.mxu0
        %1478 = vmatprep.mubr.bf16.mxu0 0
        %1479 = vmatmul.mubr.bf16.gmra.mxu0 %v1346
        %v1480 = vpop.f32.mrf.mxu0
        %v1481 = vadd.f32 %v1372, %v1480
        %v1482 = vpop.f32.mrf.mxu0
        %v1483 = vpop.f32.mrf.mxu0
        %v1484 = vadd.f32 %v1372, %v1483
        %v1485 = vpop.f32.mrf.mxu0
        %1486 = vmatprep.mubr.bf16.mxu0 0
        %1487 = vmatmul.mubr.bf16.gmra.mxu0 %v1347
        %v1488 = vpop.f32.mrf.mxu0
        %v1489 = vadd.f32 %v1372, %v1488
        %v1490 = vpop.f32.mrf.mxu0
        %v1491 = vpop.f32.mrf.mxu0
        %v1492 = vadd.f32 %v1372, %v1491
        %v1493 = vpop.f32.mrf.mxu0
        %1494 = vmatprep.mubr.bf16.mxu0 0
        %1495 = vmatmul.mubr.bf16.gmra.mxu0 %v1348
        %v1496 = vpop.f32.mrf.mxu0
        %v1497 = vadd.f32 %v1372, %v1496
        %v1498 = vpop.f32.mrf.mxu0
        %v1499 = vpop.f32.mrf.mxu0
        %v1500 = vadd.f32 %v1372, %v1499
        %v1501 = vpop.f32.mrf.mxu0
        %1502 = vmatprep.mubr.bf16.mxu0 0
        %1503 = vmatmul.mubr.bf16.gmra.mxu0 %v1349
        %v1504 = vpop.f32.mrf.mxu0
        %v1505 = vadd.f32 %v1372, %v1504
        %v1506 = vpop.f32.mrf.mxu0
        %v1507 = vpop.f32.mrf.mxu0
        %v1508 = vadd.f32 %v1372, %v1507
        %v1509 = vpop.f32.mrf.mxu0
        %1510 = vmatprep.mubr.bf16.mxu0 0
        %1511 = vmatmul.mubr.bf16.gmra.mxu0 %v1350
        %v1512 = vpop.f32.mrf.mxu0
        %v1513 = vadd.f32 %v1372, %v1512
        %v1514 = vpop.f32.mrf.mxu0
        %v1515 = vpop.f32.mrf.mxu0
        %v1516 = vadd.f32 %v1372, %v1515
        %v1517 = vpop.f32.mrf.mxu0
        %1518 = vdwg.mxu0
        %v1519 = vsel %vm1131, %v1457, 0.0
        %1520 = vadd.xlane.f32.xlu0 %v1519
        %v1521 = vpop.xlane.xlu0 %1520
        %v1522 = vsel %vm1131, %v1460, 0.0
        %1523 = vadd.xlane.f32.xlu0 %v1522
        %v1524 = vpop.xlane.xlu0 %1523
        %v1525 = vsel %vm1131, %v1465, 0.0
        %1526 = vadd.xlane.f32.xlu0 %v1525
        %v1527 = vpop.xlane.xlu0 %1526
        %v1528 = vsel %vm1131, %v1468, 0.0
        %1529 = vadd.xlane.f32.xlu0 %v1528
        %v1530 = vpop.xlane.xlu0 %1529
        %v1531 = vsel %vm1131, %v1473, 0.0
        %1532 = vadd.xlane.f32.xlu0 %v1531
        %v1533 = vpop.xlane.xlu0 %1532
        %v1534 = vsel %vm1131, %v1476, 0.0
        %1535 = vadd.xlane.f32.xlu0 %v1534
        %v1536 = vpop.xlane.xlu0 %1535
        %v1537 = vsel %vm1131, %v1481, 0.0
        %1538 = vadd.xlane.f32.xlu0 %v1537
        %v1539 = vpop.xlane.xlu0 %1538
        %v1540 = vsel %vm1131, %v1484, 0.0
        %1541 = vadd.xlane.f32.xlu0 %v1540
        %v1542 = vpop.xlane.xlu0 %1541
        %v1543 = vsel %vm1131, %v1489, 0.0
        %1544 = vadd.xlane.f32.xlu0 %v1543
        %v1545 = vpop.xlane.xlu0 %1544
        %v1546 = vsel %vm1131, %v1492, 0.0
        %1547 = vadd.xlane.f32.xlu0 %v1546
        %v1548 = vpop.xlane.xlu0 %1547
        %v1549 = vsel %vm1131, %v1497, 0.0
        %1550 = vadd.xlane.f32.xlu0 %v1549
        %v1551 = vpop.xlane.xlu0 %1550
        %v1552 = vsel %vm1131, %v1500, 0.0
        %1553 = vadd.xlane.f32.xlu0 %v1552
        %v1554 = vpop.xlane.xlu0 %1553
        %v1555 = vsel %vm1131, %v1505, 0.0
        %1556 = vadd.xlane.f32.xlu0 %v1555
        %v1557 = vpop.xlane.xlu0 %1556
        %v1558 = vsel %vm1131, %v1508, 0.0
        %1559 = vadd.xlane.f32.xlu0 %v1558
        %v1560 = vpop.xlane.xlu0 %1559
        %v1561 = vsel %vm1131, %v1513, 0.0
        %1562 = vadd.xlane.f32.xlu0 %v1561
        %v1563 = vpop.xlane.xlu0 %1562
        %v1564 = vsel %vm1131, %v1516, 0.0
        %1565 = vadd.xlane.f32.xlu0 %v1564
        %v1566 = vpop.xlane.xlu0 %1565
        %v1567 = vrcp.pop 32.0
        %v1568 = vmul.f32 %v1521, %v1567
        %v1569 = vmul.f32 %v1524, %v1567
        %v1570 = vmul.f32 %v1527, %v1567
        %v1571 = vmul.f32 %v1530, %v1567
        %v1572 = vmul.f32 %v1533, %v1567
        %v1573 = vmul.f32 %v1536, %v1567
        %v1574 = vmul.f32 %v1539, %v1567
        %v1575 = vmul.f32 %v1542, %v1567
        %v1576 = vmul.f32 %v1545, %v1567
        %v1577 = vmul.f32 %v1548, %v1567
        %v1578 = vmul.f32 %v1551, %v1567
        %v1579 = vmul.f32 %v1554, %v1567
        %v1580 = vmul.f32 %v1557, %v1567
        %v1581 = vmul.f32 %v1560, %v1567
        %v1582 = vmul.f32 %v1563, %v1567
        %v1583 = vmul.f32 %v1566, %v1567
        %v1584 = vmul.f32 %v1457, %v1457
        %v1585 = vmul.f32 %v1460, %v1460
        %v1586 = vmul.f32 %v1465, %v1465
        %v1587 = vmul.f32 %v1468, %v1468
        %v1588 = vmul.f32 %v1473, %v1473
        %v1589 = vmul.f32 %v1476, %v1476
        %v1590 = vmul.f32 %v1481, %v1481
        %v1591 = vmul.f32 %v1484, %v1484
        %v1592 = vmul.f32 %v1489, %v1489
        %v1593 = vmul.f32 %v1492, %v1492
        %v1594 = vmul.f32 %v1497, %v1497
        %v1595 = vmul.f32 %v1500, %v1500
        %v1596 = vmul.f32 %v1505, %v1505
        %v1597 = vmul.f32 %v1508, %v1508
        %v1598 = vmul.f32 %v1513, %v1513
        %v1599 = vmul.f32 %v1516, %v1516
        %v1600 = vsel %vm1131, %v1584, 0.0
        %1601 = vadd.xlane.f32.xlu0 %v1600
        %v1602 = vpop.xlane.xlu0 %1601
        %v1603 = vsel %vm1131, %v1585, 0.0
        %1604 = vadd.xlane.f32.xlu0 %v1603
        %v1605 = vpop.xlane.xlu0 %1604
        %v1606 = vsel %vm1131, %v1586, 0.0
        %1607 = vadd.xlane.f32.xlu0 %v1606
        %v1608 = vpop.xlane.xlu0 %1607
        %v1609 = vsel %vm1131, %v1587, 0.0
        %1610 = vadd.xlane.f32.xlu0 %v1609
        %v1611 = vpop.xlane.xlu0 %1610
        %v1612 = vsel %vm1131, %v1588, 0.0
        %1613 = vadd.xlane.f32.xlu0 %v1612
        %v1614 = vpop.xlane.xlu0 %1613
        %v1615 = vsel %vm1131, %v1589, 0.0
        %1616 = vadd.xlane.f32.xlu0 %v1615
        %v1617 = vpop.xlane.xlu0 %1616
        %v1618 = vsel %vm1131, %v1590, 0.0
        %1619 = vadd.xlane.f32.xlu0 %v1618
        %v1620 = vpop.xlane.xlu0 %1619
        %v1621 = vsel %vm1131, %v1591, 0.0
        %1622 = vadd.xlane.f32.xlu0 %v1621
        %v1623 = vpop.xlane.xlu0 %1622
        %v1624 = vsel %vm1131, %v1592, 0.0
        %1625 = vadd.xlane.f32.xlu0 %v1624
        %v1626 = vpop.xlane.xlu0 %1625
        %v1627 = vsel %vm1131, %v1593, 0.0
        %1628 = vadd.xlane.f32.xlu0 %v1627
        %v1629 = vpop.xlane.xlu0 %1628
        %v1630 = vsel %vm1131, %v1594, 0.0
        %1631 = vadd.xlane.f32.xlu0 %v1630
        %v1632 = vpop.xlane.xlu0 %1631
        %v1633 = vsel %vm1131, %v1595, 0.0
        %1634 = vadd.xlane.f32.xlu0 %v1633
        %v1635 = vpop.xlane.xlu0 %1634
        %v1636 = vsel %vm1131, %v1596, 0.0
        %1637 = vadd.xlane.f32.xlu0 %v1636
        %v1638 = vpop.xlane.xlu0 %1637
        %v1639 = vsel %vm1131, %v1597, 0.0
        %1640 = vadd.xlane.f32.xlu0 %v1639
        %v1641 = vpop.xlane.xlu0 %1640
        %v1642 = vsel %vm1131, %v1598, 0.0
        %1643 = vadd.xlane.f32.xlu0 %v1642
        %v1644 = vpop.xlane.xlu0 %1643
        %v1645 = vsel %vm1131, %v1599, 0.0
        %1646 = vadd.xlane.f32.xlu0 %v1645
        %v1647 = vpop.xlane.xlu0 %1646
        %v1648 = vmul.f32 %v1602, %v1567
        %v1649 = vmul.f32 %v1605, %v1567
        %v1650 = vmul.f32 %v1608, %v1567
        %v1651 = vmul.f32 %v1611, %v1567
        %v1652 = vmul.f32 %v1614, %v1567
        %v1653 = vmul.f32 %v1617, %v1567
        %v1654 = vmul.f32 %v1620, %v1567
        %v1655 = vmul.f32 %v1623, %v1567
        %v1656 = vmul.f32 %v1626, %v1567
        %v1657 = vmul.f32 %v1629, %v1567
        %v1658 = vmul.f32 %v1632, %v1567
        %v1659 = vmul.f32 %v1635, %v1567
        %v1660 = vmul.f32 %v1638, %v1567
        %v1661 = vmul.f32 %v1641, %v1567
        %v1662 = vmul.f32 %v1644, %v1567
        %v1663 = vmul.f32 %v1647, %v1567
        %v1664 = vmul.f32 %v1568, %v1568
        %v1665 = vmul.f32 %v1569, %v1569
        %v1666 = vmul.f32 %v1570, %v1570
        %v1667 = vmul.f32 %v1571, %v1571
        %v1668 = vmul.f32 %v1572, %v1572
        %v1669 = vmul.f32 %v1573, %v1573
        %v1670 = vmul.f32 %v1574, %v1574
        %v1671 = vmul.f32 %v1575, %v1575
        %v1672 = vmul.f32 %v1576, %v1576
        %v1673 = vmul.f32 %v1577, %v1577
        %v1674 = vmul.f32 %v1578, %v1578
        %v1675 = vmul.f32 %v1579, %v1579
        %v1676 = vmul.f32 %v1580, %v1580
        %v1677 = vmul.f32 %v1581, %v1581
        %v1678 = vmul.f32 %v1582, %v1582
        %v1679 = vmul.f32 %v1583, %v1583
        %v1680 = vsub.f32 %v1648, %v1664
        %v1681 = vsub.f32 %v1649, %v1665
        %v1682 = vsub.f32 %v1650, %v1666
        %v1683 = vsub.f32 %v1651, %v1667
        %v1684 = vsub.f32 %v1652, %v1668
        %v1685 = vsub.f32 %v1653, %v1669
        %v1686 = vsub.f32 %v1654, %v1670
        %v1687 = vsub.f32 %v1655, %v1671
        %v1688 = vsub.f32 %v1656, %v1672
        %v1689 = vsub.f32 %v1657, %v1673
        %v1690 = vsub.f32 %v1658, %v1674
        %v1691 = vsub.f32 %v1659, %v1675
        %v1692 = vsub.f32 %v1660, %v1676
        %v1693 = vsub.f32 %v1661, %v1677
        %v1694 = vsub.f32 %v1662, %v1678
        %v1695 = vsub.f32 %v1663, %v1679
        %v1696 = vmax.f32 %v1680, 0.0
        %v1697 = vmax.f32 %v1681, 0.0
        %v1698 = vmax.f32 %v1682, 0.0
        %v1699 = vmax.f32 %v1683, 0.0
        %v1700 = vmax.f32 %v1684, 0.0
        %v1701 = vmax.f32 %v1685, 0.0
        %v1702 = vmax.f32 %v1686, 0.0
        %v1703 = vmax.f32 %v1687, 0.0
        %v1704 = vmax.f32 %v1688, 0.0
        %v1705 = vmax.f32 %v1689, 0.0
        %v1706 = vmax.f32 %v1690, 0.0
        %v1707 = vmax.f32 %v1691, 0.0
        %v1708 = vmax.f32 %v1692, 0.0
        %v1709 = vmax.f32 %v1693, 0.0
        %v1710 = vmax.f32 %v1694, 0.0
        %v1711 = vmax.f32 %v1695, 0.0
        %v1712 = vsub.f32 %v1457, %v1568
        %v1713 = vsub.f32 %v1460, %v1569
        %v1714 = vsub.f32 %v1465, %v1570
        %v1715 = vsub.f32 %v1468, %v1571
        %v1716 = vsub.f32 %v1473, %v1572
        %v1717 = vsub.f32 %v1476, %v1573
        %v1718 = vsub.f32 %v1481, %v1574
        %v1719 = vsub.f32 %v1484, %v1575
        %v1720 = vsub.f32 %v1489, %v1576
        %v1721 = vsub.f32 %v1492, %v1577
        %v1722 = vsub.f32 %v1497, %v1578
        %v1723 = vsub.f32 %v1500, %v1579
        %v1724 = vsub.f32 %v1505, %v1580
        %v1725 = vsub.f32 %v1508, %v1581
        %v1726 = vsub.f32 %v1513, %v1582
        %v1727 = vsub.f32 %v1516, %v1583
        %v1728 = vadd.f32 %v1696, 1e-05
        %v1729 = vadd.f32 %v1697, 1e-05
        %v1730 = vadd.f32 %v1698, 1e-05
        %v1731 = vadd.f32 %v1699, 1e-05
        %v1732 = vadd.f32 %v1700, 1e-05
        %v1733 = vadd.f32 %v1701, 1e-05
        %v1734 = vadd.f32 %v1702, 1e-05
        %v1735 = vadd.f32 %v1703, 1e-05
        %v1736 = vadd.f32 %v1704, 1e-05
        %v1737 = vadd.f32 %v1705, 1e-05
        %v1738 = vadd.f32 %v1706, 1e-05
        %v1739 = vadd.f32 %v1707, 1e-05
        %v1740 = vadd.f32 %v1708, 1e-05
        %v1741 = vadd.f32 %v1709, 1e-05
        %v1742 = vadd.f32 %v1710, 1e-05
        %v1743 = vadd.f32 %v1711, 1e-05
        %v1744 = vrsqrt.pop %v1728
        %v1745 = vrsqrt.pop %v1729
        %v1746 = vrsqrt.pop %v1730
        %v1747 = vrsqrt.pop %v1731
        %v1748 = vrsqrt.pop %v1732
        %v1749 = vrsqrt.pop %v1733
        %v1750 = vrsqrt.pop %v1734
        %v1751 = vrsqrt.pop %v1735
        %v1752 = vrsqrt.pop %v1736
        %v1753 = vrsqrt.pop %v1737
        %v1754 = vrsqrt.pop %v1738
        %v1755 = vrsqrt.pop %v1739
        %v1756 = vrsqrt.pop %v1740
        %v1757 = vrsqrt.pop %v1741
        %v1758 = vrsqrt.pop %v1742
        %v1759 = vrsqrt.pop %v1743
        %v1760 = vmul.f32 %v1712, %v1744
        %v1761 = vmul.f32 %v1713, %v1745
        %v1762 = vmul.f32 %v1714, %v1746
        %v1763 = vmul.f32 %v1715, %v1747
        %v1764 = vmul.f32 %v1716, %v1748
        %v1765 = vmul.f32 %v1717, %v1749
        %v1766 = vmul.f32 %v1718, %v1750
        %v1767 = vmul.f32 %v1719, %v1751
        %v1768 = vmul.f32 %v1720, %v1752
        %v1769 = vmul.f32 %v1721, %v1753
        %v1770 = vmul.f32 %v1722, %v1754
        %v1771 = vmul.f32 %v1723, %v1755
        %v1772 = vmul.f32 %v1724, %v1756
        %v1773 = vmul.f32 %v1725, %v1757
        %v1774 = vmul.f32 %v1726, %v1758
        %v1775 = vmul.f32 %v1727, %v1759
        %v1776 = vld [vmem:[%s7] sm:$0x1]
        %v1778 = vlaneseq
        %v1779 = vshrl.u32 %v1778, 7
        %v1780 = vsub.s32 0, %v1779
        %v1781 = vrot.slane %v1776, %v1780
        %v1783 = vmul.f32 %v1760, %v1781
        %v1784 = vmul.f32 %v1761, %v1781
        %v1785 = vmul.f32 %v1762, %v1781
        %v1786 = vmul.f32 %v1763, %v1781
        %v1787 = vmul.f32 %v1764, %v1781
        %v1788 = vmul.f32 %v1765, %v1781
        %v1789 = vmul.f32 %v1766, %v1781
        %v1790 = vmul.f32 %v1767, %v1781
        %v1791 = vmul.f32 %v1768, %v1781
        %v1792 = vmul.f32 %v1769, %v1781
        %v1793 = vmul.f32 %v1770, %v1781
        %v1794 = vmul.f32 %v1771, %v1781
        %v1795 = vmul.f32 %v1772, %v1781
        %v1796 = vmul.f32 %v1773, %v1781
        %v1797 = vmul.f32 %v1774, %v1781
        %v1798 = vmul.f32 %v1775, %v1781
        %v1799 = vld [vmem:[%s8] sm:$0x1]
        %v1801 = vlaneseq
        %v1802 = vshrl.u32 %v1801, 7
        %v1803 = vsub.s32 0, %v1802
        %v1804 = vrot.slane %v1799, %v1803
        %v1806 = vadd.f32 %v1783, %v1804
        %v1807 = vadd.f32 %v1784, %v1804
        %v1808 = vadd.f32 %v1785, %v1804
        %v1809 = vadd.f32 %v1786, %v1804
        %v1810 = vadd.f32 %v1787, %v1804
        %v1811 = vadd.f32 %v1788, %v1804
        %v1812 = vadd.f32 %v1789, %v1804
        %v1813 = vadd.f32 %v1790, %v1804
        %v1814 = vadd.f32 %v1791, %v1804
        %v1815 = vadd.f32 %v1792, %v1804
        %v1816 = vadd.f32 %v1793, %v1804
        %v1817 = vadd.f32 %v1794, %v1804
        %v1818 = vadd.f32 %v1795, %v1804
        %v1819 = vadd.f32 %v1796, %v1804
        %v1820 = vadd.f32 %v1797, %v1804
        %v1821 = vadd.f32 %v1798, %v1804
        %1838 = vrot.lane.b32.xlu0 %v1806, 32
        %v1839 = vpop.permute.xlu0 %1838
        %1840 = vrot.lane.b32.xlu0 %v1807, 32
        %v1841 = vpop.permute.xlu0 %1840
        %1842 = vrot.lane.b32.xlu0 %v1808, 32
        %v1843 = vpop.permute.xlu0 %1842
        %1844 = vrot.lane.b32.xlu0 %v1809, 32
        %v1845 = vpop.permute.xlu0 %1844
        %1846 = vrot.lane.b32.xlu0 %v1810, 32
        %v1847 = vpop.permute.xlu0 %1846
        %1848 = vrot.lane.b32.xlu0 %v1811, 32
        %v1849 = vpop.permute.xlu0 %1848
        %1850 = vrot.lane.b32.xlu0 %v1812, 32
        %v1851 = vpop.permute.xlu0 %1850
        %1852 = vrot.lane.b32.xlu0 %v1813, 32
        %v1853 = vpop.permute.xlu0 %1852
        %1854 = vrot.lane.b32.xlu0 %v1814, 32
        %v1855 = vpop.permute.xlu0 %1854
        %1856 = vrot.lane.b32.xlu0 %v1815, 32
        %v1857 = vpop.permute.xlu0 %1856
        %1858 = vrot.lane.b32.xlu0 %v1816, 32
        %v1859 = vpop.permute.xlu0 %1858
        %1860 = vrot.lane.b32.xlu0 %v1817, 32
        %v1861 = vpop.permute.xlu0 %1860
        %1862 = vrot.lane.b32.xlu0 %v1818, 32
        %v1863 = vpop.permute.xlu0 %1862
        %1864 = vrot.lane.b32.xlu0 %v1819, 32
        %v1865 = vpop.permute.xlu0 %1864
        %1866 = vrot.lane.b32.xlu0 %v1820, 32
        %v1867 = vpop.permute.xlu0 %1866
        %1868 = vrot.lane.b32.xlu0 %v1821, 32
        %v1869 = vpop.permute.xlu0 %1868
        %1886 = vrot.lane.b32.xlu0 %v1806, 64
        %v1887 = vpop.permute.xlu0 %1886
        %1888 = vrot.lane.b32.xlu0 %v1807, 64
        %v1889 = vpop.permute.xlu0 %1888
        %1890 = vrot.lane.b32.xlu0 %v1808, 64
        %v1891 = vpop.permute.xlu0 %1890
        %1892 = vrot.lane.b32.xlu0 %v1809, 64
        %v1893 = vpop.permute.xlu0 %1892
        %1894 = vrot.lane.b32.xlu0 %v1810, 64
        %v1895 = vpop.permute.xlu0 %1894
        %1896 = vrot.lane.b32.xlu0 %v1811, 64
        %v1897 = vpop.permute.xlu0 %1896
        %1898 = vrot.lane.b32.xlu0 %v1812, 64
        %v1899 = vpop.permute.xlu0 %1898
        %1900 = vrot.lane.b32.xlu0 %v1813, 64
        %v1901 = vpop.permute.xlu0 %1900
        %1902 = vrot.lane.b32.xlu0 %v1814, 64
        %v1903 = vpop.permute.xlu0 %1902
        %1904 = vrot.lane.b32.xlu0 %v1815, 64
        %v1905 = vpop.permute.xlu0 %1904
        %1906 = vrot.lane.b32.xlu0 %v1816, 64
        %v1907 = vpop.permute.xlu0 %1906
        %1908 = vrot.lane.b32.xlu0 %v1817, 64
        %v1909 = vpop.permute.xlu0 %1908
        %1910 = vrot.lane.b32.xlu0 %v1818, 64
        %v1911 = vpop.permute.xlu0 %1910
        %1912 = vrot.lane.b32.xlu0 %v1819, 64
        %v1913 = vpop.permute.xlu0 %1912
        %1914 = vrot.lane.b32.xlu0 %v1820, 64
        %v1915 = vpop.permute.xlu0 %1914
        %1916 = vrot.lane.b32.xlu0 %v1821, 64
        %v1917 = vpop.permute.xlu0 %1916
        %1934 = vrot.lane.b32.xlu0 %v1806, 96
        %v1935 = vpop.permute.xlu0 %1934
        %1936 = vrot.lane.b32.xlu0 %v1807, 96
        %v1937 = vpop.permute.xlu0 %1936
        %1938 = vrot.lane.b32.xlu0 %v1808, 96
        %v1939 = vpop.permute.xlu0 %1938
        %1940 = vrot.lane.b32.xlu0 %v1809, 96
        %v1941 = vpop.permute.xlu0 %1940
        %1942 = vrot.lane.b32.xlu0 %v1810, 96
        %v1943 = vpop.permute.xlu0 %1942
        %1944 = vrot.lane.b32.xlu0 %v1811, 96
        %v1945 = vpop.permute.xlu0 %1944
        %1946 = vrot.lane.b32.xlu0 %v1812, 96
        %v1947 = vpop.permute.xlu0 %1946
        %1948 = vrot.lane.b32.xlu0 %v1813, 96
        %v1949 = vpop.permute.xlu0 %1948
        %1950 = vrot.lane.b32.xlu0 %v1814, 96
        %v1951 = vpop.permute.xlu0 %1950
        %1952 = vrot.lane.b32.xlu0 %v1815, 96
        %v1953 = vpop.permute.xlu0 %1952
        %1954 = vrot.lane.b32.xlu0 %v1816, 96
        %v1955 = vpop.permute.xlu0 %1954
        %1956 = vrot.lane.b32.xlu0 %v1817, 96
        %v1957 = vpop.permute.xlu0 %1956
        %1958 = vrot.lane.b32.xlu0 %v1818, 96
        %v1959 = vpop.permute.xlu0 %1958
        %1960 = vrot.lane.b32.xlu0 %v1819, 96
        %v1961 = vpop.permute.xlu0 %1960
        %1962 = vrot.lane.b32.xlu0 %v1820, 96
        %v1963 = vpop.permute.xlu0 %1962
        %1964 = vrot.lane.b32.xlu0 %v1821, 96
        %v1965 = vpop.permute.xlu0 %1964
        %v1982 = vsel %vm1131, %v1806, %v1839
        %v1983 = vsel %vm1131, %v1807, %v1841
        %v1984 = vsel %vm1131, %v1808, %v1843
        %v1985 = vsel %vm1131, %v1809, %v1845
        %v1986 = vsel %vm1131, %v1810, %v1847
        %v1987 = vsel %vm1131, %v1811, %v1849
        %v1988 = vsel %vm1131, %v1812, %v1851
        %v1989 = vsel %vm1131, %v1813, %v1853
        %v1990 = vsel %vm1131, %v1814, %v1855
        %v1991 = vsel %vm1131, %v1815, %v1857
        %v1992 = vsel %vm1131, %v1816, %v1859
        %v1993 = vsel %vm1131, %v1817, %v1861
        %v1994 = vsel %vm1131, %v1818, %v1863
        %v1995 = vsel %vm1131, %v1819, %v1865
        %v1996 = vsel %vm1131, %v1820, %v1867
        %v1997 = vsel %vm1131, %v1821, %v1869
        %v1998 = vsel %vm1165, %v1982, %v1887
        %v1999 = vsel %vm1165, %v1983, %v1889
        %v2000 = vsel %vm1165, %v1984, %v1891
        %v2001 = vsel %vm1165, %v1985, %v1893
        %v2002 = vsel %vm1165, %v1986, %v1895
        %v2003 = vsel %vm1165, %v1987, %v1897
        %v2004 = vsel %vm1165, %v1988, %v1899
        %v2005 = vsel %vm1165, %v1989, %v1901
        %v2006 = vsel %vm1165, %v1990, %v1903
        %v2007 = vsel %vm1165, %v1991, %v1905
        %v2008 = vsel %vm1165, %v1992, %v1907
        %v2009 = vsel %vm1165, %v1993, %v1909
        %v2010 = vsel %vm1165, %v1994, %v1911
        %v2011 = vsel %vm1165, %v1995, %v1913
        %v2012 = vsel %vm1165, %v1996, %v1915
        %v2013 = vsel %vm1165, %v1997, %v1917
        %v2014 = vsel %vm1199, %v1998, %v1935
        %v2015 = vsel %vm1199, %v1999, %v1937
        %v2016 = vsel %vm1199, %v2000, %v1939
        %v2017 = vsel %vm1199, %v2001, %v1941
        %v2018 = vsel %vm1199, %v2002, %v1943
        %v2019 = vsel %vm1199, %v2003, %v1945
        %v2020 = vsel %vm1199, %v2004, %v1947
        %v2021 = vsel %vm1199, %v2005, %v1949
        %v2022 = vsel %vm1199, %v2006, %v1951
        %v2023 = vsel %vm1199, %v2007, %v1953
        %v2024 = vsel %vm1199, %v2008, %v1955
        %v2025 = vsel %vm1199, %v2009, %v1957
        %v2026 = vsel %vm1199, %v2010, %v1959
        %v2027 = vsel %vm1199, %v2011, %v1961
        %v2028 = vsel %vm1199, %v2012, %v1963
        %v2029 = vsel %vm1199, %v2013, %v1965
        %v2030 = vld [vmem:[%s9] sm:$0x3]
        %v2032 = vlaneseq
        %v2033 = vshrl.u32 %v2032, 7
        %v2034 = vsub.s32 0, %v2033
        %v2035 = vrot.slane %v2030, %v2034
        %v2036 = vlaneseq
        %v2037 = vshrl.u32 %v2036, 7
        %v2038 = vsub.s32 1, %v2037
        %v2039 = vrot.slane %v2030, %v2038
        %v2042 = vsub.f32 %v2014, %v2035
        %v2043 = vsub.f32 %v2014, %v2039
        %v2044 = vsub.f32 %v2015, %v2035
        %v2045 = vsub.f32 %v2015, %v2039
        %v2046 = vsub.f32 %v2016, %v2035
        %v2047 = vsub.f32 %v2016, %v2039
        %v2048 = vsub.f32 %v2017, %v2035
        %v2049 = vsub.f32 %v2017, %v2039
        %v2050 = vsub.f32 %v2018, %v2035
        %v2051 = vsub.f32 %v2018, %v2039
        %v2052 = vsub.f32 %v2019, %v2035
        %v2053 = vsub.f32 %v2019, %v2039
        %v2054 = vsub.f32 %v2020, %v2035
        %v2055 = vsub.f32 %v2020, %v2039
        %v2056 = vsub.f32 %v2021, %v2035
        %v2057 = vsub.f32 %v2021, %v2039
        %v2058 = vsub.f32 %v2022, %v2035
        %v2059 = vsub.f32 %v2022, %v2039
        %v2060 = vsub.f32 %v2023, %v2035
        %v2061 = vsub.f32 %v2023, %v2039
        %v2062 = vsub.f32 %v2024, %v2035
        %v2063 = vsub.f32 %v2024, %v2039
        %v2064 = vsub.f32 %v2025, %v2035
        %v2065 = vsub.f32 %v2025, %v2039
        %v2066 = vsub.f32 %v2026, %v2035
        %v2067 = vsub.f32 %v2026, %v2039
        %v2068 = vsub.f32 %v2027, %v2035
        %v2069 = vsub.f32 %v2027, %v2039
        %v2070 = vsub.f32 %v2028, %v2035
        %v2071 = vsub.f32 %v2028, %v2039
        %v2072 = vsub.f32 %v2029, %v2035
        %v2073 = vsub.f32 %v2029, %v2039
        %v2074 = vmax.f32 %v2042, 0.0
        %v2075 = vmax.f32 %v2043, 0.0
        %v2076 = vmax.f32 %v2044, 0.0
        %v2077 = vmax.f32 %v2045, 0.0
        %v2078 = vmax.f32 %v2046, 0.0
        %v2079 = vmax.f32 %v2047, 0.0
        %v2080 = vmax.f32 %v2048, 0.0
        %v2081 = vmax.f32 %v2049, 0.0
        %v2082 = vmax.f32 %v2050, 0.0
        %v2083 = vmax.f32 %v2051, 0.0
        %v2084 = vmax.f32 %v2052, 0.0
        %v2085 = vmax.f32 %v2053, 0.0
        %v2086 = vmax.f32 %v2054, 0.0
        %v2087 = vmax.f32 %v2055, 0.0
        %v2088 = vmax.f32 %v2056, 0.0
        %v2089 = vmax.f32 %v2057, 0.0
        %v2090 = vmax.f32 %v2058, 0.0
        %v2091 = vmax.f32 %v2059, 0.0
        %v2092 = vmax.f32 %v2060, 0.0
        %v2093 = vmax.f32 %v2061, 0.0
        %v2094 = vmax.f32 %v2062, 0.0
        %v2095 = vmax.f32 %v2063, 0.0
        %v2096 = vmax.f32 %v2064, 0.0
        %v2097 = vmax.f32 %v2065, 0.0
        %v2098 = vmax.f32 %v2066, 0.0
        %v2099 = vmax.f32 %v2067, 0.0
        %v2100 = vmax.f32 %v2068, 0.0
        %v2101 = vmax.f32 %v2069, 0.0
        %v2102 = vmax.f32 %v2070, 0.0
        %v2103 = vmax.f32 %v2071, 0.0
        %v2104 = vmax.f32 %v2072, 0.0
        %v2105 = vmax.f32 %v2073, 0.0
        %v2106 = vld [vmem:[%s10] sm:$0x3]
        %v2108 = vlaneseq
        %v2109 = vshrl.u32 %v2108, 7
        %v2110 = vsub.s32 0, %v2109
        %v2111 = vrot.slane %v2106, %v2110
        %v2112 = vlaneseq
        %v2113 = vshrl.u32 %v2112, 7
        %v2114 = vsub.s32 1, %v2113
        %v2115 = vrot.slane %v2106, %v2114
        %v2118 = vsub.f32 %v2111, %v2014
        %v2119 = vsub.f32 %v2115, %v2014
        %v2120 = vsub.f32 %v2111, %v2015
        %v2121 = vsub.f32 %v2115, %v2015
        %v2122 = vsub.f32 %v2111, %v2016
        %v2123 = vsub.f32 %v2115, %v2016
        %v2124 = vsub.f32 %v2111, %v2017
        %v2125 = vsub.f32 %v2115, %v2017
        %v2126 = vsub.f32 %v2111, %v2018
        %v2127 = vsub.f32 %v2115, %v2018
        %v2128 = vsub.f32 %v2111, %v2019
        %v2129 = vsub.f32 %v2115, %v2019
        %v2130 = vsub.f32 %v2111, %v2020
        %v2131 = vsub.f32 %v2115, %v2020
        %v2132 = vsub.f32 %v2111, %v2021
        %v2133 = vsub.f32 %v2115, %v2021
        %v2134 = vsub.f32 %v2111, %v2022
        %v2135 = vsub.f32 %v2115, %v2022
        %v2136 = vsub.f32 %v2111, %v2023
        %v2137 = vsub.f32 %v2115, %v2023
        %v2138 = vsub.f32 %v2111, %v2024
        %v2139 = vsub.f32 %v2115, %v2024
        %v2140 = vsub.f32 %v2111, %v2025
        %v2141 = vsub.f32 %v2115, %v2025
        %v2142 = vsub.f32 %v2111, %v2026
        %v2143 = vsub.f32 %v2115, %v2026
        %v2144 = vsub.f32 %v2111, %v2027
        %v2145 = vsub.f32 %v2115, %v2027
        %v2146 = vsub.f32 %v2111, %v2028
        %v2147 = vsub.f32 %v2115, %v2028
        %v2148 = vsub.f32 %v2111, %v2029
        %v2149 = vsub.f32 %v2115, %v2029
        %v2150 = vmax.f32 %v2118, 0.0
        %v2151 = vmax.f32 %v2119, 0.0
        %v2152 = vmax.f32 %v2120, 0.0
        %v2153 = vmax.f32 %v2121, 0.0
        %v2154 = vmax.f32 %v2122, 0.0
        %v2155 = vmax.f32 %v2123, 0.0
        %v2156 = vmax.f32 %v2124, 0.0
        %v2157 = vmax.f32 %v2125, 0.0
        %v2158 = vmax.f32 %v2126, 0.0
        %v2159 = vmax.f32 %v2127, 0.0
        %v2160 = vmax.f32 %v2128, 0.0
        %v2161 = vmax.f32 %v2129, 0.0
        %v2162 = vmax.f32 %v2130, 0.0
        %v2163 = vmax.f32 %v2131, 0.0
        %v2164 = vmax.f32 %v2132, 0.0
        %v2165 = vmax.f32 %v2133, 0.0
        %v2166 = vmax.f32 %v2134, 0.0
        %v2167 = vmax.f32 %v2135, 0.0
        %v2168 = vmax.f32 %v2136, 0.0
        %v2169 = vmax.f32 %v2137, 0.0
        %v2170 = vmax.f32 %v2138, 0.0
        %v2171 = vmax.f32 %v2139, 0.0
        %v2172 = vmax.f32 %v2140, 0.0
        %v2173 = vmax.f32 %v2141, 0.0
        %v2174 = vmax.f32 %v2142, 0.0
        %v2175 = vmax.f32 %v2143, 0.0
        %v2176 = vmax.f32 %v2144, 0.0
        %v2177 = vmax.f32 %v2145, 0.0
        %v2178 = vmax.f32 %v2146, 0.0
        %v2179 = vmax.f32 %v2147, 0.0
        %v2180 = vmax.f32 %v2148, 0.0
        %v2181 = vmax.f32 %v2149, 0.0
        %v2182 = vmul.f32 %v2074, %v2150
        %v2183 = vmul.f32 %v2075, %v2151
        %v2184 = vmul.f32 %v2076, %v2152
        %v2185 = vmul.f32 %v2077, %v2153
        %v2186 = vmul.f32 %v2078, %v2154
        %v2187 = vmul.f32 %v2079, %v2155
        %v2188 = vmul.f32 %v2080, %v2156
        %v2189 = vmul.f32 %v2081, %v2157
        %v2190 = vmul.f32 %v2082, %v2158
        %v2191 = vmul.f32 %v2083, %v2159
        %v2192 = vmul.f32 %v2084, %v2160
        %v2193 = vmul.f32 %v2085, %v2161
        %v2194 = vmul.f32 %v2086, %v2162
        %v2195 = vmul.f32 %v2087, %v2163
        %v2196 = vmul.f32 %v2088, %v2164
        %v2197 = vmul.f32 %v2089, %v2165
        %v2198 = vmul.f32 %v2090, %v2166
        %v2199 = vmul.f32 %v2091, %v2167
        %v2200 = vmul.f32 %v2092, %v2168
        %v2201 = vmul.f32 %v2093, %v2169
        %v2202 = vmul.f32 %v2094, %v2170
        %v2203 = vmul.f32 %v2095, %v2171
        %v2204 = vmul.f32 %v2096, %v2172
        %v2205 = vmul.f32 %v2097, %v2173
        %v2206 = vmul.f32 %v2098, %v2174
        %v2207 = vmul.f32 %v2099, %v2175
        %v2208 = vmul.f32 %v2100, %v2176
        %v2209 = vmul.f32 %v2101, %v2177
        %v2210 = vmul.f32 %v2102, %v2178
        %v2211 = vmul.f32 %v2103, %v2179
        %v2212 = vmul.f32 %v2104, %v2180
        %v2213 = vmul.f32 %v2105, %v2181
        %v2214 = vmul.f32 %v2182, %v2182
        %v2215 = vmul.f32 %v2183, %v2183
        %v2216 = vmul.f32 %v2184, %v2184
        %v2217 = vmul.f32 %v2185, %v2185
        %v2218 = vmul.f32 %v2186, %v2186
        %v2219 = vmul.f32 %v2187, %v2187
        %v2220 = vmul.f32 %v2188, %v2188
        %v2221 = vmul.f32 %v2189, %v2189
        %v2222 = vmul.f32 %v2190, %v2190
        %v2223 = vmul.f32 %v2191, %v2191
        %v2224 = vmul.f32 %v2192, %v2192
        %v2225 = vmul.f32 %v2193, %v2193
        %v2226 = vmul.f32 %v2194, %v2194
        %v2227 = vmul.f32 %v2195, %v2195
        %v2228 = vmul.f32 %v2196, %v2196
        %v2229 = vmul.f32 %v2197, %v2197
        %v2230 = vmul.f32 %v2198, %v2198
        %v2231 = vmul.f32 %v2199, %v2199
        %v2232 = vmul.f32 %v2200, %v2200
        %v2233 = vmul.f32 %v2201, %v2201
        %v2234 = vmul.f32 %v2202, %v2202
        %v2235 = vmul.f32 %v2203, %v2203
        %v2236 = vmul.f32 %v2204, %v2204
        %v2237 = vmul.f32 %v2205, %v2205
        %v2238 = vmul.f32 %v2206, %v2206
        %v2239 = vmul.f32 %v2207, %v2207
        %v2240 = vmul.f32 %v2208, %v2208
        %v2241 = vmul.f32 %v2209, %v2209
        %v2242 = vmul.f32 %v2210, %v2210
        %v2243 = vmul.f32 %v2211, %v2211
        %v2244 = vmul.f32 %v2212, %v2212
        %v2245 = vmul.f32 %v2213, %v2213
        %v2246 = vpack.c.bf16 %v2216, %v2214
        %v2247 = vpack.c.bf16 %v2217, %v2215
        %v2248 = vpack.c.bf16 %v2220, %v2218
        %v2249 = vpack.c.bf16 %v2221, %v2219
        %v2250 = vpack.c.bf16 %v2224, %v2222
        %v2251 = vpack.c.bf16 %v2225, %v2223
        %v2252 = vpack.c.bf16 %v2228, %v2226
        %v2253 = vpack.c.bf16 %v2229, %v2227
        %v2254 = vpack.c.bf16 %v2232, %v2230
        %v2255 = vpack.c.bf16 %v2233, %v2231
        %v2256 = vpack.c.bf16 %v2236, %v2234
        %v2257 = vpack.c.bf16 %v2237, %v2235
        %v2258 = vpack.c.bf16 %v2240, %v2238
        %v2259 = vpack.c.bf16 %v2241, %v2239
        %v2260 = vpack.c.bf16 %v2244, %v2242
        %v2261 = vpack.c.bf16 %v2245, %v2243
        %v2262 = vld [vmem:[%s11] sm:$0xf]
        %v2263 = vld [vmem:[%s11 + $0x4] sm:$0xf]
        %v2264 = vld [vmem:[%s11 + $0x8] sm:$0xf]
        %v2265 = vld [vmem:[%s11 + $0xc] sm:$0xf]
        %v2266 = vld [vmem:[%s11 + $0x10] sm:$0xf]
        %v2267 = vld [vmem:[%s11 + $0x14] sm:$0xf]
        %v2268 = vld [vmem:[%s11 + $0x18] sm:$0xf]
        %v2269 = vld [vmem:[%s11 + $0x1c] sm:$0xf]
        %v2270 = vld [vmem:[%s11 + $0x20] sm:$0xf]
        %v2271 = vld [vmem:[%s11 + $0x24] sm:$0xf]
        %v2272 = vld [vmem:[%s11 + $0x28] sm:$0xf]
        %v2273 = vld [vmem:[%s11 + $0x2c] sm:$0xf]
        %v2274 = vld [vmem:[%s11 + $0x30] sm:$0xf]
        %v2275 = vld [vmem:[%s11 + $0x34] sm:$0xf]
        %v2276 = vld [vmem:[%s11 + $0x38] sm:$0xf]
        %v2277 = vld [vmem:[%s11 + $0x3c] sm:$0xf]
        %v2278 = vld [vmem:[%s11 + $0x40] sm:$0xf]
        %v2279 = vld [vmem:[%s11 + $0x44] sm:$0xf]
        %v2280 = vld [vmem:[%s11 + $0x48] sm:$0xf]
        %v2281 = vld [vmem:[%s11 + $0x4c] sm:$0xf]
        %v2282 = vld [vmem:[%s11 + $0x50] sm:$0xf]
        %v2283 = vld [vmem:[%s11 + $0x54] sm:$0xf]
        %v2284 = vld [vmem:[%s11 + $0x58] sm:$0xf]
        %v2285 = vld [vmem:[%s11 + $0x5c] sm:$0xf]
        %v2286 = vld [vmem:[%s11 + $0x60] sm:$0xf]
        %v2287 = vld [vmem:[%s11 + $0x64] sm:$0xf]
        %v2288 = vld [vmem:[%s11 + $0x68] sm:$0xf]
        %v2289 = vld [vmem:[%s11 + $0x6c] sm:$0xf]
        %v2290 = vld [vmem:[%s11 + $0x70] sm:$0xf]
        %v2291 = vld [vmem:[%s11 + $0x74] sm:$0xf]
        %v2292 = vld [vmem:[%s11 + $0x78] sm:$0xf]
        %v2293 = vld [vmem:[%s11 + $0x7c] sm:$0xf]
        %v2294 = vld [vmem:[%s12] sm:$0x1]
        %v2296 = vlaneseq
        %v2297 = vshrl.u32 %v2296, 7
        %v2298 = vsub.s32 0, %v2297
        %v2299 = vrot.slane %v2294, %v2298
        %v2333 = vunpack.c.l.b16 %v2262
        %v2334 = vunpack.c.l.b16 %v2263
        %v2335 = vunpack.c.l.b16 %v2264
        %v2336 = vunpack.c.l.b16 %v2265
        %v2337 = vunpack.c.l.b16 %v2266
        %v2338 = vunpack.c.l.b16 %v2267
        %v2339 = vunpack.c.l.b16 %v2268
        %v2340 = vunpack.c.l.b16 %v2269
        %v2341 = vunpack.c.l.b16 %v2270
        %v2342 = vunpack.c.l.b16 %v2271
        %v2343 = vunpack.c.l.b16 %v2272
        %v2344 = vunpack.c.l.b16 %v2273
        %v2345 = vunpack.c.l.b16 %v2274
        %v2346 = vunpack.c.l.b16 %v2275
        %v2347 = vunpack.c.l.b16 %v2276
        %v2348 = vunpack.c.l.b16 %v2277
        %v2349 = vunpack.c.l.b16 %v2278
        %v2350 = vunpack.c.l.b16 %v2279
        %v2351 = vunpack.c.l.b16 %v2280
        %v2352 = vunpack.c.l.b16 %v2281
        %v2353 = vunpack.c.l.b16 %v2282
        %v2354 = vunpack.c.l.b16 %v2283
        %v2355 = vunpack.c.l.b16 %v2284
        %v2356 = vunpack.c.l.b16 %v2285
        %v2357 = vunpack.c.l.b16 %v2286
        %v2358 = vunpack.c.l.b16 %v2287
        %v2359 = vunpack.c.l.b16 %v2288
        %v2360 = vunpack.c.l.b16 %v2289
        %v2361 = vunpack.c.l.b16 %v2290
        %v2362 = vunpack.c.l.b16 %v2291
        %v2363 = vunpack.c.l.b16 %v2292
        %v2364 = vunpack.c.l.b16 %v2293
        %v2365 = vpack.c.b16 %v2334, %v2333
        %v2366 = vpack.c.b16 %v2336, %v2335
        %v2367 = vpack.c.b16 %v2338, %v2337
        %v2368 = vpack.c.b16 %v2340, %v2339
        %v2369 = vpack.c.b16 %v2342, %v2341
        %v2370 = vpack.c.b16 %v2344, %v2343
        %v2371 = vpack.c.b16 %v2346, %v2345
        %v2372 = vpack.c.b16 %v2348, %v2347
        %v2373 = vpack.c.b16 %v2350, %v2349
        %v2374 = vpack.c.b16 %v2352, %v2351
        %v2375 = vpack.c.b16 %v2354, %v2353
        %v2376 = vpack.c.b16 %v2356, %v2355
        %v2377 = vpack.c.b16 %v2358, %v2357
        %v2378 = vpack.c.b16 %v2360, %v2359
        %v2379 = vpack.c.b16 %v2362, %v2361
        %v2380 = vpack.c.b16 %v2364, %v2363
        %2397 = vmatprep.subr.bf16.mxu0 0
        %2398 = vmatpush1.bf16.msra.mxu0 %v2372
        %2399 = vmatprep.subr.bf16.mxu0 0
        %2400 = vmatpush1.bf16.msra.mxu0 %v2371
        %2401 = vmatprep.subr.bf16.mxu0 0
        %2402 = vmatpush1.bf16.msra.mxu0 %v2370
        %2403 = vmatprep.subr.bf16.mxu0 0
        %2404 = vmatpush1.bf16.msra.mxu0 %v2369
        %2405 = vmatprep.subr.bf16.mxu0 0
        %2406 = vmatpush1.bf16.msra.mxu0 %v2368
        %2407 = vmatprep.subr.bf16.mxu0 0
        %2408 = vmatpush1.bf16.msra.mxu0 %v2367
        %2409 = vmatprep.subr.bf16.mxu0 0
        %2410 = vmatpush1.bf16.msra.mxu0 %v2366
        %2411 = vmatprep.subr.bf16.mxu0 0
        %2412 = vmatpush1.bf16.msra.mxu0 %v2365
        %2413 = vmatprep.subr.bf16.mxu0 0
        %2414 = vmatpush2.bf16.msra.mxu0 %v2380
        %2415 = vmatprep.subr.bf16.mxu0 0
        %2416 = vmatpush2.bf16.msra.mxu0 %v2379
        %2417 = vmatprep.subr.bf16.mxu0 0
        %2418 = vmatpush2.bf16.msra.mxu0 %v2378
        %2419 = vmatprep.subr.bf16.mxu0 0
        %2420 = vmatpush2.bf16.msra.mxu0 %v2377
        %2421 = vmatprep.subr.bf16.mxu0 0
        %2422 = vmatpush2.bf16.msra.mxu0 %v2376
        %2423 = vmatprep.subr.bf16.mxu0 0
        %2424 = vmatpush2.bf16.msra.mxu0 %v2375
        %2425 = vmatprep.subr.bf16.mxu0 0
        %2426 = vmatpush2.bf16.msra.mxu0 %v2374
        %2427 = vmatprep.subr.bf16.mxu0 0
        %2428 = vmatpush2.bf16.msra.mxu0 %v2373
        %2429 = vmatprep.mubr.bf16.mxu0 %v2247
        %2430 = vmatmul.mubr.bf16.gmra.mxu0 %v2246
        %v2431 = vpop.f32.mrf.mxu0
        %v2432 = vadd.f32 %v2299, %v2431
        %v2433 = vpop.f32.mrf.mxu0
        %v2434 = vpop.f32.mrf.mxu0
        %v2435 = vadd.f32 %v2299, %v2434
        %v2436 = vpop.f32.mrf.mxu0
        %2437 = vmatprep.mubr.bf16.mxu0 %v2249
        %2438 = vmatmul.mubr.bf16.gmra.mxu0 %v2248
        %v2439 = vpop.f32.mrf.mxu0
        %v2440 = vadd.f32 %v2299, %v2439
        %v2441 = vpop.f32.mrf.mxu0
        %v2442 = vpop.f32.mrf.mxu0
        %v2443 = vadd.f32 %v2299, %v2442
        %v2444 = vpop.f32.mrf.mxu0
        %2445 = vmatprep.mubr.bf16.mxu0 %v2251
        %2446 = vmatmul.mubr.bf16.gmra.mxu0 %v2250
        %v2447 = vpop.f32.mrf.mxu0
        %v2448 = vadd.f32 %v2299, %v2447
        %v2449 = vpop.f32.mrf.mxu0
        %v2450 = vpop.f32.mrf.mxu0
        %v2451 = vadd.f32 %v2299, %v2450
        %v2452 = vpop.f32.mrf.mxu0
        %2453 = vmatprep.mubr.bf16.mxu0 %v2253
        %2454 = vmatmul.mubr.bf16.gmra.mxu0 %v2252
        %v2455 = vpop.f32.mrf.mxu0
        %v2456 = vadd.f32 %v2299, %v2455
        %v2457 = vpop.f32.mrf.mxu0
        %v2458 = vpop.f32.mrf.mxu0
        %v2459 = vadd.f32 %v2299, %v2458
        %v2460 = vpop.f32.mrf.mxu0
        %2461 = vmatprep.mubr.bf16.mxu0 %v2255
        %2462 = vmatmul.mubr.bf16.gmra.mxu0 %v2254
        %v2463 = vpop.f32.mrf.mxu0
        %v2464 = vadd.f32 %v2299, %v2463
        %v2465 = vpop.f32.mrf.mxu0
        %v2466 = vpop.f32.mrf.mxu0
        %v2467 = vadd.f32 %v2299, %v2466
        %v2468 = vpop.f32.mrf.mxu0
        %2469 = vmatprep.mubr.bf16.mxu0 %v2257
        %2470 = vmatmul.mubr.bf16.gmra.mxu0 %v2256
        %v2471 = vpop.f32.mrf.mxu0
        %v2472 = vadd.f32 %v2299, %v2471
        %v2473 = vpop.f32.mrf.mxu0
        %v2474 = vpop.f32.mrf.mxu0
        %v2475 = vadd.f32 %v2299, %v2474
        %v2476 = vpop.f32.mrf.mxu0
        %2477 = vmatprep.mubr.bf16.mxu0 %v2259
        %2478 = vmatmul.mubr.bf16.gmra.mxu0 %v2258
        %v2479 = vpop.f32.mrf.mxu0
        %v2480 = vadd.f32 %v2299, %v2479
        %v2481 = vpop.f32.mrf.mxu0
        %v2482 = vpop.f32.mrf.mxu0
        %v2483 = vadd.f32 %v2299, %v2482
        %v2484 = vpop.f32.mrf.mxu0
        %2485 = vmatprep.mubr.bf16.mxu0 %v2261
        %2486 = vmatmul.mubr.bf16.gmra.mxu0 %v2260
        %v2487 = vpop.f32.mrf.mxu0
        %v2488 = vadd.f32 %v2299, %v2487
        %v2489 = vpop.f32.mrf.mxu0
        %v2490 = vpop.f32.mrf.mxu0
        %v2491 = vadd.f32 %v2299, %v2490
        %v2492 = vpop.f32.mrf.mxu0
        %2493 = vdwg.mxu0
        %2494 = vst [vmem:[%s434] sm:$0xff] %v2432
        %2495 = vst [vmem:[%s434 + $0x8] sm:$0xff] %v2435
        %2496 = vst [vmem:[%s434 + $0x10] sm:$0xff] %v2440
        %2497 = vst [vmem:[%s434 + $0x18] sm:$0xff] %v2443
        %2498 = vst [vmem:[%s434 + $0x20] sm:$0xff] %v2448
        %2499 = vst [vmem:[%s434 + $0x28] sm:$0xff] %v2451
        %2500 = vst [vmem:[%s434 + $0x30] sm:$0xff] %v2456
        %2501 = vst [vmem:[%s434 + $0x38] sm:$0xff] %v2459
        %2502 = vst [vmem:[%s434 + $0x40] sm:$0xff] %v2464
        %2503 = vst [vmem:[%s434 + $0x48] sm:$0xff] %v2467
        %2504 = vst [vmem:[%s434 + $0x50] sm:$0xff] %v2472
        %2505 = vst [vmem:[%s434 + $0x58] sm:$0xff] %v2475
        %2506 = vst [vmem:[%s434 + $0x60] sm:$0xff] %v2480
        %2507 = vst [vmem:[%s434 + $0x68] sm:$0xff] %v2483
        %2508 = vst [vmem:[%s434 + $0x70] sm:$0xff] %v2488
        %2509 = vst [vmem:[%s434 + $0x78] sm:$0xff] %v2491
        %s2510 = sand.u32 %s313, 1
        %s2511 = scalar_lea.sflag [#allocation3], %s2510
        %s2512 = sand.u32 %s313, 1
        %s2513 = smul.addr %s2512, 128
        %s2514 = scalar_lea.vmem [#allocation2], %s2513
        // Predicated region
        $region73: #{tpu_custom_call.1} parent=71 // pred_check
          %p2515 = pneg %p323
        $region74: #{tpu_custom_call.1} parent=71 // pred_check_branch
          %2517 = sbr.rel (%p2515) target = $region76
        $region75: #{tpu_custom_call.1} parent=71 // pred_region
          %s2518 = smul.u32 16, %s27
          %s2520 = ssub.s32 2048, 2048
          %2521 = vsyncadd %s2511, %s2520
          %s2522 = smul.addr %s2518, 128
          %s2523 = scalar_lea.hbm %s13, %s2522
          %s2524 = sshll.u32 %s2514, 4
          %s2525 = int_to_ptr.vmem [resolvable:$true] %s2524
          %2530 = dma.vmem_to_hbm [thread:$0]  %s2525, 2048, %s2523, %s2511, 128, 128, 8
        $region76: #{tpu_custom_call.1} parent=71 // pred_fallthru
          _
      $region72: #{tpu_custom_call.1} parent=5 // pred_fallthru
        _
      %p2531 = scmp.le.s32.totalorder 2, %s22
      // Predicated region
      $region77: #{tpu_custom_call.1} parent=5 // pred_check
        %p2532 = pneg %p2531
      $region78: #{tpu_custom_call.1} parent=5 // pred_check_branch
        %2534 = sbr.rel (%p2532) target = $region80
      $region79: #{tpu_custom_call.1} parent=5 // pred_region
        %s2535 = ssub.s32 %s22, 2
        // Predicated region
        $region81: #{tpu_custom_call.1} parent=79 // pred_check
          %p2536 = pneg %p329
        $region82: #{tpu_custom_call.1} parent=79 // pred_check_branch
          %2538 = sbr.rel (%p2536) target = $region84
        $region83: #{tpu_custom_call.1} parent=79 // pred_region
          %s2539 = sand.u32 %s314, 1
          %s2540 = scalar_lea.sflag [#allocation3], %s2539
          %s2541 = sand.u32 %s314, 1
          %s2542 = smul.addr %s2541, 128
          %s2543 = scalar_lea.vmem [#allocation2], %s2542
          %2544 = dma.done %s2540, 2048
        $region84: #{tpu_custom_call.1} parent=79 // pred_fallthru
          _
      $region80: #{tpu_custom_call.1} parent=5 // pred_fallthru
        _
    $region6: #{tpu_custom_call.1} parent=1 // loop_footer
      %s26 = sadd.s32 1, %s22
    $region7: #{tpu_custom_call.1} parent=1 // loop_footer_branch
      %21 = sbr.rel target = $region3
    $region8: #{tpu_custom_call.1} parent=1 // loop_exit
      _
    %2545 = vsyncpa [#allocation3], 1
    %s2546 = scalar_lea.sflag [#allocation3], 1
    %2547 = vsyncpa %s2546, 1

</llo_original>
